<compile_context>
chip_gen: v5e
topology: v5e:2x2
jax: 0.10.0
libtpu: 0.0.40
codegen_flags: <defaults>
</compile_context>

<pallas_src>
import math

import numpy as np
import jax
import jax.numpy as jnp
from jax.experimental import pallas as pl
from jax.experimental.pallas import tpu as pltpu

# ---- small ViT config (stand-in for google/vit-base-patch16-224-in21k) ----
BATCH = 2
CHANNELS = 3
IMG = 16
PATCH = 4
HIDDEN = 32
NUM_HEADS = 4
HEAD_DIM = HIDDEN // NUM_HEADS
NUM_LAYERS = 2
INTERMEDIATE = 64
NUM_CLASSES = 10
CLS_HIDDEN = 512           # classifier hidden width from the module (Linear(hidden, 512))
LN_EPS = 1e-12             # HF ViT layer_norm_eps default

NUM_PATCHES = (IMG // PATCH) ** 2
SEQ = NUM_PATCHES + 1
TOKENS = BATCH * SEQ
PATCH_DIM = CHANNELS * PATCH * PATCH

VMEM = pl.BlockSpec(memory_space=pltpu.MemorySpace.VMEM)


# ---------------- the single fused Pallas kernel ----------------

def _vit_fwd_kernel(
    # data + static selection constants
    patches_ref, p_cls_ref, p_emb_ref, p_pos_ref, attn_bias_ref, sel_cls_ref,
    # embedding params
    patch_w_ref, patch_b_ref, cls_pos0_ref, pos_rest_ref,
    # stacked encoder params  [L, ...]
    ln1g_ref, ln1b_ref, wqkv_ref, bqkv_ref,
    wo_ref, bo_ref, ln2g_ref, ln2b_ref,
    wi_ref, bi_ref, wout_ref, bout_ref,
    # final LN + pooler + classifier params
    lnfg_ref, lnfb_ref, pool_w_ref, pool_b_ref,
    cls_w1_ref, cls_b1_ref, cls_w2_ref, cls_b2_ref,
    # output
    logits_ref,
):
    f32 = jnp.float32
    inv_sqrt2 = 1.0 / math.sqrt(2.0)
    scale = 1.0 / math.sqrt(HEAD_DIM)

    def ln(x, g, b):
        mu = jnp.mean(x, axis=-1, keepdims=True)
        xc = x - mu
        var = jnp.mean(xc * xc, axis=-1, keepdims=True)
        return xc * jax.lax.rsqrt(var + LN_EPS) * g + b

    def gelu(x):  # exact (erf) GELU, matching HF ViT "gelu"
        return 0.5 * x * (1.0 + jax.lax.erf(x * inv_sqrt2))

    # --- patch embedding (Conv2d(k=stride=patch) as matmul) + cls tok + pos emb ---
    emb = jnp.dot(patches_ref[...], patch_w_ref[...],
                  preferred_element_type=f32) + patch_b_ref[...]          # [B*NP, H]
    x = (p_cls_ref[...] * cls_pos0_ref[...]                               # [T,1]*[1,H]
         + jnp.dot(p_emb_ref[...], emb, preferred_element_type=f32)
         + jnp.dot(p_pos_ref[...], pos_rest_ref[...], preferred_element_type=f32))

    attn_bias = attn_bias_ref[...]                                        # [T, T]

    # --- pre-LN transformer encoder layers (statically unrolled) ---
    for l in range(NUM_LAYERS):
        # MHSA with fused QKV; output projection folded per-head.
        h1 = ln(x, ln1g_ref[l], ln1b_ref[l])
        qkv = jnp.dot(h1, wqkv_ref[l], preferred_element_type=f32) + bqkv_ref[l]
        wo_l = wo_ref[l]
        attn = jnp.zeros((TOKENS, HIDDEN), f32) + bo_ref[l]
        for h in range(NUM_HEADS):
            lo = h * HEAD_DIM
            q = qkv[:, lo:lo + HEAD_DIM]
            k = qkv[:, HIDDEN + lo:HIDDEN + lo + HEAD_DIM]
            v = qkv[:, 2 * HIDDEN + lo:2 * HIDDEN + lo + HEAD_DIM]
            s = jnp.einsum('md,nd->mn', q, k, preferred_element_type=f32) * scale
            s = s + attn_bias                                             # block-diag mask
            m = jnp.max(s, axis=-1, keepdims=True)
            p = jnp.exp(s - m)
            p = p * pl.reciprocal(jnp.sum(p, axis=-1, keepdims=True), approx=True)
            ctx = jnp.dot(p, v, preferred_element_type=f32)               # [T, Dh]
            attn = attn + jnp.dot(ctx, wo_l[lo:lo + HEAD_DIM, :],
                                  preferred_element_type=f32)
        x = x + attn

        # MLP (pre-LN, exact GELU)
        h2 = ln(x, ln2g_ref[l], ln2b_ref[l])
        mid = gelu(jnp.dot(h2, wi_ref[l], preferred_element_type=f32) + bi_ref[l])
        x = x + jnp.dot(mid, wout_ref[l], preferred_element_type=f32) + bout_ref[l]

    # --- final LN + pooler on the cls tokens only ---
    cls_tok = jnp.dot(sel_cls_ref[...], x, preferred_element_type=f32)    # [B, H]
    cls_tok = ln(cls_tok, lnfg_ref[...], lnfb_ref[...])
    pooled = jnp.tanh(jnp.dot(cls_tok, pool_w_ref[...],
                              preferred_element_type=f32) + pool_b_ref[...])

    # --- classifier head: Linear -> ReLU -> Dropout -> Linear ---
    # TODO(synk): nn.Dropout(0.3) is identity in eval/inference mode; no RNG dropout applied.
    c1 = jnp.maximum(jnp.dot(pooled, cls_w1_ref[...],
                             preferred_element_type=f32) + cls_b1_ref[...], 0.0)
    logits_ref[...] = (jnp.dot(c1, cls_w2_ref[...],
                               preferred_element_type=f32) + cls_b2_ref[...])


# ---------------- static selection constants (built once with numpy) ----------------

def _selection_constants():
    T, NP, S, B = TOKENS, NUM_PATCHES, SEQ, BATCH
    p_cls = np.zeros((T, 1), np.float32)        # rows that receive the cls token
    p_emb = np.zeros((T, B * NP), np.float32)   # scatter patch-embeddings to token rows
    p_pos = np.zeros((T, NP), np.float32)       # scatter patch position embeddings
    sel_cls = np.zeros((B, T), np.float32)      # gather cls-token rows
    attn_bias = np.full((T, T), -1e30, np.float32)  # block-diagonal (per-batch) attention
    for b in range(B):
        base = b * S
        p_cls[base, 0] = 1.0
        sel_cls[b, base] = 1.0
        attn_bias[base:base + S, base:base + S] = 0.0
        for i in range(NP):
            p_emb[base + 1 + i, b * NP + i] = 1.0
            p_pos[base + 1 + i, i] = 1.0
    return (jnp.asarray(p_cls), jnp.asarray(p_emb), jnp.asarray(p_pos),
            jnp.asarray(attn_bias), jnp.asarray(sel_cls))


# ---------------- parameter init (deterministic, synthetic) ----------------

def init_params(key):
    def nrm(k, shape, scale=0.02):
        return scale * jax.random.normal(k, shape, jnp.float32)

    keys = iter(jax.random.split(key, 64))
    p = {}
    p["patch_w"] = nrm(next(keys), (PATCH_DIM, HIDDEN))
    p["patch_b"] = jnp.zeros((1, HIDDEN), jnp.float32)
    cls_tok = nrm(next(keys), (1, HIDDEN))
    pos = nrm(next(keys), (SEQ, HIDDEN))
    p["cls_pos0"] = cls_tok + pos[0:1, :]     # cls token + its position embedding
    p["pos_rest"] = pos[1:, :]                # position embeddings of patch tokens

    wq = [nrm(next(keys), (HIDDEN, HIDDEN)) for _ in range(NUM_LAYERS)]
    wk = [nrm(next(keys), (HIDDEN, HIDDEN)) for _ in range(NUM_LAYERS)]
    wv = [nrm(next(keys), (HIDDEN, HIDDEN)) for _ in range(NUM_LAYERS)]
    p["wqkv"] = jnp.stack([jnp.concatenate([wq[i], wk[i], wv[i]], axis=1)
                           for i in range(NUM_LAYERS)])                    # [L, H, 3H]
    p["bqkv"] = jnp.zeros((NUM_LAYERS, 1, 3 * HIDDEN), jnp.float32)
    p["wo"] = jnp.stack([nrm(next(keys), (HIDDEN, HIDDEN)) for _ in range(NUM_LAYERS)])
    p["bo"] = jnp.zeros((NUM_LAYERS, 1, HIDDEN), jnp.float32)
    p["wi"] = jnp.stack([nrm(next(keys), (HIDDEN, INTERMEDIATE)) for _ in range(NUM_LAYERS)])
    p["bi"] = jnp.zeros((NUM_LAYERS, 1, INTERMEDIATE), jnp.float32)
    p["wout"] = jnp.stack([nrm(next(keys), (INTERMEDIATE, HIDDEN)) for _ in range(NUM_LAYERS)])
    p["bout"] = jnp.zeros((NUM_LAYERS, 1, HIDDEN), jnp.float32)
    p["ln1_g"] = jnp.ones((NUM_LAYERS, 1, HIDDEN), jnp.float32)
    p["ln1_b"] = jnp.zeros((NUM_LAYERS, 1, HIDDEN), jnp.float32)
    p["ln2_g"] = jnp.ones((NUM_LAYERS, 1, HIDDEN), jnp.float32)
    p["ln2_b"] = jnp.zeros((NUM_LAYERS, 1, HIDDEN), jnp.float32)

    p["lnf_g"] = jnp.ones((1, HIDDEN), jnp.float32)
    p["lnf_b"] = jnp.zeros((1, HIDDEN), jnp.float32)
    p["pool_w"] = nrm(next(keys), (HIDDEN, HIDDEN))
    p["pool_b"] = jnp.zeros((1, HIDDEN), jnp.float32)

    # classifier: Linear(hidden, 512) -> ReLU -> Dropout(0.3) -> Linear(512, num_classes)
    p["cls_w1"] = nrm(next(keys), (HIDDEN, CLS_HIDDEN))
    p["cls_b1"] = jnp.zeros((1, CLS_HIDDEN), jnp.float32)
    p["cls_w2"] = nrm(next(keys), (CLS_HIDDEN, NUM_CLASSES))
    p["cls_b2"] = jnp.zeros((1, NUM_CLASSES), jnp.float32)
    return p


# ---------------- forward pass (one pallas_call) ----------------

def vit_mae_classification_forward(x, params):
    B, C, H, W = x.shape
    nh, nw = H // PATCH, W // PATCH
    # Conv2d(C, HIDDEN, kernel=patch, stride=patch) == matmul on channel-major
    # flattened patches (pure layout plumbing, done once in XLA).
    patches = x.reshape(B, C, nh, PATCH, nw, PATCH)
    patches = patches.transpose(0, 2, 4, 1, 3, 5).reshape(B * nh * nw, C * PATCH * PATCH)

    p_cls, p_emb, p_pos, attn_bias, sel_cls = _selection_constants()

    args = (
        patches, p_cls, p_emb, p_pos, attn_bias, sel_cls,
        params["patch_w"], params["patch_b"], params["cls_pos0"], params["pos_rest"],
        params["ln1_g"], params["ln1_b"], params["wqkv"], params["bqkv"],
        params["wo"], params["bo"], params["ln2_g"], params["ln2_b"],
        params["wi"], params["bi"], params["wout"], params["bout"],
        params["lnf_g"], params["lnf_b"], params["pool_w"], params["pool_b"],
        params["cls_w1"], params["cls_b1"], params["cls_w2"], params["cls_b2"],
    )

    logits = pl.pallas_call(
        _vit_fwd_kernel,
        out_shape=jax.ShapeDtypeStruct((B, NUM_CLASSES), jnp.float32),
        in_specs=[VMEM] * len(args),
        out_specs=VMEM,
    )(*args)
    return logits                                                    # [B, NUM_CLASSES]


if __name__ == "__main__":
    key = jax.random.PRNGKey(0)
    k_params, k_x = jax.random.split(key)
    params = init_params(k_params)
    x = jax.random.normal(k_x, (BATCH, CHANNELS, IMG, IMG), jnp.float32)

    fwd = jax.jit(vit_mae_classification_forward)
    logits = fwd(x, params)
    jax.block_until_ready(logits)
    assert logits.shape == (BATCH, NUM_CLASSES)
    assert bool(jnp.all(jnp.isfinite(logits)))
    print("KERNEL_OK")
</pallas_src>

<mosaic_0001>
module attributes {stable_mosaic.version = 11 : i64} {
  func.func @_vit_fwd_kernel(%arg0: memref<32x48xf32, #tpu.memory_space<vmem>>, %arg1: memref<34x1xf32, #tpu.memory_space<vmem>>, %arg2: memref<34x32xf32, #tpu.memory_space<vmem>>, %arg3: memref<34x16xf32, #tpu.memory_space<vmem>>, %arg4: memref<34x34xf32, #tpu.memory_space<vmem>>, %arg5: memref<2x34xf32, #tpu.memory_space<vmem>>, %arg6: memref<48x32xf32, #tpu.memory_space<vmem>>, %arg7: memref<1x32xf32, #tpu.memory_space<vmem>>, %arg8: memref<1x32xf32, #tpu.memory_space<vmem>>, %arg9: memref<16x32xf32, #tpu.memory_space<vmem>>, %arg10: memref<2x1x32xf32, #tpu.memory_space<vmem>>, %arg11: memref<2x1x32xf32, #tpu.memory_space<vmem>>, %arg12: memref<2x32x96xf32, #tpu.memory_space<vmem>>, %arg13: memref<2x1x96xf32, #tpu.memory_space<vmem>>, %arg14: memref<2x32x32xf32, #tpu.memory_space<vmem>>, %arg15: memref<2x1x32xf32, #tpu.memory_space<vmem>>, %arg16: memref<2x1x32xf32, #tpu.memory_space<vmem>>, %arg17: memref<2x1x32xf32, #tpu.memory_space<vmem>>, %arg18: memref<2x32x64xf32, #tpu.memory_space<vmem>>, %arg19: memref<2x1x64xf32, #tpu.memory_space<vmem>>, %arg20: memref<2x64x32xf32, #tpu.memory_space<vmem>>, %arg21: memref<2x1x32xf32, #tpu.memory_space<vmem>>, %arg22: memref<1x32xf32, #tpu.memory_space<vmem>>, %arg23: memref<1x32xf32, #tpu.memory_space<vmem>>, %arg24: memref<32x32xf32, #tpu.memory_space<vmem>>, %arg25: memref<1x32xf32, #tpu.memory_space<vmem>>, %arg26: memref<32x512xf32, #tpu.memory_space<vmem>>, %arg27: memref<1x512xf32, #tpu.memory_space<vmem>>, %arg28: memref<512x10xf32, #tpu.memory_space<vmem>>, %arg29: memref<1x10xf32, #tpu.memory_space<vmem>>, %arg30: memref<2x10xf32, #tpu.memory_space<vmem>>) attributes {dimension_semantics = [], scalar_prefetch = 0 : i64, scratch_operands = 0 : i64, tpu.core_type = #tpu.core_type<tc>} {
    %c0 = arith.constant 0 : index
    %c0_0 = arith.constant 0 : index
    %0 = vector.load %arg0[%c0, %c0_0] : memref<32x48xf32, #tpu.memory_space<vmem>>, vector<32x48xf32>
    %c0_1 = arith.constant 0 : index
    %c0_2 = arith.constant 0 : index
    %1 = vector.load %arg6[%c0_1, %c0_2] : memref<48x32xf32, #tpu.memory_space<vmem>>, vector<48x32xf32>
    %cst = arith.constant dense<0.000000e+00> : vector<32x32xf32>
    %2 = tpu.matmul %0, %1, %cst {dimension_numbers = #tpu.dot_dimension_numbers<[1], [0], [0], [1], [0, 0, 1, 1], [], []>} : vector<32x48xf32>, vector<48x32xf32>, vector<32x32xf32> -> vector<32x32xf32>
    %c0_3 = arith.constant 0 : index
    %c0_4 = arith.constant 0 : index
    %3 = vector.load %arg7[%c0_3, %c0_4] : memref<1x32xf32, #tpu.memory_space<vmem>>, vector<1x32xf32>
    %4 = vector.broadcast %3 : vector<1x32xf32> to vector<32x32xf32>
    %5 = arith.addf %2, %4 : vector<32x32xf32>
    %c0_5 = arith.constant 0 : index
    %c0_6 = arith.constant 0 : index
    %6 = vector.load %arg1[%c0_5, %c0_6] : memref<34x1xf32, #tpu.memory_space<vmem>>, vector<34x1xf32>
    %c0_7 = arith.constant 0 : index
    %c0_8 = arith.constant 0 : index
    %7 = vector.load %arg8[%c0_7, %c0_8] : memref<1x32xf32, #tpu.memory_space<vmem>>, vector<1x32xf32>
    %8 = vector.broadcast %6 : vector<34x1xf32> to vector<34x32xf32>
    %9 = vector.broadcast %7 : vector<1x32xf32> to vector<34x32xf32>
    %10 = arith.mulf %8, %9 : vector<34x32xf32>
    %c0_9 = arith.constant 0 : index
    %c0_10 = arith.constant 0 : index
    %11 = vector.load %arg2[%c0_9, %c0_10] : memref<34x32xf32, #tpu.memory_space<vmem>>, vector<34x32xf32>
    %cst_11 = arith.constant dense<0.000000e+00> : vector<34x32xf32>
    %12 = tpu.matmul %11, %5, %cst_11 {dimension_numbers = #tpu.dot_dimension_numbers<[1], [0], [0], [1], [0, 0, 1, 1], [], []>} : vector<34x32xf32>, vector<32x32xf32>, vector<34x32xf32> -> vector<34x32xf32>
    %13 = arith.addf %10, %12 : vector<34x32xf32>
    %c0_12 = arith.constant 0 : index
    %c0_13 = arith.constant 0 : index
    %14 = vector.load %arg3[%c0_12, %c0_13] : memref<34x16xf32, #tpu.memory_space<vmem>>, vector<34x16xf32>
    %c0_14 = arith.constant 0 : index
    %c0_15 = arith.constant 0 : index
    %15 = vector.load %arg9[%c0_14, %c0_15] : memref<16x32xf32, #tpu.memory_space<vmem>>, vector<16x32xf32>
    %cst_16 = arith.constant dense<0.000000e+00> : vector<34x32xf32>
    %16 = tpu.matmul %14, %15, %cst_16 {dimension_numbers = #tpu.dot_dimension_numbers<[1], [0], [0], [1], [0, 0, 1, 1], [], []>} : vector<34x16xf32>, vector<16x32xf32>, vector<34x32xf32> -> vector<34x32xf32>
    %17 = arith.addf %13, %16 : vector<34x32xf32>
    %c0_17 = arith.constant 0 : index
    %c0_18 = arith.constant 0 : index
    %18 = vector.load %arg4[%c0_17, %c0_18] : memref<34x34xf32, #tpu.memory_space<vmem>>, vector<34x34xf32>
    %c0_19 = arith.constant 0 : index
    %c0_20 = arith.constant 0 : index
    %c0_21 = arith.constant 0 : index
    %19 = vector.load %arg10[%c0_19, %c0_20, %c0_21] : memref<2x1x32xf32, #tpu.memory_space<vmem>>, vector<1x1x32xf32>
    %20 = vector.shape_cast %19 : vector<1x1x32xf32> to vector<1x32xf32>
    %c0_22 = arith.constant 0 : index
    %c0_23 = arith.constant 0 : index
    %c0_24 = arith.constant 0 : index
    %21 = vector.load %arg11[%c0_22, %c0_23, %c0_24] : memref<2x1x32xf32, #tpu.memory_space<vmem>>, vector<1x1x32xf32>
    %22 = vector.shape_cast %21 : vector<1x1x32xf32> to vector<1x32xf32>
    %cst_25 = arith.constant dense<0.000000e+00> : vector<34xf32>
    %23 = vector.multi_reduction <add>, %17, %cst_25 [1] : vector<34x32xf32> to vector<34xf32>
    %24 = vector.shape_cast %23 : vector<34xf32> to vector<34x1xf32>
    %cst_26 = arith.constant 3.200000e+01 : f32
    %25 = vector.broadcast %cst_26 : f32 to vector<34x1xf32>
    %26 = arith.divf %24, %25 : vector<34x1xf32>
    %27 = vector.broadcast %26 : vector<34x1xf32> to vector<34x32xf32>
    %28 = arith.subf %17, %27 : vector<34x32xf32>
    %29 = arith.mulf %28, %28 : vector<34x32xf32>
    %cst_27 = arith.constant dense<0.000000e+00> : vector<34xf32>
    %30 = vector.multi_reduction <add>, %29, %cst_27 [1] : vector<34x32xf32> to vector<34xf32>
    %31 = vector.shape_cast %30 : vector<34xf32> to vector<34x1xf32>
    %cst_28 = arith.constant 3.200000e+01 : f32
    %32 = vector.broadcast %cst_28 : f32 to vector<34x1xf32>
    %33 = arith.divf %31, %32 : vector<34x1xf32>
    %cst_29 = arith.constant 9.99999996E-13 : f32
    %34 = vector.broadcast %cst_29 : f32 to vector<34x1xf32>
    %35 = arith.addf %33, %34 : vector<34x1xf32>
    %36 = math.rsqrt %35 : vector<34x1xf32>
    %37 = vector.broadcast %36 : vector<34x1xf32> to vector<34x32xf32>
    %38 = arith.mulf %28, %37 : vector<34x32xf32>
    %39 = vector.broadcast %20 : vector<1x32xf32> to vector<34x32xf32>
    %40 = arith.mulf %38, %39 : vector<34x32xf32>
    %41 = vector.broadcast %22 : vector<1x32xf32> to vector<34x32xf32>
    %42 = arith.addf %40, %41 : vector<34x32xf32>
    %c0_30 = arith.constant 0 : index
    %c0_31 = arith.constant 0 : index
    %c0_32 = arith.constant 0 : index
    %43 = vector.load %arg12[%c0_30, %c0_31, %c0_32] : memref<2x32x96xf32, #tpu.memory_space<vmem>>, vector<1x32x96xf32>
    %44 = vector.shape_cast %43 : vector<1x32x96xf32> to vector<32x96xf32>
    %cst_33 = arith.constant dense<0.000000e+00> : vector<34x96xf32>
    %45 = tpu.matmul %42, %44, %cst_33 {dimension_numbers = #tpu.dot_dimension_numbers<[1], [0], [0], [1], [0, 0, 1, 1], [], []>} : vector<34x32xf32>, vector<32x96xf32>, vector<34x96xf32> -> vector<34x96xf32>
    %c0_34 = arith.constant 0 : index
    %c0_35 = arith.constant 0 : index
    %c0_36 = arith.constant 0 : index
    %46 = vector.load %arg13[%c0_34, %c0_35, %c0_36] : memref<2x1x96xf32, #tpu.memory_space<vmem>>, vector<1x1x96xf32>
    %47 = vector.shape_cast %46 : vector<1x1x96xf32> to vector<1x96xf32>
    %48 = vector.broadcast %47 : vector<1x96xf32> to vector<34x96xf32>
    %49 = arith.addf %45, %48 : vector<34x96xf32>
    %c0_37 = arith.constant 0 : index
    %c0_38 = arith.constant 0 : index
    %c0_39 = arith.constant 0 : index
    %50 = vector.load %arg14[%c0_37, %c0_38, %c0_39] : memref<2x32x32xf32, #tpu.memory_space<vmem>>, vector<1x32x32xf32>
    %51 = vector.shape_cast %50 : vector<1x32x32xf32> to vector<32x32xf32>
    %cst_40 = arith.constant 0.000000e+00 : f32
    %52 = vector.broadcast %cst_40 : f32 to vector<34x32xf32>
    %c0_41 = arith.constant 0 : index
    %c0_42 = arith.constant 0 : index
    %c0_43 = arith.constant 0 : index
    %53 = vector.load %arg15[%c0_41, %c0_42, %c0_43] : memref<2x1x32xf32, #tpu.memory_space<vmem>>, vector<1x1x32xf32>
    %54 = vector.shape_cast %53 : vector<1x1x32xf32> to vector<1x32xf32>
    %55 = vector.broadcast %54 : vector<1x32xf32> to vector<34x32xf32>
    %56 = arith.addf %52, %55 : vector<34x32xf32>
    %57 = vector.extract_strided_slice %49 {offsets = [0, 0], sizes = [34, 8], strides = [1, 1]} : vector<34x96xf32> to vector<34x8xf32>
    %58 = vector.extract_strided_slice %49 {offsets = [0, 32], sizes = [34, 8], strides = [1, 1]} : vector<34x96xf32> to vector<34x8xf32>
    %59 = vector.extract_strided_slice %49 {offsets = [0, 64], sizes = [34, 8], strides = [1, 1]} : vector<34x96xf32> to vector<34x8xf32>
    "tpu.trace_start"() <{level = 10 : i32, message = "md,nd->mn"}> : () -> ()
    %cst_44 = arith.constant dense<0.000000e+00> : vector<34x34xf32>
    %60 = tpu.matmul %57, %58, %cst_44 {dimension_numbers = #tpu.dot_dimension_numbers<[1], [1], [0], [0], [0, 0, 1, 0], [], []>} : vector<34x8xf32>, vector<34x8xf32>, vector<34x34xf32> -> vector<34x34xf32>
    "tpu.trace_stop"() : () -> ()
    %cst_45 = arith.constant 0.353553385 : f32
    %61 = vector.broadcast %cst_45 : f32 to vector<34x34xf32>
    %62 = arith.mulf %60, %61 : vector<34x34xf32>
    %63 = arith.addf %62, %18 : vector<34x34xf32>
    %cst_46 = arith.constant dense<0xFF800000> : vector<34xf32>
    %64 = vector.multi_reduction <maximumf>, %63, %cst_46 [1] : vector<34x34xf32> to vector<34xf32>
    %65 = vector.shape_cast %64 : vector<34xf32> to vector<34x1xf32>
    %66 = vector.broadcast %65 : vector<34x1xf32> to vector<34x34xf32>
    %67 = arith.subf %63, %66 : vector<34x34xf32>
    %68 = math.exp %67 : vector<34x34xf32>
    %cst_47 = arith.constant dense<0.000000e+00> : vector<34xf32>
    %69 = vector.multi_reduction <add>, %68, %cst_47 [1] : vector<34x34xf32> to vector<34xf32>
    %70 = vector.shape_cast %69 : vector<34xf32> to vector<34x1xf32>
    %71 = tpu.reciprocal %70 {approx = true} : vector<34x1xf32> -> vector<34x1xf32>
    %72 = vector.broadcast %71 : vector<34x1xf32> to vector<34x34xf32>
    %73 = arith.mulf %68, %72 : vector<34x34xf32>
    %cst_48 = arith.constant dense<0.000000e+00> : vector<34x8xf32>
    %74 = tpu.matmul %73, %59, %cst_48 {dimension_numbers = #tpu.dot_dimension_numbers<[1], [0], [0], [1], [0, 0, 1, 1], [], []>} : vector<34x34xf32>, vector<34x8xf32>, vector<34x8xf32> -> vector<34x8xf32>
    %75 = vector.extract_strided_slice %51 {offsets = [0, 0], sizes = [8, 32], strides = [1, 1]} : vector<32x32xf32> to vector<8x32xf32>
    %cst_49 = arith.constant dense<0.000000e+00> : vector<34x32xf32>
    %76 = tpu.matmul %74, %75, %cst_49 {dimension_numbers = #tpu.dot_dimension_numbers<[1], [0], [0], [1], [0, 0, 1, 1], [], []>} : vector<34x8xf32>, vector<8x32xf32>, vector<34x32xf32> -> vector<34x32xf32>
    %77 = arith.addf %56, %76 : vector<34x32xf32>
    %78 = vector.extract_strided_slice %49 {offsets = [0, 8], sizes = [34, 8], strides = [1, 1]} : vector<34x96xf32> to vector<34x8xf32>
    %79 = vector.extract_strided_slice %49 {offsets = [0, 40], sizes = [34, 8], strides = [1, 1]} : vector<34x96xf32> to vector<34x8xf32>
    %80 = vector.extract_strided_slice %49 {offsets = [0, 72], sizes = [34, 8], strides = [1, 1]} : vector<34x96xf32> to vector<34x8xf32>
    "tpu.trace_start"() <{level = 10 : i32, message = "md,nd->mn"}> : () -> ()
    %cst_50 = arith.constant dense<0.000000e+00> : vector<34x34xf32>
    %81 = tpu.matmul %78, %79, %cst_50 {dimension_numbers = #tpu.dot_dimension_numbers<[1], [1], [0], [0], [0, 0, 1, 0], [], []>} : vector<34x8xf32>, vector<34x8xf32>, vector<34x34xf32> -> vector<34x34xf32>
    "tpu.trace_stop"() : () -> ()
    %cst_51 = arith.constant 0.353553385 : f32
    %82 = vector.broadcast %cst_51 : f32 to vector<34x34xf32>
    %83 = arith.mulf %81, %82 : vector<34x34xf32>
    %84 = arith.addf %83, %18 : vector<34x34xf32>
    %cst_52 = arith.constant dense<0xFF800000> : vector<34xf32>
    %85 = vector.multi_reduction <maximumf>, %84, %cst_52 [1] : vector<34x34xf32> to vector<34xf32>
    %86 = vector.shape_cast %85 : vector<34xf32> to vector<34x1xf32>
    %87 = vector.broadcast %86 : vector<34x1xf32> to vector<34x34xf32>
    %88 = arith.subf %84, %87 : vector<34x34xf32>
    %89 = math.exp %88 : vector<34x34xf32>
    %cst_53 = arith.constant dense<0.000000e+00> : vector<34xf32>
    %90 = vector.multi_reduction <add>, %89, %cst_53 [1] : vector<34x34xf32> to vector<34xf32>
    %91 = vector.shape_cast %90 : vector<34xf32> to vector<34x1xf32>
    %92 = tpu.reciprocal %91 {approx = true} : vector<34x1xf32> -> vector<34x1xf32>
    %93 = vector.broadcast %92 : vector<34x1xf32> to vector<34x34xf32>
    %94 = arith.mulf %89, %93 : vector<34x34xf32>
    %cst_54 = arith.constant dense<0.000000e+00> : vector<34x8xf32>
    %95 = tpu.matmul %94, %80, %cst_54 {dimension_numbers = #tpu.dot_dimension_numbers<[1], [0], [0], [1], [0, 0, 1, 1], [], []>} : vector<34x34xf32>, vector<34x8xf32>, vector<34x8xf32> -> vector<34x8xf32>
    %96 = vector.extract_strided_slice %51 {offsets = [8, 0], sizes = [8, 32], strides = [1, 1]} : vector<32x32xf32> to vector<8x32xf32>
    %cst_55 = arith.constant dense<0.000000e+00> : vector<34x32xf32>
    %97 = tpu.matmul %95, %96, %cst_55 {dimension_numbers = #tpu.dot_dimension_numbers<[1], [0], [0], [1], [0, 0, 1, 1], [], []>} : vector<34x8xf32>, vector<8x32xf32>, vector<34x32xf32> -> vector<34x32xf32>
    %98 = arith.addf %77, %97 : vector<34x32xf32>
    %99 = vector.extract_strided_slice %49 {offsets = [0, 16], sizes = [34, 8], strides = [1, 1]} : vector<34x96xf32> to vector<34x8xf32>
    %100 = vector.extract_strided_slice %49 {offsets = [0, 48], sizes = [34, 8], strides = [1, 1]} : vector<34x96xf32> to vector<34x8xf32>
    %101 = vector.extract_strided_slice %49 {offsets = [0, 80], sizes = [34, 8], strides = [1, 1]} : vector<34x96xf32> to vector<34x8xf32>
    "tpu.trace_start"() <{level = 10 : i32, message = "md,nd->mn"}> : () -> ()
    %cst_56 = arith.constant dense<0.000000e+00> : vector<34x34xf32>
    %102 = tpu.matmul %99, %100, %cst_56 {dimension_numbers = #tpu.dot_dimension_numbers<[1], [1], [0], [0], [0, 0, 1, 0], [], []>} : vector<34x8xf32>, vector<34x8xf32>, vector<34x34xf32> -> vector<34x34xf32>
    "tpu.trace_stop"() : () -> ()
    %cst_57 = arith.constant 0.353553385 : f32
    %103 = vector.broadcast %cst_57 : f32 to vector<34x34xf32>
    %104 = arith.mulf %102, %103 : vector<34x34xf32>
    %105 = arith.addf %104, %18 : vector<34x34xf32>
    %cst_58 = arith.constant dense<0xFF800000> : vector<34xf32>
    %106 = vector.multi_reduction <maximumf>, %105, %cst_58 [1] : vector<34x34xf32> to vector<34xf32>
    %107 = vector.shape_cast %106 : vector<34xf32> to vector<34x1xf32>
    %108 = vector.broadcast %107 : vector<34x1xf32> to vector<34x34xf32>
    %109 = arith.subf %105, %108 : vector<34x34xf32>
    %110 = math.exp %109 : vector<34x34xf32>
    %cst_59 = arith.constant dense<0.000000e+00> : vector<34xf32>
    %111 = vector.multi_reduction <add>, %110, %cst_59 [1] : vector<34x34xf32> to vector<34xf32>
    %112 = vector.shape_cast %111 : vector<34xf32> to vector<34x1xf32>
    %113 = tpu.reciprocal %112 {approx = true} : vector<34x1xf32> -> vector<34x1xf32>
    %114 = vector.broadcast %113 : vector<34x1xf32> to vector<34x34xf32>
    %115 = arith.mulf %110, %114 : vector<34x34xf32>
    %cst_60 = arith.constant dense<0.000000e+00> : vector<34x8xf32>
    %116 = tpu.matmul %115, %101, %cst_60 {dimension_numbers = #tpu.dot_dimension_numbers<[1], [0], [0], [1], [0, 0, 1, 1], [], []>} : vector<34x34xf32>, vector<34x8xf32>, vector<34x8xf32> -> vector<34x8xf32>
    %117 = vector.extract_strided_slice %51 {offsets = [16, 0], sizes = [8, 32], strides = [1, 1]} : vector<32x32xf32> to vector<8x32xf32>
    %cst_61 = arith.constant dense<0.000000e+00> : vector<34x32xf32>
    %118 = tpu.matmul %116, %117, %cst_61 {dimension_numbers = #tpu.dot_dimension_numbers<[1], [0], [0], [1], [0, 0, 1, 1], [], []>} : vector<34x8xf32>, vector<8x32xf32>, vector<34x32xf32> -> vector<34x32xf32>
    %119 = arith.addf %98, %118 : vector<34x32xf32>
    %120 = vector.extract_strided_slice %49 {offsets = [0, 24], sizes = [34, 8], strides = [1, 1]} : vector<34x96xf32> to vector<34x8xf32>
    %121 = vector.extract_strided_slice %49 {offsets = [0, 56], sizes = [34, 8], strides = [1, 1]} : vector<34x96xf32> to vector<34x8xf32>
    %122 = vector.extract_strided_slice %49 {offsets = [0, 88], sizes = [34, 8], strides = [1, 1]} : vector<34x96xf32> to vector<34x8xf32>
    "tpu.trace_start"() <{level = 10 : i32, message = "md,nd->mn"}> : () -> ()
    %cst_62 = arith.constant dense<0.000000e+00> : vector<34x34xf32>
    %123 = tpu.matmul %120, %121, %cst_62 {dimension_numbers = #tpu.dot_dimension_numbers<[1], [1], [0], [0], [0, 0, 1, 0], [], []>} : vector<34x8xf32>, vector<34x8xf32>, vector<34x34xf32> -> vector<34x34xf32>
    "tpu.trace_stop"() : () -> ()
    %cst_63 = arith.constant 0.353553385 : f32
    %124 = vector.broadcast %cst_63 : f32 to vector<34x34xf32>
    %125 = arith.mulf %123, %124 : vector<34x34xf32>
    %126 = arith.addf %125, %18 : vector<34x34xf32>
    %cst_64 = arith.constant dense<0xFF800000> : vector<34xf32>
    %127 = vector.multi_reduction <maximumf>, %126, %cst_64 [1] : vector<34x34xf32> to vector<34xf32>
    %128 = vector.shape_cast %127 : vector<34xf32> to vector<34x1xf32>
    %129 = vector.broadcast %128 : vector<34x1xf32> to vector<34x34xf32>
    %130 = arith.subf %126, %129 : vector<34x34xf32>
    %131 = math.exp %130 : vector<34x34xf32>
    %cst_65 = arith.constant dense<0.000000e+00> : vector<34xf32>
    %132 = vector.multi_reduction <add>, %131, %cst_65 [1] : vector<34x34xf32> to vector<34xf32>
    %133 = vector.shape_cast %132 : vector<34xf32> to vector<34x1xf32>
    %134 = tpu.reciprocal %133 {approx = true} : vector<34x1xf32> -> vector<34x1xf32>
    %135 = vector.broadcast %134 : vector<34x1xf32> to vector<34x34xf32>
    %136 = arith.mulf %131, %135 : vector<34x34xf32>
    %cst_66 = arith.constant dense<0.000000e+00> : vector<34x8xf32>
    %137 = tpu.matmul %136, %122, %cst_66 {dimension_numbers = #tpu.dot_dimension_numbers<[1], [0], [0], [1], [0, 0, 1, 1], [], []>} : vector<34x34xf32>, vector<34x8xf32>, vector<34x8xf32> -> vector<34x8xf32>
    %138 = vector.extract_strided_slice %51 {offsets = [24, 0], sizes = [8, 32], strides = [1, 1]} : vector<32x32xf32> to vector<8x32xf32>
    %cst_67 = arith.constant dense<0.000000e+00> : vector<34x32xf32>
    %139 = tpu.matmul %137, %138, %cst_67 {dimension_numbers = #tpu.dot_dimension_numbers<[1], [0], [0], [1], [0, 0, 1, 1], [], []>} : vector<34x8xf32>, vector<8x32xf32>, vector<34x32xf32> -> vector<34x32xf32>
    %140 = arith.addf %119, %139 : vector<34x32xf32>
    %141 = arith.addf %17, %140 : vector<34x32xf32>
    %c0_68 = arith.constant 0 : index
    %c0_69 = arith.constant 0 : index
    %c0_70 = arith.constant 0 : index
    %142 = vector.load %arg16[%c0_68, %c0_69, %c0_70] : memref<2x1x32xf32, #tpu.memory_space<vmem>>, vector<1x1x32xf32>
    %143 = vector.shape_cast %142 : vector<1x1x32xf32> to vector<1x32xf32>
    %c0_71 = arith.constant 0 : index
    %c0_72 = arith.constant 0 : index
    %c0_73 = arith.constant 0 : index
    %144 = vector.load %arg17[%c0_71, %c0_72, %c0_73] : memref<2x1x32xf32, #tpu.memory_space<vmem>>, vector<1x1x32xf32>
    %145 = vector.shape_cast %144 : vector<1x1x32xf32> to vector<1x32xf32>
    %cst_74 = arith.constant dense<0.000000e+00> : vector<34xf32>
    %146 = vector.multi_reduction <add>, %141, %cst_74 [1] : vector<34x32xf32> to vector<34xf32>
    %147 = vector.shape_cast %146 : vector<34xf32> to vector<34x1xf32>
    %cst_75 = arith.constant 3.200000e+01 : f32
    %148 = vector.broadcast %cst_75 : f32 to vector<34x1xf32>
    %149 = arith.divf %147, %148 : vector<34x1xf32>
    %150 = vector.broadcast %149 : vector<34x1xf32> to vector<34x32xf32>
    %151 = arith.subf %141, %150 : vector<34x32xf32>
    %152 = arith.mulf %151, %151 : vector<34x32xf32>
    %cst_76 = arith.constant dense<0.000000e+00> : vector<34xf32>
    %153 = vector.multi_reduction <add>, %152, %cst_76 [1] : vector<34x32xf32> to vector<34xf32>
    %154 = vector.shape_cast %153 : vector<34xf32> to vector<34x1xf32>
    %cst_77 = arith.constant 3.200000e+01 : f32
    %155 = vector.broadcast %cst_77 : f32 to vector<34x1xf32>
    %156 = arith.divf %154, %155 : vector<34x1xf32>
    %cst_78 = arith.constant 9.99999996E-13 : f32
    %157 = vector.broadcast %cst_78 : f32 to vector<34x1xf32>
    %158 = arith.addf %156, %157 : vector<34x1xf32>
    %159 = math.rsqrt %158 : vector<34x1xf32>
    %160 = vector.broadcast %159 : vector<34x1xf32> to vector<34x32xf32>
    %161 = arith.mulf %151, %160 : vector<34x32xf32>
    %162 = vector.broadcast %143 : vector<1x32xf32> to vector<34x32xf32>
    %163 = arith.mulf %161, %162 : vector<34x32xf32>
    %164 = vector.broadcast %145 : vector<1x32xf32> to vector<34x32xf32>
    %165 = arith.addf %163, %164 : vector<34x32xf32>
    %c0_79 = arith.constant 0 : index
    %c0_80 = arith.constant 0 : index
    %c0_81 = arith.constant 0 : index
    %166 = vector.load %arg18[%c0_79, %c0_80, %c0_81] : memref<2x32x64xf32, #tpu.memory_space<vmem>>, vector<1x32x64xf32>
    %167 = vector.shape_cast %166 : vector<1x32x64xf32> to vector<32x64xf32>
    %cst_82 = arith.constant dense<0.000000e+00> : vector<34x64xf32>
    %168 = tpu.matmul %165, %167, %cst_82 {dimension_numbers = #tpu.dot_dimension_numbers<[1], [0], [0], [1], [0, 0, 1, 1], [], []>} : vector<34x32xf32>, vector<32x64xf32>, vector<34x64xf32> -> vector<34x64xf32>
    %c0_83 = arith.constant 0 : index
    %c0_84 = arith.constant 0 : index
    %c0_85 = arith.constant 0 : index
    %169 = vector.load %arg19[%c0_83, %c0_84, %c0_85] : memref<2x1x64xf32, #tpu.memory_space<vmem>>, vector<1x1x64xf32>
    %170 = vector.shape_cast %169 : vector<1x1x64xf32> to vector<1x64xf32>
    %171 = vector.broadcast %170 : vector<1x64xf32> to vector<34x64xf32>
    %172 = arith.addf %168, %171 : vector<34x64xf32>
    %cst_86 = arith.constant 5.000000e-01 : f32
    %173 = vector.broadcast %cst_86 : f32 to vector<34x64xf32>
    %174 = arith.mulf %173, %172 : vector<34x64xf32>
    %cst_87 = arith.constant 0.707106769 : f32
    %175 = vector.broadcast %cst_87 : f32 to vector<34x64xf32>
    %176 = arith.mulf %172, %175 : vector<34x64xf32>
    %177 = math.erf %176 : vector<34x64xf32>
    %cst_88 = arith.constant 1.000000e+00 : f32
    %178 = vector.broadcast %cst_88 : f32 to vector<34x64xf32>
    %179 = arith.addf %178, %177 : vector<34x64xf32>
    %180 = arith.mulf %174, %179 : vector<34x64xf32>
    %c0_89 = arith.constant 0 : index
    %c0_90 = arith.constant 0 : index
    %c0_91 = arith.constant 0 : index
    %181 = vector.load %arg20[%c0_89, %c0_90, %c0_91] : memref<2x64x32xf32, #tpu.memory_space<vmem>>, vector<1x64x32xf32>
    %182 = vector.shape_cast %181 : vector<1x64x32xf32> to vector<64x32xf32>
    %cst_92 = arith.constant dense<0.000000e+00> : vector<34x32xf32>
    %183 = tpu.matmul %180, %182, %cst_92 {dimension_numbers = #tpu.dot_dimension_numbers<[1], [0], [0], [1], [0, 0, 1, 1], [], []>} : vector<34x64xf32>, vector<64x32xf32>, vector<34x32xf32> -> vector<34x32xf32>
    %184 = arith.addf %141, %183 : vector<34x32xf32>
    %c0_93 = arith.constant 0 : index
    %c0_94 = arith.constant 0 : index
    %c0_95 = arith.constant 0 : index
    %185 = vector.load %arg21[%c0_93, %c0_94, %c0_95] : memref<2x1x32xf32, #tpu.memory_space<vmem>>, vector<1x1x32xf32>
    %186 = vector.shape_cast %185 : vector<1x1x32xf32> to vector<1x32xf32>
    %187 = vector.broadcast %186 : vector<1x32xf32> to vector<34x32xf32>
    %188 = arith.addf %184, %187 : vector<34x32xf32>
    %c1 = arith.constant 1 : index
    %c0_96 = arith.constant 0 : index
    %c0_97 = arith.constant 0 : index
    %189 = vector.load %arg10[%c1, %c0_96, %c0_97] : memref<2x1x32xf32, #tpu.memory_space<vmem>>, vector<1x1x32xf32>
    %190 = vector.shape_cast %189 : vector<1x1x32xf32> to vector<1x32xf32>
    %c1_98 = arith.constant 1 : index
    %c0_99 = arith.constant 0 : index
    %c0_100 = arith.constant 0 : index
    %191 = vector.load %arg11[%c1_98, %c0_99, %c0_100] : memref<2x1x32xf32, #tpu.memory_space<vmem>>, vector<1x1x32xf32>
    %192 = vector.shape_cast %191 : vector<1x1x32xf32> to vector<1x32xf32>
    %cst_101 = arith.constant dense<0.000000e+00> : vector<34xf32>
    %193 = vector.multi_reduction <add>, %188, %cst_101 [1] : vector<34x32xf32> to vector<34xf32>
    %194 = vector.shape_cast %193 : vector<34xf32> to vector<34x1xf32>
    %cst_102 = arith.constant 3.200000e+01 : f32
    %195 = vector.broadcast %cst_102 : f32 to vector<34x1xf32>
    %196 = arith.divf %194, %195 : vector<34x1xf32>
    %197 = vector.broadcast %196 : vector<34x1xf32> to vector<34x32xf32>
    %198 = arith.subf %188, %197 : vector<34x32xf32>
    %199 = arith.mulf %198, %198 : vector<34x32xf32>
    %cst_103 = arith.constant dense<0.000000e+00> : vector<34xf32>
    %200 = vector.multi_reduction <add>, %199, %cst_103 [1] : vector<34x32xf32> to vector<34xf32>
    %201 = vector.shape_cast %200 : vector<34xf32> to vector<34x1xf32>
    %cst_104 = arith.constant 3.200000e+01 : f32
    %202 = vector.broadcast %cst_104 : f32 to vector<34x1xf32>
    %203 = arith.divf %201, %202 : vector<34x1xf32>
    %cst_105 = arith.constant 9.99999996E-13 : f32
    %204 = vector.broadcast %cst_105 : f32 to vector<34x1xf32>
    %205 = arith.addf %203, %204 : vector<34x1xf32>
    %206 = math.rsqrt %205 : vector<34x1xf32>
    %207 = vector.broadcast %206 : vector<34x1xf32> to vector<34x32xf32>
    %208 = arith.mulf %198, %207 : vector<34x32xf32>
    %209 = vector.broadcast %190 : vector<1x32xf32> to vector<34x32xf32>
    %210 = arith.mulf %208, %209 : vector<34x32xf32>
    %211 = vector.broadcast %192 : vector<1x32xf32> to vector<34x32xf32>
    %212 = arith.addf %210, %211 : vector<34x32xf32>
    %c1_106 = arith.constant 1 : index
    %c0_107 = arith.constant 0 : index
    %c0_108 = arith.constant 0 : index
    %213 = vector.load %arg12[%c1_106, %c0_107, %c0_108] : memref<2x32x96xf32, #tpu.memory_space<vmem>>, vector<1x32x96xf32>
    %214 = vector.shape_cast %213 : vector<1x32x96xf32> to vector<32x96xf32>
    %cst_109 = arith.constant dense<0.000000e+00> : vector<34x96xf32>
    %215 = tpu.matmul %212, %214, %cst_109 {dimension_numbers = #tpu.dot_dimension_numbers<[1], [0], [0], [1], [0, 0, 1, 1], [], []>} : vector<34x32xf32>, vector<32x96xf32>, vector<34x96xf32> -> vector<34x96xf32>
    %c1_110 = arith.constant 1 : index
    %c0_111 = arith.constant 0 : index
    %c0_112 = arith.constant 0 : index
    %216 = vector.load %arg13[%c1_110, %c0_111, %c0_112] : memref<2x1x96xf32, #tpu.memory_space<vmem>>, vector<1x1x96xf32>
    %217 = vector.shape_cast %216 : vector<1x1x96xf32> to vector<1x96xf32>
    %218 = vector.broadcast %217 : vector<1x96xf32> to vector<34x96xf32>
    %219 = arith.addf %215, %218 : vector<34x96xf32>
    %c1_113 = arith.constant 1 : index
    %c0_114 = arith.constant 0 : index
    %c0_115 = arith.constant 0 : index
    %220 = vector.load %arg14[%c1_113, %c0_114, %c0_115] : memref<2x32x32xf32, #tpu.memory_space<vmem>>, vector<1x32x32xf32>
    %221 = vector.shape_cast %220 : vector<1x32x32xf32> to vector<32x32xf32>
    %cst_116 = arith.constant 0.000000e+00 : f32
    %222 = vector.broadcast %cst_116 : f32 to vector<34x32xf32>
    %c1_117 = arith.constant 1 : index
    %c0_118 = arith.constant 0 : index
    %c0_119 = arith.constant 0 : index
    %223 = vector.load %arg15[%c1_117, %c0_118, %c0_119] : memref<2x1x32xf32, #tpu.memory_space<vmem>>, vector<1x1x32xf32>
    %224 = vector.shape_cast %223 : vector<1x1x32xf32> to vector<1x32xf32>
    %225 = vector.broadcast %224 : vector<1x32xf32> to vector<34x32xf32>
    %226 = arith.addf %222, %225 : vector<34x32xf32>
    %227 = vector.extract_strided_slice %219 {offsets = [0, 0], sizes = [34, 8], strides = [1, 1]} : vector<34x96xf32> to vector<34x8xf32>
    %228 = vector.extract_strided_slice %219 {offsets = [0, 32], sizes = [34, 8], strides = [1, 1]} : vector<34x96xf32> to vector<34x8xf32>
    %229 = vector.extract_strided_slice %219 {offsets = [0, 64], sizes = [34, 8], strides = [1, 1]} : vector<34x96xf32> to vector<34x8xf32>
    "tpu.trace_start"() <{level = 10 : i32, message = "md,nd->mn"}> : () -> ()
    %cst_120 = arith.constant dense<0.000000e+00> : vector<34x34xf32>
    %230 = tpu.matmul %227, %228, %cst_120 {dimension_numbers = #tpu.dot_dimension_numbers<[1], [1], [0], [0], [0, 0, 1, 0], [], []>} : vector<34x8xf32>, vector<34x8xf32>, vector<34x34xf32> -> vector<34x34xf32>
    "tpu.trace_stop"() : () -> ()
    %cst_121 = arith.constant 0.353553385 : f32
    %231 = vector.broadcast %cst_121 : f32 to vector<34x34xf32>
    %232 = arith.mulf %230, %231 : vector<34x34xf32>
    %233 = arith.addf %232, %18 : vector<34x34xf32>
    %cst_122 = arith.constant dense<0xFF800000> : vector<34xf32>
    %234 = vector.multi_reduction <maximumf>, %233, %cst_122 [1] : vector<34x34xf32> to vector<34xf32>
    %235 = vector.shape_cast %234 : vector<34xf32> to vector<34x1xf32>
    %236 = vector.broadcast %235 : vector<34x1xf32> to vector<34x34xf32>
    %237 = arith.subf %233, %236 : vector<34x34xf32>
    %238 = math.exp %237 : vector<34x34xf32>
    %cst_123 = arith.constant dense<0.000000e+00> : vector<34xf32>
    %239 = vector.multi_reduction <add>, %238, %cst_123 [1] : vector<34x34xf32> to vector<34xf32>
    %240 = vector.shape_cast %239 : vector<34xf32> to vector<34x1xf32>
    %241 = tpu.reciprocal %240 {approx = true} : vector<34x1xf32> -> vector<34x1xf32>
    %242 = vector.broadcast %241 : vector<34x1xf32> to vector<34x34xf32>
    %243 = arith.mulf %238, %242 : vector<34x34xf32>
    %cst_124 = arith.constant dense<0.000000e+00> : vector<34x8xf32>
    %244 = tpu.matmul %243, %229, %cst_124 {dimension_numbers = #tpu.dot_dimension_numbers<[1], [0], [0], [1], [0, 0, 1, 1], [], []>} : vector<34x34xf32>, vector<34x8xf32>, vector<34x8xf32> -> vector<34x8xf32>
    %245 = vector.extract_strided_slice %221 {offsets = [0, 0], sizes = [8, 32], strides = [1, 1]} : vector<32x32xf32> to vector<8x32xf32>
    %cst_125 = arith.constant dense<0.000000e+00> : vector<34x32xf32>
    %246 = tpu.matmul %244, %245, %cst_125 {dimension_numbers = #tpu.dot_dimension_numbers<[1], [0], [0], [1], [0, 0, 1, 1], [], []>} : vector<34x8xf32>, vector<8x32xf32>, vector<34x32xf32> -> vector<34x32xf32>
    %247 = arith.addf %226, %246 : vector<34x32xf32>
    %248 = vector.extract_strided_slice %219 {offsets = [0, 8], sizes = [34, 8], strides = [1, 1]} : vector<34x96xf32> to vector<34x8xf32>
    %249 = vector.extract_strided_slice %219 {offsets = [0, 40], sizes = [34, 8], strides = [1, 1]} : vector<34x96xf32> to vector<34x8xf32>
    %250 = vector.extract_strided_slice %219 {offsets = [0, 72], sizes = [34, 8], strides = [1, 1]} : vector<34x96xf32> to vector<34x8xf32>
    "tpu.trace_start"() <{level = 10 : i32, message = "md,nd->mn"}> : () -> ()
    %cst_126 = arith.constant dense<0.000000e+00> : vector<34x34xf32>
    %251 = tpu.matmul %248, %249, %cst_126 {dimension_numbers = #tpu.dot_dimension_numbers<[1], [1], [0], [0], [0, 0, 1, 0], [], []>} : vector<34x8xf32>, vector<34x8xf32>, vector<34x34xf32> -> vector<34x34xf32>
    "tpu.trace_stop"() : () -> ()
    %cst_127 = arith.constant 0.353553385 : f32
    %252 = vector.broadcast %cst_127 : f32 to vector<34x34xf32>
    %253 = arith.mulf %251, %252 : vector<34x34xf32>
    %254 = arith.addf %253, %18 : vector<34x34xf32>
    %cst_128 = arith.constant dense<0xFF800000> : vector<34xf32>
    %255 = vector.multi_reduction <maximumf>, %254, %cst_128 [1] : vector<34x34xf32> to vector<34xf32>
    %256 = vector.shape_cast %255 : vector<34xf32> to vector<34x1xf32>
    %257 = vector.broadcast %256 : vector<34x1xf32> to vector<34x34xf32>
    %258 = arith.subf %254, %257 : vector<34x34xf32>
    %259 = math.exp %258 : vector<34x34xf32>
    %cst_129 = arith.constant dense<0.000000e+00> : vector<34xf32>
    %260 = vector.multi_reduction <add>, %259, %cst_129 [1] : vector<34x34xf32> to vector<34xf32>
    %261 = vector.shape_cast %260 : vector<34xf32> to vector<34x1xf32>
    %262 = tpu.reciprocal %261 {approx = true} : vector<34x1xf32> -> vector<34x1xf32>
    %263 = vector.broadcast %262 : vector<34x1xf32> to vector<34x34xf32>
    %264 = arith.mulf %259, %263 : vector<34x34xf32>
    %cst_130 = arith.constant dense<0.000000e+00> : vector<34x8xf32>
    %265 = tpu.matmul %264, %250, %cst_130 {dimension_numbers = #tpu.dot_dimension_numbers<[1], [0], [0], [1], [0, 0, 1, 1], [], []>} : vector<34x34xf32>, vector<34x8xf32>, vector<34x8xf32> -> vector<34x8xf32>
    %266 = vector.extract_strided_slice %221 {offsets = [8, 0], sizes = [8, 32], strides = [1, 1]} : vector<32x32xf32> to vector<8x32xf32>
    %cst_131 = arith.constant dense<0.000000e+00> : vector<34x32xf32>
    %267 = tpu.matmul %265, %266, %cst_131 {dimension_numbers = #tpu.dot_dimension_numbers<[1], [0], [0], [1], [0, 0, 1, 1], [], []>} : vector<34x8xf32>, vector<8x32xf32>, vector<34x32xf32> -> vector<34x32xf32>
    %268 = arith.addf %247, %267 : vector<34x32xf32>
    %269 = vector.extract_strided_slice %219 {offsets = [0, 16], sizes = [34, 8], strides = [1, 1]} : vector<34x96xf32> to vector<34x8xf32>
    %270 = vector.extract_strided_slice %219 {offsets = [0, 48], sizes = [34, 8], strides = [1, 1]} : vector<34x96xf32> to vector<34x8xf32>
    %271 = vector.extract_strided_slice %219 {offsets = [0, 80], sizes = [34, 8], strides = [1, 1]} : vector<34x96xf32> to vector<34x8xf32>
    "tpu.trace_start"() <{level = 10 : i32, message = "md,nd->mn"}> : () -> ()
    %cst_132 = arith.constant dense<0.000000e+00> : vector<34x34xf32>
    %272 = tpu.matmul %269, %270, %cst_132 {dimension_numbers = #tpu.dot_dimension_numbers<[1], [1], [0], [0], [0, 0, 1, 0], [], []>} : vector<34x8xf32>, vector<34x8xf32>, vector<34x34xf32> -> vector<34x34xf32>
    "tpu.trace_stop"() : () -> ()
    %cst_133 = arith.constant 0.353553385 : f32
    %273 = vector.broadcast %cst_133 : f32 to vector<34x34xf32>
    %274 = arith.mulf %272, %273 : vector<34x34xf32>
    %275 = arith.addf %274, %18 : vector<34x34xf32>
    %cst_134 = arith.constant dense<0xFF800000> : vector<34xf32>
    %276 = vector.multi_reduction <maximumf>, %275, %cst_134 [1] : vector<34x34xf32> to vector<34xf32>
    %277 = vector.shape_cast %276 : vector<34xf32> to vector<34x1xf32>
    %278 = vector.broadcast %277 : vector<34x1xf32> to vector<34x34xf32>
    %279 = arith.subf %275, %278 : vector<34x34xf32>
    %280 = math.exp %279 : vector<34x34xf32>
    %cst_135 = arith.constant dense<0.000000e+00> : vector<34xf32>
    %281 = vector.multi_reduction <add>, %280, %cst_135 [1] : vector<34x34xf32> to vector<34xf32>
    %282 = vector.shape_cast %281 : vector<34xf32> to vector<34x1xf32>
    %283 = tpu.reciprocal %282 {approx = true} : vector<34x1xf32> -> vector<34x1xf32>
    %284 = vector.broadcast %283 : vector<34x1xf32> to vector<34x34xf32>
    %285 = arith.mulf %280, %284 : vector<34x34xf32>
    %cst_136 = arith.constant dense<0.000000e+00> : vector<34x8xf32>
    %286 = tpu.matmul %285, %271, %cst_136 {dimension_numbers = #tpu.dot_dimension_numbers<[1], [0], [0], [1], [0, 0, 1, 1], [], []>} : vector<34x34xf32>, vector<34x8xf32>, vector<34x8xf32> -> vector<34x8xf32>
    %287 = vector.extract_strided_slice %221 {offsets = [16, 0], sizes = [8, 32], strides = [1, 1]} : vector<32x32xf32> to vector<8x32xf32>
    %cst_137 = arith.constant dense<0.000000e+00> : vector<34x32xf32>
    %288 = tpu.matmul %286, %287, %cst_137 {dimension_numbers = #tpu.dot_dimension_numbers<[1], [0], [0], [1], [0, 0, 1, 1], [], []>} : vector<34x8xf32>, vector<8x32xf32>, vector<34x32xf32> -> vector<34x32xf32>
    %289 = arith.addf %268, %288 : vector<34x32xf32>
    %290 = vector.extract_strided_slice %219 {offsets = [0, 24], sizes = [34, 8], strides = [1, 1]} : vector<34x96xf32> to vector<34x8xf32>
    %291 = vector.extract_strided_slice %219 {offsets = [0, 56], sizes = [34, 8], strides = [1, 1]} : vector<34x96xf32> to vector<34x8xf32>
    %292 = vector.extract_strided_slice %219 {offsets = [0, 88], sizes = [34, 8], strides = [1, 1]} : vector<34x96xf32> to vector<34x8xf32>
    "tpu.trace_start"() <{level = 10 : i32, message = "md,nd->mn"}> : () -> ()
    %cst_138 = arith.constant dense<0.000000e+00> : vector<34x34xf32>
    %293 = tpu.matmul %290, %291, %cst_138 {dimension_numbers = #tpu.dot_dimension_numbers<[1], [1], [0], [0], [0, 0, 1, 0], [], []>} : vector<34x8xf32>, vector<34x8xf32>, vector<34x34xf32> -> vector<34x34xf32>
    "tpu.trace_stop"() : () -> ()
    %cst_139 = arith.constant 0.353553385 : f32
    %294 = vector.broadcast %cst_139 : f32 to vector<34x34xf32>
    %295 = arith.mulf %293, %294 : vector<34x34xf32>
    %296 = arith.addf %295, %18 : vector<34x34xf32>
    %cst_140 = arith.constant dense<0xFF800000> : vector<34xf32>
    %297 = vector.multi_reduction <maximumf>, %296, %cst_140 [1] : vector<34x34xf32> to vector<34xf32>
    %298 = vector.shape_cast %297 : vector<34xf32> to vector<34x1xf32>
    %299 = vector.broadcast %298 : vector<34x1xf32> to vector<34x34xf32>
    %300 = arith.subf %296, %299 : vector<34x34xf32>
    %301 = math.exp %300 : vector<34x34xf32>
    %cst_141 = arith.constant dense<0.000000e+00> : vector<34xf32>
    %302 = vector.multi_reduction <add>, %301, %cst_141 [1] : vector<34x34xf32> to vector<34xf32>
    %303 = vector.shape_cast %302 : vector<34xf32> to vector<34x1xf32>
    %304 = tpu.reciprocal %303 {approx = true} : vector<34x1xf32> -> vector<34x1xf32>
    %305 = vector.broadcast %304 : vector<34x1xf32> to vector<34x34xf32>
    %306 = arith.mulf %301, %305 : vector<34x34xf32>
    %cst_142 = arith.constant dense<0.000000e+00> : vector<34x8xf32>
    %307 = tpu.matmul %306, %292, %cst_142 {dimension_numbers = #tpu.dot_dimension_numbers<[1], [0], [0], [1], [0, 0, 1, 1], [], []>} : vector<34x34xf32>, vector<34x8xf32>, vector<34x8xf32> -> vector<34x8xf32>
    %308 = vector.extract_strided_slice %221 {offsets = [24, 0], sizes = [8, 32], strides = [1, 1]} : vector<32x32xf32> to vector<8x32xf32>
    %cst_143 = arith.constant dense<0.000000e+00> : vector<34x32xf32>
    %309 = tpu.matmul %307, %308, %cst_143 {dimension_numbers = #tpu.dot_dimension_numbers<[1], [0], [0], [1], [0, 0, 1, 1], [], []>} : vector<34x8xf32>, vector<8x32xf32>, vector<34x32xf32> -> vector<34x32xf32>
    %310 = arith.addf %289, %309 : vector<34x32xf32>
    %311 = arith.addf %188, %310 : vector<34x32xf32>
    %c1_144 = arith.constant 1 : index
    %c0_145 = arith.constant 0 : index
    %c0_146 = arith.constant 0 : index
    %312 = vector.load %arg16[%c1_144, %c0_145, %c0_146] : memref<2x1x32xf32, #tpu.memory_space<vmem>>, vector<1x1x32xf32>
    %313 = vector.shape_cast %312 : vector<1x1x32xf32> to vector<1x32xf32>
    %c1_147 = arith.constant 1 : index
    %c0_148 = arith.constant 0 : index
    %c0_149 = arith.constant 0 : index
    %314 = vector.load %arg17[%c1_147, %c0_148, %c0_149] : memref<2x1x32xf32, #tpu.memory_space<vmem>>, vector<1x1x32xf32>
    %315 = vector.shape_cast %314 : vector<1x1x32xf32> to vector<1x32xf32>
    %cst_150 = arith.constant dense<0.000000e+00> : vector<34xf32>
    %316 = vector.multi_reduction <add>, %311, %cst_150 [1] : vector<34x32xf32> to vector<34xf32>
    %317 = vector.shape_cast %316 : vector<34xf32> to vector<34x1xf32>
    %cst_151 = arith.constant 3.200000e+01 : f32
    %318 = vector.broadcast %cst_151 : f32 to vector<34x1xf32>
    %319 = arith.divf %317, %318 : vector<34x1xf32>
    %320 = vector.broadcast %319 : vector<34x1xf32> to vector<34x32xf32>
    %321 = arith.subf %311, %320 : vector<34x32xf32>
    %322 = arith.mulf %321, %321 : vector<34x32xf32>
    %cst_152 = arith.constant dense<0.000000e+00> : vector<34xf32>
    %323 = vector.multi_reduction <add>, %322, %cst_152 [1] : vector<34x32xf32> to vector<34xf32>
    %324 = vector.shape_cast %323 : vector<34xf32> to vector<34x1xf32>
    %cst_153 = arith.constant 3.200000e+01 : f32
    %325 = vector.broadcast %cst_153 : f32 to vector<34x1xf32>
    %326 = arith.divf %324, %325 : vector<34x1xf32>
    %cst_154 = arith.constant 9.99999996E-13 : f32
    %327 = vector.broadcast %cst_154 : f32 to vector<34x1xf32>
    %328 = arith.addf %326, %327 : vector<34x1xf32>
    %329 = math.rsqrt %328 : vector<34x1xf32>
    %330 = vector.broadcast %329 : vector<34x1xf32> to vector<34x32xf32>
    %331 = arith.mulf %321, %330 : vector<34x32xf32>
    %332 = vector.broadcast %313 : vector<1x32xf32> to vector<34x32xf32>
    %333 = arith.mulf %331, %332 : vector<34x32xf32>
    %334 = vector.broadcast %315 : vector<1x32xf32> to vector<34x32xf32>
    %335 = arith.addf %333, %334 : vector<34x32xf32>
    %c1_155 = arith.constant 1 : index
    %c0_156 = arith.constant 0 : index
    %c0_157 = arith.constant 0 : index
    %336 = vector.load %arg18[%c1_155, %c0_156, %c0_157] : memref<2x32x64xf32, #tpu.memory_space<vmem>>, vector<1x32x64xf32>
    %337 = vector.shape_cast %336 : vector<1x32x64xf32> to vector<32x64xf32>
    %cst_158 = arith.constant dense<0.000000e+00> : vector<34x64xf32>
    %338 = tpu.matmul %335, %337, %cst_158 {dimension_numbers = #tpu.dot_dimension_numbers<[1], [0], [0], [1], [0, 0, 1, 1], [], []>} : vector<34x32xf32>, vector<32x64xf32>, vector<34x64xf32> -> vector<34x64xf32>
    %c1_159 = arith.constant 1 : index
    %c0_160 = arith.constant 0 : index
    %c0_161 = arith.constant 0 : index
    %339 = vector.load %arg19[%c1_159, %c0_160, %c0_161] : memref<2x1x64xf32, #tpu.memory_space<vmem>>, vector<1x1x64xf32>
    %340 = vector.shape_cast %339 : vector<1x1x64xf32> to vector<1x64xf32>
    %341 = vector.broadcast %340 : vector<1x64xf32> to vector<34x64xf32>
    %342 = arith.addf %338, %341 : vector<34x64xf32>
    %cst_162 = arith.constant 5.000000e-01 : f32
    %343 = vector.broadcast %cst_162 : f32 to vector<34x64xf32>
    %344 = arith.mulf %343, %342 : vector<34x64xf32>
    %cst_163 = arith.constant 0.707106769 : f32
    %345 = vector.broadcast %cst_163 : f32 to vector<34x64xf32>
    %346 = arith.mulf %342, %345 : vector<34x64xf32>
    %347 = math.erf %346 : vector<34x64xf32>
    %cst_164 = arith.constant 1.000000e+00 : f32
    %348 = vector.broadcast %cst_164 : f32 to vector<34x64xf32>
    %349 = arith.addf %348, %347 : vector<34x64xf32>
    %350 = arith.mulf %344, %349 : vector<34x64xf32>
    %c1_165 = arith.constant 1 : index
    %c0_166 = arith.constant 0 : index
    %c0_167 = arith.constant 0 : index
    %351 = vector.load %arg20[%c1_165, %c0_166, %c0_167] : memref<2x64x32xf32, #tpu.memory_space<vmem>>, vector<1x64x32xf32>
    %352 = vector.shape_cast %351 : vector<1x64x32xf32> to vector<64x32xf32>
    %cst_168 = arith.constant dense<0.000000e+00> : vector<34x32xf32>
    %353 = tpu.matmul %350, %352, %cst_168 {dimension_numbers = #tpu.dot_dimension_numbers<[1], [0], [0], [1], [0, 0, 1, 1], [], []>} : vector<34x64xf32>, vector<64x32xf32>, vector<34x32xf32> -> vector<34x32xf32>
    %354 = arith.addf %311, %353 : vector<34x32xf32>
    %c1_169 = arith.constant 1 : index
    %c0_170 = arith.constant 0 : index
    %c0_171 = arith.constant 0 : index
    %355 = vector.load %arg21[%c1_169, %c0_170, %c0_171] : memref<2x1x32xf32, #tpu.memory_space<vmem>>, vector<1x1x32xf32>
    %356 = vector.shape_cast %355 : vector<1x1x32xf32> to vector<1x32xf32>
    %357 = vector.broadcast %356 : vector<1x32xf32> to vector<34x32xf32>
    %358 = arith.addf %354, %357 : vector<34x32xf32>
    %c0_172 = arith.constant 0 : index
    %c0_173 = arith.constant 0 : index
    %359 = vector.load %arg5[%c0_172, %c0_173] : memref<2x34xf32, #tpu.memory_space<vmem>>, vector<2x34xf32>
    %cst_174 = arith.constant dense<0.000000e+00> : vector<2x32xf32>
    %360 = tpu.matmul %359, %358, %cst_174 {dimension_numbers = #tpu.dot_dimension_numbers<[1], [0], [0], [1], [0, 0, 1, 1], [], []>} : vector<2x34xf32>, vector<34x32xf32>, vector<2x32xf32> -> vector<2x32xf32>
    %c0_175 = arith.constant 0 : index
    %c0_176 = arith.constant 0 : index
    %361 = vector.load %arg22[%c0_175, %c0_176] : memref<1x32xf32, #tpu.memory_space<vmem>>, vector<1x32xf32>
    %c0_177 = arith.constant 0 : index
    %c0_178 = arith.constant 0 : index
    %362 = vector.load %arg23[%c0_177, %c0_178] : memref<1x32xf32, #tpu.memory_space<vmem>>, vector<1x32xf32>
    %cst_179 = arith.constant dense<0.000000e+00> : vector<2xf32>
    %363 = vector.multi_reduction <add>, %360, %cst_179 [1] : vector<2x32xf32> to vector<2xf32>
    %364 = vector.shape_cast %363 : vector<2xf32> to vector<2x1xf32>
    %cst_180 = arith.constant 3.200000e+01 : f32
    %365 = vector.broadcast %cst_180 : f32 to vector<2x1xf32>
    %366 = arith.divf %364, %365 : vector<2x1xf32>
    %367 = vector.broadcast %366 : vector<2x1xf32> to vector<2x32xf32>
    %368 = arith.subf %360, %367 : vector<2x32xf32>
    %369 = arith.mulf %368, %368 : vector<2x32xf32>
    %cst_181 = arith.constant dense<0.000000e+00> : vector<2xf32>
    %370 = vector.multi_reduction <add>, %369, %cst_181 [1] : vector<2x32xf32> to vector<2xf32>
    %371 = vector.shape_cast %370 : vector<2xf32> to vector<2x1xf32>
    %cst_182 = arith.constant 3.200000e+01 : f32
    %372 = vector.broadcast %cst_182 : f32 to vector<2x1xf32>
    %373 = arith.divf %371, %372 : vector<2x1xf32>
    %cst_183 = arith.constant 9.99999996E-13 : f32
    %374 = vector.broadcast %cst_183 : f32 to vector<2x1xf32>
    %375 = arith.addf %373, %374 : vector<2x1xf32>
    %376 = math.rsqrt %375 : vector<2x1xf32>
    %377 = vector.broadcast %376 : vector<2x1xf32> to vector<2x32xf32>
    %378 = arith.mulf %368, %377 : vector<2x32xf32>
    %379 = vector.broadcast %361 : vector<1x32xf32> to vector<2x32xf32>
    %380 = arith.mulf %378, %379 : vector<2x32xf32>
    %381 = vector.broadcast %362 : vector<1x32xf32> to vector<2x32xf32>
    %382 = arith.addf %380, %381 : vector<2x32xf32>
    %c0_184 = arith.constant 0 : index
    %c0_185 = arith.constant 0 : index
    %383 = vector.load %arg24[%c0_184, %c0_185] : memref<32x32xf32, #tpu.memory_space<vmem>>, vector<32x32xf32>
    %cst_186 = arith.constant dense<0.000000e+00> : vector<2x32xf32>
    %384 = tpu.matmul %382, %383, %cst_186 {dimension_numbers = #tpu.dot_dimension_numbers<[1], [0], [0], [1], [0, 0, 1, 1], [], []>} : vector<2x32xf32>, vector<32x32xf32>, vector<2x32xf32> -> vector<2x32xf32>
    %c0_187 = arith.constant 0 : index
    %c0_188 = arith.constant 0 : index
    %385 = vector.load %arg25[%c0_187, %c0_188] : memref<1x32xf32, #tpu.memory_space<vmem>>, vector<1x32xf32>
    %386 = vector.broadcast %385 : vector<1x32xf32> to vector<2x32xf32>
    %387 = arith.addf %384, %386 : vector<2x32xf32>
    %388 = math.tanh %387 : vector<2x32xf32>
    %c0_189 = arith.constant 0 : index
    %c0_190 = arith.constant 0 : index
    %389 = vector.load %arg26[%c0_189, %c0_190] : memref<32x512xf32, #tpu.memory_space<vmem>>, vector<32x512xf32>
    %cst_191 = arith.constant dense<0.000000e+00> : vector<2x512xf32>
    %390 = tpu.matmul %388, %389, %cst_191 {dimension_numbers = #tpu.dot_dimension_numbers<[1], [0], [0], [1], [0, 0, 1, 1], [], []>} : vector<2x32xf32>, vector<32x512xf32>, vector<2x512xf32> -> vector<2x512xf32>
    %c0_192 = arith.constant 0 : index
    %c0_193 = arith.constant 0 : index
    %391 = vector.load %arg27[%c0_192, %c0_193] : memref<1x512xf32, #tpu.memory_space<vmem>>, vector<1x512xf32>
    %392 = vector.broadcast %391 : vector<1x512xf32> to vector<2x512xf32>
    %393 = arith.addf %390, %392 : vector<2x512xf32>
    %cst_194 = arith.constant 0.000000e+00 : f32
    %394 = vector.broadcast %cst_194 : f32 to vector<2x512xf32>
    %395 = arith.maximumf %393, %394 : vector<2x512xf32>
    %c0_195 = arith.constant 0 : index
    %c0_196 = arith.constant 0 : index
    %396 = vector.load %arg28[%c0_195, %c0_196] : memref<512x10xf32, #tpu.memory_space<vmem>>, vector<512x10xf32>
    %cst_197 = arith.constant dense<0.000000e+00> : vector<2x10xf32>
    %397 = tpu.matmul %395, %396, %cst_197 {dimension_numbers = #tpu.dot_dimension_numbers<[1], [0], [0], [1], [0, 0, 1, 1], [], []>} : vector<2x512xf32>, vector<512x10xf32>, vector<2x10xf32> -> vector<2x10xf32>
    %c0_198 = arith.constant 0 : index
    %c0_199 = arith.constant 0 : index
    %398 = vector.load %arg29[%c0_198, %c0_199] : memref<1x10xf32, #tpu.memory_space<vmem>>, vector<1x10xf32>
    %399 = vector.broadcast %398 : vector<1x10xf32> to vector<2x10xf32>
    %400 = arith.addf %397, %399 : vector<2x10xf32>
    %c0_200 = arith.constant 0 : index
    %c0_201 = arith.constant 0 : index
    %401 = vector.load %arg30[%c0_200, %c0_201] : memref<2x10xf32, #tpu.memory_space<vmem>>, vector<2x10xf32>
    tpu.vector_store %arg30[%c0_200, %c0_201], %400 {strides = array<i32>} : memref<2x10xf32, #tpu.memory_space<vmem>>, vector<2x10xf32>,
    return
  }
}

</mosaic_0001>

<llo_original>
// kernel: vit_mae_classification_forward.1
$region0: #{vit_mae_classification_forward.1}
  #allocation0 [shape = 'u32[]', space=smem, size = 0x4, offset = 0x4, fixed_abs, tag = 'smem constant byte address 0x4 - core index']
  #allocation1 [shape = 'u32[72,128]{1,0:T(1,128)}', space=vmem, size = 0x9000, scoped, tag = 'internal scratch']
  %s0 = inlined_call_operand.smem [shape: u32[31], index: -1, kind: input, shape index: {}]
  %s1 = sld [smem:[%s0]]
  %s2 = scalar_lea.smem %s0, 1
  %s3 = sld [smem:[%s2]]
  %s4 = scalar_lea.smem %s0, 2
  %s5 = sld [smem:[%s4]]
  %s6 = scalar_lea.smem %s0, 3
  %s7 = sld [smem:[%s6]]
  %s8 = scalar_lea.smem %s0, 4
  %s9 = sld [smem:[%s8]]
  %s10 = scalar_lea.smem %s0, 5
  %s11 = sld [smem:[%s10]]
  %s12 = scalar_lea.smem %s0, 6
  %s13 = sld [smem:[%s12]]
  %s14 = scalar_lea.smem %s0, 7
  %s15 = sld [smem:[%s14]]
  %s16 = scalar_lea.smem %s0, 8
  %s17 = sld [smem:[%s16]]
  %s18 = scalar_lea.smem %s0, 9
  %s19 = sld [smem:[%s18]]
  %s20 = scalar_lea.smem %s0, 10
  %s21 = sld [smem:[%s20]]
  %s22 = scalar_lea.smem %s0, 11
  %s23 = sld [smem:[%s22]]
  %s24 = scalar_lea.smem %s0, 12
  %s25 = sld [smem:[%s24]]
  %s26 = scalar_lea.smem %s0, 13
  %s27 = sld [smem:[%s26]]
  %s28 = scalar_lea.smem %s0, 14
  %s29 = sld [smem:[%s28]]
  %s30 = scalar_lea.smem %s0, 15
  %s31 = sld [smem:[%s30]]
  %s32 = scalar_lea.smem %s0, 16
  %s33 = sld [smem:[%s32]]
  %s34 = scalar_lea.smem %s0, 17
  %s35 = sld [smem:[%s34]]
  %s36 = scalar_lea.smem %s0, 18
  %s37 = sld [smem:[%s36]]
  %s38 = scalar_lea.smem %s0, 19
  %s39 = sld [smem:[%s38]]
  %s40 = scalar_lea.smem %s0, 20
  %s41 = sld [smem:[%s40]]
  %s42 = scalar_lea.smem %s0, 21
  %s43 = sld [smem:[%s42]]
  %s44 = scalar_lea.smem %s0, 22
  %s45 = sld [smem:[%s44]]
  %s46 = scalar_lea.smem %s0, 23
  %s47 = sld [smem:[%s46]]
  %s48 = scalar_lea.smem %s0, 24
  %s49 = sld [smem:[%s48]]
  %s50 = scalar_lea.smem %s0, 25
  %s51 = sld [smem:[%s50]]
  %s52 = scalar_lea.smem %s0, 26
  %s53 = sld [smem:[%s52]]
  %s54 = scalar_lea.smem %s0, 27
  %s55 = sld [smem:[%s54]]
  %s56 = scalar_lea.smem %s0, 28
  %s57 = sld [smem:[%s56]]
  %s58 = scalar_lea.smem %s0, 29
  %s59 = sld [smem:[%s58]]
  %s60 = scalar_lea.smem %s0, 30
  %s61 = sld [smem:[%s60]]
  %s62 = sld [smem:[#allocation0]]
  $region130: #{vit_mae_classification_forward.1} parent=0
    _
  %s64 = ssub.s32 1, %s62
  %s65 = scalar_select 0, %s64, %s62
  $region1: #{vit_mae_classification_forward.1} parent=0
    #allocation2 [shape = 'u8[1024]{0}', space=vmem, size = 0x400, scoped, tag = 'output window, operand 0, single buffered']
    #allocation3 [shape = 's32[1]{0}', space=sflag, size = 0x4, scoped, tag = 'scoped memory for vit_mae_classification_forward.1']
    %66 = vsyncpa [#allocation3], 0
    // Predicated region
    $region2: #{vit_mae_classification_forward.1} parent=1 // pred_check
      _
    $region3: #{vit_mae_classification_forward.1} parent=1 // pred_check_branch
      %68 = sbr.rel (0) target = $region5
    $region4: #{vit_mae_classification_forward.1} parent=1 // pred_region
      _
    $region5: #{vit_mae_classification_forward.1} parent=1 // pred_fallthru
      _
    // Predicated region
    $region6: #{vit_mae_classification_forward.1} parent=1 // pred_check
      _
    $region7: #{vit_mae_classification_forward.1} parent=1 // pred_check_branch
      %70 = sbr.rel (0) target = $region9
    $region8: #{vit_mae_classification_forward.1} parent=1 // pred_region
      _
    $region9: #{vit_mae_classification_forward.1} parent=1 // pred_fallthru
      _
    // Predicated region
    $region10: #{vit_mae_classification_forward.1} parent=1 // pred_check
      _
    $region11: #{vit_mae_classification_forward.1} parent=1 // pred_check_branch
      %72 = sbr.rel (0) target = $region13
    $region12: #{vit_mae_classification_forward.1} parent=1 // pred_region
      _
    $region13: #{vit_mae_classification_forward.1} parent=1 // pred_fallthru
      _
    // Predicated region
    $region14: #{vit_mae_classification_forward.1} parent=1 // pred_check
      _
    $region15: #{vit_mae_classification_forward.1} parent=1 // pred_check_branch
      %74 = sbr.rel (0) target = $region17
    $region16: #{vit_mae_classification_forward.1} parent=1 // pred_region
      _
    $region17: #{vit_mae_classification_forward.1} parent=1 // pred_fallthru
      _
    // Predicated region
    $region18: #{vit_mae_classification_forward.1} parent=1 // pred_check
      _
    $region19: #{vit_mae_classification_forward.1} parent=1 // pred_check_branch
      %76 = sbr.rel (0) target = $region21
    $region20: #{vit_mae_classification_forward.1} parent=1 // pred_region
      _
    $region21: #{vit_mae_classification_forward.1} parent=1 // pred_fallthru
      _
    // Predicated region
    $region22: #{vit_mae_classification_forward.1} parent=1 // pred_check
      _
    $region23: #{vit_mae_classification_forward.1} parent=1 // pred_check_branch
      %78 = sbr.rel (0) target = $region25
    $region24: #{vit_mae_classification_forward.1} parent=1 // pred_region
      _
    $region25: #{vit_mae_classification_forward.1} parent=1 // pred_fallthru
      _
    // Predicated region
    $region26: #{vit_mae_classification_forward.1} parent=1 // pred_check
      _
    $region27: #{vit_mae_classification_forward.1} parent=1 // pred_check_branch
      %80 = sbr.rel (0) target = $region29
    $region28: #{vit_mae_classification_forward.1} parent=1 // pred_region
      _
    $region29: #{vit_mae_classification_forward.1} parent=1 // pred_fallthru
      _
    // Predicated region
    $region30: #{vit_mae_classification_forward.1} parent=1 // pred_check
      _
    $region31: #{vit_mae_classification_forward.1} parent=1 // pred_check_branch
      %82 = sbr.rel (0) target = $region33
    $region32: #{vit_mae_classification_forward.1} parent=1 // pred_region
      _
    $region33: #{vit_mae_classification_forward.1} parent=1 // pred_fallthru
      _
    // Predicated region
    $region34: #{vit_mae_classification_forward.1} parent=1 // pred_check
      _
    $region35: #{vit_mae_classification_forward.1} parent=1 // pred_check_branch
      %84 = sbr.rel (0) target = $region37
    $region36: #{vit_mae_classification_forward.1} parent=1 // pred_region
      _
    $region37: #{vit_mae_classification_forward.1} parent=1 // pred_fallthru
      _
    // Predicated region
    $region38: #{vit_mae_classification_forward.1} parent=1 // pred_check
      _
    $region39: #{vit_mae_classification_forward.1} parent=1 // pred_check_branch
      %86 = sbr.rel (0) target = $region41
    $region40: #{vit_mae_classification_forward.1} parent=1 // pred_region
      _
    $region41: #{vit_mae_classification_forward.1} parent=1 // pred_fallthru
      _
    // Predicated region
    $region42: #{vit_mae_classification_forward.1} parent=1 // pred_check
      _
    $region43: #{vit_mae_classification_forward.1} parent=1 // pred_check_branch
      %88 = sbr.rel (0) target = $region45
    $region44: #{vit_mae_classification_forward.1} parent=1 // pred_region
      _
    $region45: #{vit_mae_classification_forward.1} parent=1 // pred_fallthru
      _
    // Predicated region
    $region46: #{vit_mae_classification_forward.1} parent=1 // pred_check
      _
    $region47: #{vit_mae_classification_forward.1} parent=1 // pred_check_branch
      %90 = sbr.rel (0) target = $region49
    $region48: #{vit_mae_classification_forward.1} parent=1 // pred_region
      _
    $region49: #{vit_mae_classification_forward.1} parent=1 // pred_fallthru
      _
    // Predicated region
    $region50: #{vit_mae_classification_forward.1} parent=1 // pred_check
      _
    $region51: #{vit_mae_classification_forward.1} parent=1 // pred_check_branch
      %92 = sbr.rel (0) target = $region53
    $region52: #{vit_mae_classification_forward.1} parent=1 // pred_region
      _
    $region53: #{vit_mae_classification_forward.1} parent=1 // pred_fallthru
      _
    // Predicated region
    $region54: #{vit_mae_classification_forward.1} parent=1 // pred_check
      _
    $region55: #{vit_mae_classification_forward.1} parent=1 // pred_check_branch
      %94 = sbr.rel (0) target = $region57
    $region56: #{vit_mae_classification_forward.1} parent=1 // pred_region
      _
    $region57: #{vit_mae_classification_forward.1} parent=1 // pred_fallthru
      _
    // Predicated region
    $region58: #{vit_mae_classification_forward.1} parent=1 // pred_check
      _
    $region59: #{vit_mae_classification_forward.1} parent=1 // pred_check_branch
      %96 = sbr.rel (0) target = $region61
    $region60: #{vit_mae_classification_forward.1} parent=1 // pred_region
      _
    $region61: #{vit_mae_classification_forward.1} parent=1 // pred_fallthru
      _
    // Predicated region
    $region62: #{vit_mae_classification_forward.1} parent=1 // pred_check
      _
    $region63: #{vit_mae_classification_forward.1} parent=1 // pred_check_branch
      %98 = sbr.rel (0) target = $region65
    $region64: #{vit_mae_classification_forward.1} parent=1 // pred_region
      _
    $region65: #{vit_mae_classification_forward.1} parent=1 // pred_fallthru
      _
    // Predicated region
    $region66: #{vit_mae_classification_forward.1} parent=1 // pred_check
      _
    $region67: #{vit_mae_classification_forward.1} parent=1 // pred_check_branch
      %100 = sbr.rel (0) target = $region69
    $region68: #{vit_mae_classification_forward.1} parent=1 // pred_region
      _
    $region69: #{vit_mae_classification_forward.1} parent=1 // pred_fallthru
      _
    // Predicated region
    $region70: #{vit_mae_classification_forward.1} parent=1 // pred_check
      _
    $region71: #{vit_mae_classification_forward.1} parent=1 // pred_check_branch
      %102 = sbr.rel (0) target = $region73
    $region72: #{vit_mae_classification_forward.1} parent=1 // pred_region
      _
    $region73: #{vit_mae_classification_forward.1} parent=1 // pred_fallthru
      _
    // Predicated region
    $region74: #{vit_mae_classification_forward.1} parent=1 // pred_check
      _
    $region75: #{vit_mae_classification_forward.1} parent=1 // pred_check_branch
      %104 = sbr.rel (0) target = $region77
    $region76: #{vit_mae_classification_forward.1} parent=1 // pred_region
      _
    $region77: #{vit_mae_classification_forward.1} parent=1 // pred_fallthru
      _
    // Predicated region
    $region78: #{vit_mae_classification_forward.1} parent=1 // pred_check
      _
    $region79: #{vit_mae_classification_forward.1} parent=1 // pred_check_branch
      %106 = sbr.rel (0) target = $region81
    $region80: #{vit_mae_classification_forward.1} parent=1 // pred_region
      _
    $region81: #{vit_mae_classification_forward.1} parent=1 // pred_fallthru
      _
    // Predicated region
    $region82: #{vit_mae_classification_forward.1} parent=1 // pred_check
      _
    $region83: #{vit_mae_classification_forward.1} parent=1 // pred_check_branch
      %108 = sbr.rel (0) target = $region85
    $region84: #{vit_mae_classification_forward.1} parent=1 // pred_region
      _
    $region85: #{vit_mae_classification_forward.1} parent=1 // pred_fallthru
      _
    // Predicated region
    $region86: #{vit_mae_classification_forward.1} parent=1 // pred_check
      _
    $region87: #{vit_mae_classification_forward.1} parent=1 // pred_check_branch
      %110 = sbr.rel (0) target = $region89
    $region88: #{vit_mae_classification_forward.1} parent=1 // pred_region
      _
    $region89: #{vit_mae_classification_forward.1} parent=1 // pred_fallthru
      _
    // Predicated region
    $region90: #{vit_mae_classification_forward.1} parent=1 // pred_check
      _
    $region91: #{vit_mae_classification_forward.1} parent=1 // pred_check_branch
      %112 = sbr.rel (0) target = $region93
    $region92: #{vit_mae_classification_forward.1} parent=1 // pred_region
      _
    $region93: #{vit_mae_classification_forward.1} parent=1 // pred_fallthru
      _
    // Predicated region
    $region94: #{vit_mae_classification_forward.1} parent=1 // pred_check
      _
    $region95: #{vit_mae_classification_forward.1} parent=1 // pred_check_branch
      %114 = sbr.rel (0) target = $region97
    $region96: #{vit_mae_classification_forward.1} parent=1 // pred_region
      _
    $region97: #{vit_mae_classification_forward.1} parent=1 // pred_fallthru
      _
    // Predicated region
    $region98: #{vit_mae_classification_forward.1} parent=1 // pred_check
      _
    $region99: #{vit_mae_classification_forward.1} parent=1 // pred_check_branch
      %116 = sbr.rel (0) target = $region101
    $region100: #{vit_mae_classification_forward.1} parent=1 // pred_region
      _
    $region101: #{vit_mae_classification_forward.1} parent=1 // pred_fallthru
      _
    // Predicated region
    $region102: #{vit_mae_classification_forward.1} parent=1 // pred_check
      _
    $region103: #{vit_mae_classification_forward.1} parent=1 // pred_check_branch
      %118 = sbr.rel (0) target = $region105
    $region104: #{vit_mae_classification_forward.1} parent=1 // pred_region
      _
    $region105: #{vit_mae_classification_forward.1} parent=1 // pred_fallthru
      _
    // Predicated region
    $region106: #{vit_mae_classification_forward.1} parent=1 // pred_check
      _
    $region107: #{vit_mae_classification_forward.1} parent=1 // pred_check_branch
      %120 = sbr.rel (0) target = $region109
    $region108: #{vit_mae_classification_forward.1} parent=1 // pred_region
      _
    $region109: #{vit_mae_classification_forward.1} parent=1 // pred_fallthru
      _
    // Predicated region
    $region110: #{vit_mae_classification_forward.1} parent=1 // pred_check
      _
    $region111: #{vit_mae_classification_forward.1} parent=1 // pred_check_branch
      %122 = sbr.rel (0) target = $region113
    $region112: #{vit_mae_classification_forward.1} parent=1 // pred_region
      _
    $region113: #{vit_mae_classification_forward.1} parent=1 // pred_fallthru
      _
    // Predicated region
    $region114: #{vit_mae_classification_forward.1} parent=1 // pred_check
      _
    $region115: #{vit_mae_classification_forward.1} parent=1 // pred_check_branch
      %124 = sbr.rel (0) target = $region117
    $region116: #{vit_mae_classification_forward.1} parent=1 // pred_region
      _
    $region117: #{vit_mae_classification_forward.1} parent=1 // pred_fallthru
      _
    // Predicated region
    $region118: #{vit_mae_classification_forward.1} parent=1 // pred_check
      _
    $region119: #{vit_mae_classification_forward.1} parent=1 // pred_check_branch
      %126 = sbr.rel (0) target = $region121
    $region120: #{vit_mae_classification_forward.1} parent=1 // pred_region
      _
    $region121: #{vit_mae_classification_forward.1} parent=1 // pred_fallthru
      _
    %v127 = vld [vmem:[%s1] sm:$0xff]
    %v128 = vld [vmem:[%s1 + $0x8] sm:$0xff]
    %v129 = vld [vmem:[%s1 + $0x10] sm:$0xff]
    %v130 = vld [vmem:[%s1 + $0x18] sm:$0xff]
    %v131 = vld [vmem:[%s13] sm:$0xff]
    %v132 = vld [vmem:[%s13 + $0x8] sm:$0xff]
    %v133 = vld [vmem:[%s13 + $0x10] sm:$0xff]
    %v134 = vld [vmem:[%s13 + $0x18] sm:$0xff]
    %v135 = vld [vmem:[%s13 + $0x20] sm:$0xff]
    %v136 = vld [vmem:[%s13 + $0x28] sm:$0xff]
    %v137 = vld [vmem:[%s15] sm:$0x1]
    %v139 = vperm.slane %v137, 0
    %vm141 = vcmask 392192
    %v143 = vsel %vm141, %v127, 0
    %v146 = vsel %vm141, %v128, 0
    %v149 = vsel %vm141, %v129, 0
    %v152 = vsel %vm141, %v130, 0
    %154 = vmatpush.msra.mxu0 0.0
    %155 = vmatpush.msra.mxu0 0.0
    %156 = vmatpush.msra.mxu0 0.0
    %157 = vmatpush.msra.mxu0 0.0
    %158 = vmatpush.msra.mxu0 0.0
    %159 = vmatpush.msra.mxu0 0.0
    %160 = vmatpush.msra.mxu0 0.0
    %161 = vmatpush.msra.mxu0 0.0
    %162 = vmatpush.msra.mxu0 0.0
    %163 = vmatpush.msra.mxu0 0.0
    %164 = vmatpush.msra.mxu0 %v136
    %165 = vmatpush.msra.mxu0 %v135
    %166 = vmatpush.msra.mxu0 %v134
    %167 = vmatpush.msra.mxu0 %v133
    %168 = vmatpush.msra.mxu0 %v132
    %169 = vmatpush.msra.mxu0 %v131
    %170 = vmatmul.f32.gmra.mxu0 %v143
    %v171 = vpop.f32.mrf.mxu0
    %v172 = vadd.f32 %v139, %v171
    %173 = vmatmul.f32.gmra.mxu0 %v146
    %v174 = vpop.f32.mrf.mxu0
    %v175 = vadd.f32 %v139, %v174
    %176 = vmatmul.f32.gmra.mxu0 %v149
    %v177 = vpop.f32.mrf.mxu0
    %v178 = vadd.f32 %v139, %v177
    %179 = vmatmul.f32.gmra.mxu0 %v152
    %v180 = vpop.f32.mrf.mxu0
    %v181 = vadd.f32 %v139, %v180
    %182 = vdwg.mxu0
    %v183 = vld [vmem:[%s3] sm:$0xff]
    %v184 = vld [vmem:[%s3 + $0x8] sm:$0xff]
    %v185 = vld [vmem:[%s3 + $0x10] sm:$0xff]
    %v186 = vld [vmem:[%s3 + $0x18] sm:$0xff]
    %v187 = vld [vmem:[%s3 + $0x20] sm:$0x3]
    %v188 = vld [vmem:[%s17] sm:$0x1]
    %190 = vset.pattern.permute.xlu0 0
    %191 = vperm.xlu0 %190, %v183
    %v192 = vpop.permute.xlu0 %191
    %195 = vset.pattern.permute.xlu0 0
    %196 = vperm.xlu0 %195, %v184
    %v197 = vpop.permute.xlu0 %196
    %200 = vset.pattern.permute.xlu0 0
    %201 = vperm.xlu0 %200, %v185
    %v202 = vpop.permute.xlu0 %201
    %205 = vset.pattern.permute.xlu0 0
    %206 = vperm.xlu0 %205, %v186
    %v207 = vpop.permute.xlu0 %206
    %210 = vset.pattern.permute.xlu0 0
    %211 = vperm.xlu0 %210, %v187
    %v212 = vpop.permute.xlu0 %211
    %v215 = vperm.slane %v188, 0
    %v217 = vmul.f32 %v192, %v215
    %v218 = vmul.f32 %v197, %v215
    %v219 = vmul.f32 %v202, %v215
    %v220 = vmul.f32 %v207, %v215
    %v221 = vmul.f32 %v212, %v215
    %v222 = vld [vmem:[%s5] sm:$0xff]
    %v223 = vld [vmem:[%s5 + $0x8] sm:$0xff]
    %v224 = vld [vmem:[%s5 + $0x10] sm:$0xff]
    %v225 = vld [vmem:[%s5 + $0x18] sm:$0xff]
    %v226 = vld [vmem:[%s5 + $0x20] sm:$0x3]
    %vm227 = vcmask 261120
    %v229 = vsel %vm227, %v222, 0
    %v232 = vsel %vm227, %v223, 0
    %v235 = vsel %vm227, %v224, 0
    %v238 = vsel %vm227, %v225, 0
    %v241 = vsel %vm227, %v226, 0
    %243 = vmatpush.msra.mxu0 0.0
    %244 = vmatpush.msra.mxu0 0.0
    %245 = vmatpush.msra.mxu0 0.0
    %246 = vmatpush.msra.mxu0 0.0
    %247 = vmatpush.msra.mxu0 0.0
    %248 = vmatpush.msra.mxu0 0.0
    %249 = vmatpush.msra.mxu0 0.0
    %250 = vmatpush.msra.mxu0 0.0
    %251 = vmatpush.msra.mxu0 0.0
    %252 = vmatpush.msra.mxu0 0.0
    %253 = vmatpush.msra.mxu0 0.0
    %254 = vmatpush.msra.mxu0 0.0
    %255 = vmatpush.msra.mxu0 %v181
    %256 = vmatpush.msra.mxu0 %v178
    %257 = vmatpush.msra.mxu0 %v175
    %258 = vmatpush.msra.mxu0 %v172
    %259 = vmatmul.f32.gmra.mxu0 %v229
    %v260 = vpop.f32.mrf.mxu0
    %v261 = vadd.f32 0.0, %v260
    %262 = vmatmul.f32.gmra.mxu0 %v232
    %v263 = vpop.f32.mrf.mxu0
    %v264 = vadd.f32 0.0, %v263
    %265 = vmatmul.f32.gmra.mxu0 %v235
    %v266 = vpop.f32.mrf.mxu0
    %v267 = vadd.f32 0.0, %v266
    %268 = vmatmul.f32.gmra.mxu0 %v238
    %v269 = vpop.f32.mrf.mxu0
    %v270 = vadd.f32 0.0, %v269
    %271 = vmatmul.f32.gmra.mxu0 %v241
    %v272 = vpop.f32.mrf.mxu0
    %v273 = vadd.f32 0.0, %v272
    %274 = vdwg.mxu0
    %v275 = vadd.f32 %v217, %v261
    %v276 = vadd.f32 %v218, %v264
    %v277 = vadd.f32 %v219, %v267
    %v278 = vadd.f32 %v220, %v270
    %v279 = vadd.f32 %v221, %v273
    %v280 = vld [vmem:[%s7] sm:$0xff]
    %v281 = vld [vmem:[%s7 + $0x8] sm:$0xff]
    %v282 = vld [vmem:[%s7 + $0x10] sm:$0xff]
    %v283 = vld [vmem:[%s7 + $0x18] sm:$0xff]
    %v284 = vld [vmem:[%s7 + $0x20] sm:$0x3]
    %v285 = vld [vmem:[%s19] sm:$0xff]
    %v286 = vld [vmem:[%s19 + $0x8] sm:$0xff]
    %vm287 = vcmask 130048
    %v289 = vsel %vm287, %v280, 0
    %v292 = vsel %vm287, %v281, 0
    %v295 = vsel %vm287, %v282, 0
    %v298 = vsel %vm287, %v283, 0
    %v301 = vsel %vm287, %v284, 0
    %303 = vmatpush.msra.mxu0 0.0
    %304 = vmatpush.msra.mxu0 0.0
    %305 = vmatpush.msra.mxu0 0.0
    %306 = vmatpush.msra.mxu0 0.0
    %307 = vmatpush.msra.mxu0 0.0
    %308 = vmatpush.msra.mxu0 0.0
    %309 = vmatpush.msra.mxu0 0.0
    %310 = vmatpush.msra.mxu0 0.0
    %311 = vmatpush.msra.mxu0 0.0
    %312 = vmatpush.msra.mxu0 0.0
    %313 = vmatpush.msra.mxu0 0.0
    %314 = vmatpush.msra.mxu0 0.0
    %315 = vmatpush.msra.mxu0 0.0
    %316 = vmatpush.msra.mxu0 0.0
    %317 = vmatpush.msra.mxu0 %v286
    %318 = vmatpush.msra.mxu0 %v285
    %319 = vmatmul.f32.gmra.mxu0 %v289
    %v320 = vpop.f32.mrf.mxu0
    %v321 = vadd.f32 0.0, %v320
    %322 = vmatmul.f32.gmra.mxu0 %v292
    %v323 = vpop.f32.mrf.mxu0
    %v324 = vadd.f32 0.0, %v323
    %325 = vmatmul.f32.gmra.mxu0 %v295
    %v326 = vpop.f32.mrf.mxu0
    %v327 = vadd.f32 0.0, %v326
    %328 = vmatmul.f32.gmra.mxu0 %v298
    %v329 = vpop.f32.mrf.mxu0
    %v330 = vadd.f32 0.0, %v329
    %331 = vmatmul.f32.gmra.mxu0 %v301
    %v332 = vpop.f32.mrf.mxu0
    %v333 = vadd.f32 0.0, %v332
    %334 = vdwg.mxu0
    %v335 = vadd.f32 %v275, %v321
    %v336 = vadd.f32 %v276, %v324
    %v337 = vadd.f32 %v277, %v327
    %v338 = vadd.f32 %v278, %v330
    %v339 = vadd.f32 %v279, %v333
    %v340 = vld [vmem:[%s9] sm:$0xff]
    %v341 = vld [vmem:[%s9 + $0x8] sm:$0xff]
    %v342 = vld [vmem:[%s9 + $0x10] sm:$0xff]
    %v343 = vld [vmem:[%s9 + $0x18] sm:$0xff]
    %v344 = vld [vmem:[%s9 + $0x20] sm:$0x3]
    %v345 = vld [vmem:[%s21] sm:$0x1]
    %v346 = vld [vmem:[%s23] sm:$0x1]
    %v347 = vsel %vm227, %v335, 0.0
    %348 = vadd.xlane.f32.xlu0 %v347
    %v349 = vpop.xlane.xlu0 %348
    %v350 = vsel %vm227, %v336, 0.0
    %351 = vadd.xlane.f32.xlu0 %v350
    %v352 = vpop.xlane.xlu0 %351
    %v353 = vsel %vm227, %v337, 0.0
    %354 = vadd.xlane.f32.xlu0 %v353
    %v355 = vpop.xlane.xlu0 %354
    %v356 = vsel %vm227, %v338, 0.0
    %357 = vadd.xlane.f32.xlu0 %v356
    %v358 = vpop.xlane.xlu0 %357
    %vm359 = vcmask 254976
    %v360 = vsel %vm359, %v339, 0.0
    %361 = vadd.xlane.f32.xlu0 %v360
    %v362 = vpop.xlane.xlu0 %361
    %v363 = vrcp.pop 32.0
    %v364 = vmul.f32 32.0, %v363
    %v365 = vsub.f32 1.0, %v364
    %v366 = vmul.f32 %v363, %v365
    %v367 = vadd.f32 %v363, %v366
    %vm368 = vweird.f32 %v363
    %v369 = vsel %vm368, %v363, %v367
    %v370 = vmul.f32 %v349, %v369
    %v371 = vmul.f32 %v352, %v369
    %v372 = vmul.f32 %v355, %v369
    %v373 = vmul.f32 %v358, %v369
    %v374 = vmul.f32 %v362, %v369
    %v375 = vsub.f32 %v335, %v370
    %v376 = vsub.f32 %v336, %v371
    %v377 = vsub.f32 %v337, %v372
    %v378 = vsub.f32 %v338, %v373
    %v379 = vsub.f32 %v339, %v374
    %v380 = vmul.f32 %v375, %v375
    %v381 = vmul.f32 %v376, %v376
    %v382 = vmul.f32 %v377, %v377
    %v383 = vmul.f32 %v378, %v378
    %v384 = vmul.f32 %v379, %v379
    %v385 = vsel %vm227, %v380, 0.0
    %386 = vadd.xlane.f32.xlu0 %v385
    %v387 = vpop.xlane.xlu0 %386
    %v388 = vsel %vm227, %v381, 0.0
    %389 = vadd.xlane.f32.xlu0 %v388
    %v390 = vpop.xlane.xlu0 %389
    %v391 = vsel %vm227, %v382, 0.0
    %392 = vadd.xlane.f32.xlu0 %v391
    %v393 = vpop.xlane.xlu0 %392
    %v394 = vsel %vm227, %v383, 0.0
    %395 = vadd.xlane.f32.xlu0 %v394
    %v396 = vpop.xlane.xlu0 %395
    %v397 = vsel %vm359, %v384, 0.0
    %398 = vadd.xlane.f32.xlu0 %v397
    %v399 = vpop.xlane.xlu0 %398
    %v400 = vmul.f32 %v387, %v369
    %v401 = vmul.f32 %v390, %v369
    %v402 = vmul.f32 %v393, %v369
    %v403 = vmul.f32 %v396, %v369
    %v404 = vmul.f32 %v399, %v369
    %v405 = vadd.f32 %v400, 1e-12
    %v406 = vadd.f32 %v401, 1e-12
    %v407 = vadd.f32 %v402, 1e-12
    %v408 = vadd.f32 %v403, 1e-12
    %v409 = vadd.f32 %v404, 1e-12
    %v410 = vrsqrt.pop %v405
    %v411 = vmul.f32 %v410, %v405
    %v412 = vmul.f32 %v411, %v410
    %v413 = vmul.f32 0.5, %v412
    %v414 = vsub.f32 1.5, %v413
    %v415 = vmul.f32 %v410, %v414
    %vm416 = vweird.f32 %v405
    %vm417 = vweird.f32 %v410
    %vm418 = vmor %vm416, %vm417
    %v419 = vsel %vm418, %v410, %v415
    %v420 = vrsqrt.pop %v406
    %v421 = vmul.f32 %v420, %v406
    %v422 = vmul.f32 %v421, %v420
    %v423 = vmul.f32 0.5, %v422
    %v424 = vsub.f32 1.5, %v423
    %v425 = vmul.f32 %v420, %v424
    %vm426 = vweird.f32 %v406
    %vm427 = vweird.f32 %v420
    %vm428 = vmor %vm426, %vm427
    %v429 = vsel %vm428, %v420, %v425
    %v430 = vrsqrt.pop %v407
    %v431 = vmul.f32 %v430, %v407
    %v432 = vmul.f32 %v431, %v430
    %v433 = vmul.f32 0.5, %v432
    %v434 = vsub.f32 1.5, %v433
    %v435 = vmul.f32 %v430, %v434
    %vm436 = vweird.f32 %v407
    %vm437 = vweird.f32 %v430
    %vm438 = vmor %vm436, %vm437
    %v439 = vsel %vm438, %v430, %v435
    %v440 = vrsqrt.pop %v408
    %v441 = vmul.f32 %v440, %v408
    %v442 = vmul.f32 %v441, %v440
    %v443 = vmul.f32 0.5, %v442
    %v444 = vsub.f32 1.5, %v443
    %v445 = vmul.f32 %v440, %v444
    %vm446 = vweird.f32 %v408
    %vm447 = vweird.f32 %v440
    %vm448 = vmor %vm446, %vm447
    %v449 = vsel %vm448, %v440, %v445
    %v450 = vrsqrt.pop %v409
    %v451 = vmul.f32 %v450, %v409
    %v452 = vmul.f32 %v451, %v450
    %v453 = vmul.f32 0.5, %v452
    %v454 = vsub.f32 1.5, %v453
    %v455 = vmul.f32 %v450, %v454
    %vm456 = vweird.f32 %v409
    %vm457 = vweird.f32 %v450
    %vm458 = vmor %vm456, %vm457
    %v459 = vsel %vm458, %v450, %v455
    %v460 = vmul.f32 %v375, %v419
    %v461 = vmul.f32 %v376, %v429
    %v462 = vmul.f32 %v377, %v439
    %v463 = vmul.f32 %v378, %v449
    %v464 = vmul.f32 %v379, %v459
    %v466 = vperm.slane %v345, 0
    %v468 = vmul.f32 %v460, %v466
    %v469 = vmul.f32 %v461, %v466
    %v470 = vmul.f32 %v462, %v466
    %v471 = vmul.f32 %v463, %v466
    %v472 = vmul.f32 %v464, %v466
    %v474 = vperm.slane %v346, 0
    %v476 = vadd.f32 %v468, %v474
    %v477 = vadd.f32 %v469, %v474
    %v478 = vadd.f32 %v470, %v474
    %v479 = vadd.f32 %v471, %v474
    %v480 = vadd.f32 %v472, %v474
    %v481 = vld [vmem:[%s25] sm:$0xff]
    %v482 = vld [vmem:[%s25 + $0x8] sm:$0xff]
    %v483 = vld [vmem:[%s25 + $0x10] sm:$0xff]
    %v484 = vld [vmem:[%s25 + $0x18] sm:$0xff]
    %v485 = vld [vmem:[%s27] sm:$0x1]
    %v487 = vperm.slane %v485, 0
    %v490 = vsel %vm227, %v476, 0
    %v493 = vsel %vm227, %v477, 0
    %v496 = vsel %vm227, %v478, 0
    %v499 = vsel %vm227, %v479, 0
    %v502 = vsel %vm227, %v480, 0
    %504 = vmatpush.msra.mxu0 0.0
    %505 = vmatpush.msra.mxu0 0.0
    %506 = vmatpush.msra.mxu0 0.0
    %507 = vmatpush.msra.mxu0 0.0
    %508 = vmatpush.msra.mxu0 0.0
    %509 = vmatpush.msra.mxu0 0.0
    %510 = vmatpush.msra.mxu0 0.0
    %511 = vmatpush.msra.mxu0 0.0
    %512 = vmatpush.msra.mxu0 0.0
    %513 = vmatpush.msra.mxu0 0.0
    %514 = vmatpush.msra.mxu0 0.0
    %515 = vmatpush.msra.mxu0 0.0
    %516 = vmatpush.msra.mxu0 %v484
    %517 = vmatpush.msra.mxu0 %v483
    %518 = vmatpush.msra.mxu0 %v482
    %519 = vmatpush.msra.mxu0 %v481
    %520 = vmatmul.f32.gmra.mxu0 %v490
    %v521 = vpop.f32.mrf.mxu0
    %v522 = vadd.f32 %v487, %v521
    %523 = vmatmul.f32.gmra.mxu0 %v493
    %v524 = vpop.f32.mrf.mxu0
    %v525 = vadd.f32 %v487, %v524
    %526 = vmatmul.f32.gmra.mxu0 %v496
    %v527 = vpop.f32.mrf.mxu0
    %v528 = vadd.f32 %v487, %v527
    %529 = vmatmul.f32.gmra.mxu0 %v499
    %v530 = vpop.f32.mrf.mxu0
    %v531 = vadd.f32 %v487, %v530
    %532 = vmatmul.f32.gmra.mxu0 %v502
    %v533 = vpop.f32.mrf.mxu0
    %v534 = vadd.f32 %v487, %v533
    %535 = vdwg.mxu0
    %v536 = vld [vmem:[%s29] sm:$0xff]
    %v537 = vld [vmem:[%s29 + $0x8] sm:$0xff]
    %v538 = vld [vmem:[%s29 + $0x10] sm:$0xff]
    %v539 = vld [vmem:[%s29 + $0x18] sm:$0xff]
    %v540 = vld [vmem:[%s31] sm:$0x1]
    %v542 = vperm.slane %v540, 0
    %v544 = vadd.f32 %v542, 0.0
    %550 = vrot.lane.b32.xlu0 %v522, 96
    %v551 = vpop.permute.xlu0 %550
    %552 = vrot.lane.b32.xlu0 %v525, 96
    %v553 = vpop.permute.xlu0 %552
    %554 = vrot.lane.b32.xlu0 %v528, 96
    %v555 = vpop.permute.xlu0 %554
    %556 = vrot.lane.b32.xlu0 %v531, 96
    %v557 = vpop.permute.xlu0 %556
    %558 = vrot.lane.b32.xlu0 %v534, 96
    %v559 = vpop.permute.xlu0 %558
    %vm560 = vcmask 64512
    %v561 = vsel %vm560, %v522, 0
    %v563 = vsel %vm560, %v525, 0
    %v565 = vsel %vm560, %v528, 0
    %v567 = vsel %vm560, %v531, 0
    %v569 = vsel %vm560, %v534, 0
    %v571 = vsel %vm560, %v551, 0
    %v573 = vsel %vm560, %v553, 0
    %v575 = vsel %vm560, %v555, 0
    %v577 = vsel %vm560, %v557, 0
    %v579 = vsel %vm560, %v559, 0
    %581 = vmatpush.xpose.msra.mxu0 0.0
    %582 = vmatpush.xpose.msra.mxu0 0.0
    %583 = vmatpush.xpose.msra.mxu0 0.0
    %584 = vmatpush.xpose.msra.mxu0 0.0
    %585 = vmatpush.xpose.msra.mxu0 0.0
    %586 = vmatpush.xpose.msra.mxu0 0.0
    %587 = vmatpush.xpose.msra.mxu0 0.0
    %588 = vmatpush.xpose.msra.mxu0 0.0
    %589 = vmatpush.xpose.msra.mxu0 0.0
    %590 = vmatpush.xpose.msra.mxu0 0.0
    %591 = vmatpush.xpose.msra.mxu0 0.0
    %592 = vmatpush.xpose.msra.mxu0 %v579
    %593 = vmatpush.xpose.msra.mxu0 %v577
    %594 = vmatpush.xpose.msra.mxu0 %v575
    %595 = vmatpush.xpose.msra.mxu0 %v573
    %596 = vmatpush.xpose.msra.mxu0 %v571
    %597 = vmatmul.f32.gmra.mxu0 %v561
    %v598 = vpop.f32.mrf.mxu0
    %v599 = vadd.f32 0.0, %v598
    %600 = vmatmul.f32.gmra.mxu0 %v563
    %v601 = vpop.f32.mrf.mxu0
    %v602 = vadd.f32 0.0, %v601
    %603 = vmatmul.f32.gmra.mxu0 %v565
    %v604 = vpop.f32.mrf.mxu0
    %v605 = vadd.f32 0.0, %v604
    %606 = vmatmul.f32.gmra.mxu0 %v567
    %v607 = vpop.f32.mrf.mxu0
    %v608 = vadd.f32 0.0, %v607
    %609 = vmatmul.f32.gmra.mxu0 %v569
    %v610 = vpop.f32.mrf.mxu0
    %v611 = vadd.f32 0.0, %v610
    %612 = vdwg.mxu0
    %v613 = vmul.f32 %v599, 0.35355338
    %v614 = vmul.f32 %v602, 0.35355338
    %v615 = vmul.f32 %v605, 0.35355338
    %v616 = vmul.f32 %v608, 0.35355338
    %v617 = vmul.f32 %v611, 0.35355338
    %v618 = vadd.f32 %v613, %v340
    %v619 = vadd.f32 %v614, %v341
    %v620 = vadd.f32 %v615, %v342
    %v621 = vadd.f32 %v616, %v343
    %v622 = vadd.f32 %v617, %v344
    %vm623 = vcmask 277504
    %v624 = vsel %vm623, %v618, -inf
    %625 = vmax.xlane.f32.xlu0 %v624
    %v626 = vpop.xlane.xlu0 %625
    %v627 = vsel %vm623, %v619, -inf
    %628 = vmax.xlane.f32.xlu0 %v627
    %v629 = vpop.xlane.xlu0 %628
    %v630 = vsel %vm623, %v620, -inf
    %631 = vmax.xlane.f32.xlu0 %v630
    %v632 = vpop.xlane.xlu0 %631
    %v633 = vsel %vm623, %v621, -inf
    %634 = vmax.xlane.f32.xlu0 %v633
    %v635 = vpop.xlane.xlu0 %634
    %vm636 = vcmask 271360
    %v637 = vsel %vm636, %v622, -inf
    %638 = vmax.xlane.f32.xlu0 %v637
    %v639 = vpop.xlane.xlu0 %638
    %v640 = vsub.f32 %v618, %v626
    %v641 = vsub.f32 %v619, %v629
    %v642 = vsub.f32 %v620, %v632
    %v643 = vsub.f32 %v621, %v635
    %v644 = vsub.f32 %v622, %v639
    %v645 = vmul.f32 %v640, 1.442695
    %v646 = vpow.pop %v645
    %v647 = vmul.f32 %v641, 1.442695
    %v648 = vpow.pop %v647
    %v649 = vmul.f32 %v642, 1.442695
    %v650 = vpow.pop %v649
    %v651 = vmul.f32 %v643, 1.442695
    %v652 = vpow.pop %v651
    %v653 = vmul.f32 %v644, 1.442695
    %v654 = vpow.pop %v653
    %v655 = vsel %vm623, %v646, 0.0
    %656 = vadd.xlane.f32.xlu0 %v655
    %v657 = vpop.xlane.xlu0 %656
    %v658 = vsel %vm623, %v648, 0.0
    %659 = vadd.xlane.f32.xlu0 %v658
    %v660 = vpop.xlane.xlu0 %659
    %v661 = vsel %vm623, %v650, 0.0
    %662 = vadd.xlane.f32.xlu0 %v661
    %v663 = vpop.xlane.xlu0 %662
    %v664 = vsel %vm623, %v652, 0.0
    %665 = vadd.xlane.f32.xlu0 %v664
    %v666 = vpop.xlane.xlu0 %665
    %v667 = vsel %vm636, %v654, 0.0
    %668 = vadd.xlane.f32.xlu0 %v667
    %v669 = vpop.xlane.xlu0 %668
    %v670 = vrcp.pop %v657
    %v671 = vrcp.pop %v660
    %v672 = vrcp.pop %v663
    %v673 = vrcp.pop %v666
    %v674 = vrcp.pop %v669
    %v675 = vmul.f32 %v646, %v670
    %v676 = vmul.f32 %v648, %v671
    %v677 = vmul.f32 %v650, %v672
    %v678 = vmul.f32 %v652, %v673
    %v679 = vmul.f32 %v654, %v674
    %680 = vrot.lane.b32.xlu0 %v522, 64
    %v681 = vpop.permute.xlu0 %680
    %682 = vrot.lane.b32.xlu0 %v525, 64
    %v683 = vpop.permute.xlu0 %682
    %684 = vrot.lane.b32.xlu0 %v528, 64
    %v685 = vpop.permute.xlu0 %684
    %686 = vrot.lane.b32.xlu0 %v531, 64
    %v687 = vpop.permute.xlu0 %686
    %688 = vrot.lane.b32.xlu0 %v534, 64
    %v689 = vpop.permute.xlu0 %688
    %v695 = vsel %vm623, %v675, 0
    %v698 = vsel %vm623, %v676, 0
    %v701 = vsel %vm623, %v677, 0
    %v704 = vsel %vm623, %v678, 0
    %v707 = vsel %vm623, %v679, 0
    %vm709 = vcmask 1041408
    %v710 = vsel %vm709, %v689, 0
    %712 = vmatpush.msra.mxu0 0.0
    %713 = vmatpush.msra.mxu0 0.0
    %714 = vmatpush.msra.mxu0 0.0
    %715 = vmatpush.msra.mxu0 0.0
    %716 = vmatpush.msra.mxu0 0.0
    %717 = vmatpush.msra.mxu0 0.0
    %718 = vmatpush.msra.mxu0 0.0
    %719 = vmatpush.msra.mxu0 0.0
    %720 = vmatpush.msra.mxu0 0.0
    %721 = vmatpush.msra.mxu0 0.0
    %722 = vmatpush.msra.mxu0 0.0
    %723 = vmatpush.msra.mxu0 %v710
    %724 = vmatpush.msra.mxu0 %v687
    %725 = vmatpush.msra.mxu0 %v685
    %726 = vmatpush.msra.mxu0 %v683
    %727 = vmatpush.msra.mxu0 %v681
    %728 = vmatmul.f32.gmra.mxu0 %v695
    %v729 = vpop.f32.mrf.mxu0
    %v730 = vadd.f32 0.0, %v729
    %731 = vmatmul.f32.gmra.mxu0 %v698
    %v732 = vpop.f32.mrf.mxu0
    %v733 = vadd.f32 0.0, %v732
    %734 = vmatmul.f32.gmra.mxu0 %v701
    %v735 = vpop.f32.mrf.mxu0
    %v736 = vadd.f32 0.0, %v735
    %737 = vmatmul.f32.gmra.mxu0 %v704
    %v738 = vpop.f32.mrf.mxu0
    %v739 = vadd.f32 0.0, %v738
    %740 = vmatmul.f32.gmra.mxu0 %v707
    %v741 = vpop.f32.mrf.mxu0
    %v742 = vadd.f32 0.0, %v741
    %743 = vdwg.mxu0
    %v745 = vsel %vm560, %v730, 0
    %v748 = vsel %vm560, %v733, 0
    %v751 = vsel %vm560, %v736, 0
    %v754 = vsel %vm560, %v739, 0
    %v757 = vsel %vm560, %v742, 0
    %759 = vmatpush.msra.mxu0 0.0
    %760 = vmatpush.msra.mxu0 0.0
    %761 = vmatpush.msra.mxu0 0.0
    %762 = vmatpush.msra.mxu0 0.0
    %763 = vmatpush.msra.mxu0 0.0
    %764 = vmatpush.msra.mxu0 0.0
    %765 = vmatpush.msra.mxu0 0.0
    %766 = vmatpush.msra.mxu0 0.0
    %767 = vmatpush.msra.mxu0 0.0
    %768 = vmatpush.msra.mxu0 0.0
    %769 = vmatpush.msra.mxu0 0.0
    %770 = vmatpush.msra.mxu0 0.0
    %771 = vmatpush.msra.mxu0 0.0
    %772 = vmatpush.msra.mxu0 0.0
    %773 = vmatpush.msra.mxu0 0.0
    %774 = vmatpush.msra.mxu0 %v536
    %775 = vmatmul.f32.gmra.mxu0 %v745
    %v776 = vpop.f32.mrf.mxu0
    %v777 = vadd.f32 0.0, %v776
    %778 = vmatmul.f32.gmra.mxu0 %v748
    %v779 = vpop.f32.mrf.mxu0
    %v780 = vadd.f32 0.0, %v779
    %781 = vmatmul.f32.gmra.mxu0 %v751
    %v782 = vpop.f32.mrf.mxu0
    %v783 = vadd.f32 0.0, %v782
    %784 = vmatmul.f32.gmra.mxu0 %v754
    %v785 = vpop.f32.mrf.mxu0
    %v786 = vadd.f32 0.0, %v785
    %787 = vmatmul.f32.gmra.mxu0 %v757
    %v788 = vpop.f32.mrf.mxu0
    %v789 = vadd.f32 0.0, %v788
    %790 = vdwg.mxu0
    %v791 = vadd.f32 %v544, %v777
    %v792 = vadd.f32 %v544, %v780
    %v793 = vadd.f32 %v544, %v783
    %v794 = vadd.f32 %v544, %v786
    %v795 = vadd.f32 %v544, %v789
    %796 = vrot.lane.b32.xlu0 %v522, 120
    %v797 = vpop.permute.xlu0 %796
    %798 = vrot.lane.b32.xlu0 %v525, 120
    %v799 = vpop.permute.xlu0 %798
    %800 = vrot.lane.b32.xlu0 %v528, 120
    %v801 = vpop.permute.xlu0 %800
    %802 = vrot.lane.b32.xlu0 %v531, 120
    %v803 = vpop.permute.xlu0 %802
    %804 = vrot.lane.b32.xlu0 %v534, 120
    %v805 = vpop.permute.xlu0 %804
    %806 = vrot.lane.b32.xlu0 %v522, 88
    %v807 = vpop.permute.xlu0 %806
    %808 = vrot.lane.b32.xlu0 %v525, 88
    %v809 = vpop.permute.xlu0 %808
    %810 = vrot.lane.b32.xlu0 %v528, 88
    %v811 = vpop.permute.xlu0 %810
    %812 = vrot.lane.b32.xlu0 %v531, 88
    %v813 = vpop.permute.xlu0 %812
    %814 = vrot.lane.b32.xlu0 %v534, 88
    %v815 = vpop.permute.xlu0 %814
    %v816 = vsel %vm560, %v797, 0
    %v818 = vsel %vm560, %v799, 0
    %v820 = vsel %vm560, %v801, 0
    %v822 = vsel %vm560, %v803, 0
    %v824 = vsel %vm560, %v805, 0
    %v826 = vsel %vm560, %v807, 0
    %v828 = vsel %vm560, %v809, 0
    %v830 = vsel %vm560, %v811, 0
    %v832 = vsel %vm560, %v813, 0
    %v834 = vsel %vm560, %v815, 0
    %836 = vmatpush.xpose.msra.mxu0 0.0
    %837 = vmatpush.xpose.msra.mxu0 0.0
    %838 = vmatpush.xpose.msra.mxu0 0.0
    %839 = vmatpush.xpose.msra.mxu0 0.0
    %840 = vmatpush.xpose.msra.mxu0 0.0
    %841 = vmatpush.xpose.msra.mxu0 0.0
    %842 = vmatpush.xpose.msra.mxu0 0.0
    %843 = vmatpush.xpose.msra.mxu0 0.0
    %844 = vmatpush.xpose.msra.mxu0 0.0
    %845 = vmatpush.xpose.msra.mxu0 0.0
    %846 = vmatpush.xpose.msra.mxu0 0.0
    %847 = vmatpush.xpose.msra.mxu0 %v834
    %848 = vmatpush.xpose.msra.mxu0 %v832
    %849 = vmatpush.xpose.msra.mxu0 %v830
    %850 = vmatpush.xpose.msra.mxu0 %v828
    %851 = vmatpush.xpose.msra.mxu0 %v826
    %852 = vmatmul.f32.gmra.mxu0 %v816
    %v853 = vpop.f32.mrf.mxu0
    %v854 = vadd.f32 0.0, %v853
    %855 = vmatmul.f32.gmra.mxu0 %v818
    %v856 = vpop.f32.mrf.mxu0
    %v857 = vadd.f32 0.0, %v856
    %858 = vmatmul.f32.gmra.mxu0 %v820
    %v859 = vpop.f32.mrf.mxu0
    %v860 = vadd.f32 0.0, %v859
    %861 = vmatmul.f32.gmra.mxu0 %v822
    %v862 = vpop.f32.mrf.mxu0
    %v863 = vadd.f32 0.0, %v862
    %864 = vmatmul.f32.gmra.mxu0 %v824
    %v865 = vpop.f32.mrf.mxu0
    %v866 = vadd.f32 0.0, %v865
    %867 = vdwg.mxu0
    %v868 = vmul.f32 %v854, 0.35355338
    %v869 = vmul.f32 %v857, 0.35355338
    %v870 = vmul.f32 %v860, 0.35355338
    %v871 = vmul.f32 %v863, 0.35355338
    %v872 = vmul.f32 %v866, 0.35355338
    %v873 = vadd.f32 %v868, %v340
    %v874 = vadd.f32 %v869, %v341
    %v875 = vadd.f32 %v870, %v342
    %v876 = vadd.f32 %v871, %v343
    %v877 = vadd.f32 %v872, %v344
    %v878 = vsel %vm623, %v873, -inf
    %879 = vmax.xlane.f32.xlu0 %v878
    %v880 = vpop.xlane.xlu0 %879
    %v881 = vsel %vm623, %v874, -inf
    %882 = vmax.xlane.f32.xlu0 %v881
    %v883 = vpop.xlane.xlu0 %882
    %v884 = vsel %vm623, %v875, -inf
    %885 = vmax.xlane.f32.xlu0 %v884
    %v886 = vpop.xlane.xlu0 %885
    %v887 = vsel %vm623, %v876, -inf
    %888 = vmax.xlane.f32.xlu0 %v887
    %v889 = vpop.xlane.xlu0 %888
    %v890 = vsel %vm636, %v877, -inf
    %891 = vmax.xlane.f32.xlu0 %v890
    %v892 = vpop.xlane.xlu0 %891
    %v893 = vsub.f32 %v873, %v880
    %v894 = vsub.f32 %v874, %v883
    %v895 = vsub.f32 %v875, %v886
    %v896 = vsub.f32 %v876, %v889
    %v897 = vsub.f32 %v877, %v892
    %v898 = vmul.f32 %v893, 1.442695
    %v899 = vpow.pop %v898
    %v900 = vmul.f32 %v894, 1.442695
    %v901 = vpow.pop %v900
    %v902 = vmul.f32 %v895, 1.442695
    %v903 = vpow.pop %v902
    %v904 = vmul.f32 %v896, 1.442695
    %v905 = vpow.pop %v904
    %v906 = vmul.f32 %v897, 1.442695
    %v907 = vpow.pop %v906
    %v908 = vsel %vm623, %v899, 0.0
    %909 = vadd.xlane.f32.xlu0 %v908
    %v910 = vpop.xlane.xlu0 %909
    %v911 = vsel %vm623, %v901, 0.0
    %912 = vadd.xlane.f32.xlu0 %v911
    %v913 = vpop.xlane.xlu0 %912
    %v914 = vsel %vm623, %v903, 0.0
    %915 = vadd.xlane.f32.xlu0 %v914
    %v916 = vpop.xlane.xlu0 %915
    %v917 = vsel %vm623, %v905, 0.0
    %918 = vadd.xlane.f32.xlu0 %v917
    %v919 = vpop.xlane.xlu0 %918
    %v920 = vsel %vm636, %v907, 0.0
    %921 = vadd.xlane.f32.xlu0 %v920
    %v922 = vpop.xlane.xlu0 %921
    %v923 = vrcp.pop %v910
    %v924 = vrcp.pop %v913
    %v925 = vrcp.pop %v916
    %v926 = vrcp.pop %v919
    %v927 = vrcp.pop %v922
    %v928 = vmul.f32 %v899, %v923
    %v929 = vmul.f32 %v901, %v924
    %v930 = vmul.f32 %v903, %v925
    %v931 = vmul.f32 %v905, %v926
    %v932 = vmul.f32 %v907, %v927
    %933 = vrot.lane.b32.xlu0 %v522, 56
    %v934 = vpop.permute.xlu0 %933
    %935 = vrot.lane.b32.xlu0 %v525, 56
    %v936 = vpop.permute.xlu0 %935
    %937 = vrot.lane.b32.xlu0 %v528, 56
    %v938 = vpop.permute.xlu0 %937
    %939 = vrot.lane.b32.xlu0 %v531, 56
    %v940 = vpop.permute.xlu0 %939
    %941 = vrot.lane.b32.xlu0 %v534, 56
    %v942 = vpop.permute.xlu0 %941
    %v948 = vsel %vm623, %v928, 0
    %v951 = vsel %vm623, %v929, 0
    %v954 = vsel %vm623, %v930, 0
    %v957 = vsel %vm623, %v931, 0
    %v960 = vsel %vm623, %v932, 0
    %v962 = vsel %vm709, %v942, 0
    %964 = vmatpush.msra.mxu0 0.0
    %965 = vmatpush.msra.mxu0 0.0
    %966 = vmatpush.msra.mxu0 0.0
    %967 = vmatpush.msra.mxu0 0.0
    %968 = vmatpush.msra.mxu0 0.0
    %969 = vmatpush.msra.mxu0 0.0
    %970 = vmatpush.msra.mxu0 0.0
    %971 = vmatpush.msra.mxu0 0.0
    %972 = vmatpush.msra.mxu0 0.0
    %973 = vmatpush.msra.mxu0 0.0
    %974 = vmatpush.msra.mxu0 0.0
    %975 = vmatpush.msra.mxu0 %v962
    %976 = vmatpush.msra.mxu0 %v940
    %977 = vmatpush.msra.mxu0 %v938
    %978 = vmatpush.msra.mxu0 %v936
    %979 = vmatpush.msra.mxu0 %v934
    %980 = vmatmul.f32.gmra.mxu0 %v948
    %v981 = vpop.f32.mrf.mxu0
    %v982 = vadd.f32 0.0, %v981
    %983 = vmatmul.f32.gmra.mxu0 %v951
    %v984 = vpop.f32.mrf.mxu0
    %v985 = vadd.f32 0.0, %v984
    %986 = vmatmul.f32.gmra.mxu0 %v954
    %v987 = vpop.f32.mrf.mxu0
    %v988 = vadd.f32 0.0, %v987
    %989 = vmatmul.f32.gmra.mxu0 %v957
    %v990 = vpop.f32.mrf.mxu0
    %v991 = vadd.f32 0.0, %v990
    %992 = vmatmul.f32.gmra.mxu0 %v960
    %v993 = vpop.f32.mrf.mxu0
    %v994 = vadd.f32 0.0, %v993
    %995 = vdwg.mxu0
    %v997 = vsel %vm560, %v982, 0
    %v1000 = vsel %vm560, %v985, 0
    %v1003 = vsel %vm560, %v988, 0
    %v1006 = vsel %vm560, %v991, 0
    %v1009 = vsel %vm560, %v994, 0
    %1011 = vmatpush.msra.mxu0 0.0
    %1012 = vmatpush.msra.mxu0 0.0
    %1013 = vmatpush.msra.mxu0 0.0
    %1014 = vmatpush.msra.mxu0 0.0
    %1015 = vmatpush.msra.mxu0 0.0
    %1016 = vmatpush.msra.mxu0 0.0
    %1017 = vmatpush.msra.mxu0 0.0
    %1018 = vmatpush.msra.mxu0 0.0
    %1019 = vmatpush.msra.mxu0 0.0
    %1020 = vmatpush.msra.mxu0 0.0
    %1021 = vmatpush.msra.mxu0 0.0
    %1022 = vmatpush.msra.mxu0 0.0
    %1023 = vmatpush.msra.mxu0 0.0
    %1024 = vmatpush.msra.mxu0 0.0
    %1025 = vmatpush.msra.mxu0 0.0
    %1026 = vmatpush.msra.mxu0 %v537
    %1027 = vmatmul.f32.gmra.mxu0 %v997
    %v1028 = vpop.f32.mrf.mxu0
    %v1029 = vadd.f32 0.0, %v1028
    %1030 = vmatmul.f32.gmra.mxu0 %v1000
    %v1031 = vpop.f32.mrf.mxu0
    %v1032 = vadd.f32 0.0, %v1031
    %1033 = vmatmul.f32.gmra.mxu0 %v1003
    %v1034 = vpop.f32.mrf.mxu0
    %v1035 = vadd.f32 0.0, %v1034
    %1036 = vmatmul.f32.gmra.mxu0 %v1006
    %v1037 = vpop.f32.mrf.mxu0
    %v1038 = vadd.f32 0.0, %v1037
    %1039 = vmatmul.f32.gmra.mxu0 %v1009
    %v1040 = vpop.f32.mrf.mxu0
    %v1041 = vadd.f32 0.0, %v1040
    %1042 = vdwg.mxu0
    %v1043 = vadd.f32 %v791, %v1029
    %v1044 = vadd.f32 %v792, %v1032
    %v1045 = vadd.f32 %v793, %v1035
    %v1046 = vadd.f32 %v794, %v1038
    %v1047 = vadd.f32 %v795, %v1041
    %1048 = vrot.lane.b32.xlu0 %v522, 112
    %v1049 = vpop.permute.xlu0 %1048
    %1050 = vrot.lane.b32.xlu0 %v525, 112
    %v1051 = vpop.permute.xlu0 %1050
    %1052 = vrot.lane.b32.xlu0 %v528, 112
    %v1053 = vpop.permute.xlu0 %1052
    %1054 = vrot.lane.b32.xlu0 %v531, 112
    %v1055 = vpop.permute.xlu0 %1054
    %1056 = vrot.lane.b32.xlu0 %v534, 112
    %v1057 = vpop.permute.xlu0 %1056
    %1058 = vrot.lane.b32.xlu0 %v522, 80
    %v1059 = vpop.permute.xlu0 %1058
    %1060 = vrot.lane.b32.xlu0 %v525, 80
    %v1061 = vpop.permute.xlu0 %1060
    %1062 = vrot.lane.b32.xlu0 %v528, 80
    %v1063 = vpop.permute.xlu0 %1062
    %1064 = vrot.lane.b32.xlu0 %v531, 80
    %v1065 = vpop.permute.xlu0 %1064
    %1066 = vrot.lane.b32.xlu0 %v534, 80
    %v1067 = vpop.permute.xlu0 %1066
    %v1068 = vsel %vm560, %v1049, 0
    %v1070 = vsel %vm560, %v1051, 0
    %v1072 = vsel %vm560, %v1053, 0
    %v1074 = vsel %vm560, %v1055, 0
    %v1076 = vsel %vm560, %v1057, 0
    %v1078 = vsel %vm560, %v1059, 0
    %v1080 = vsel %vm560, %v1061, 0
    %v1082 = vsel %vm560, %v1063, 0
    %v1084 = vsel %vm560, %v1065, 0
    %v1086 = vsel %vm560, %v1067, 0
    %1088 = vmatpush.xpose.msra.mxu0 0.0
    %1089 = vmatpush.xpose.msra.mxu0 0.0
    %1090 = vmatpush.xpose.msra.mxu0 0.0
    %1091 = vmatpush.xpose.msra.mxu0 0.0
    %1092 = vmatpush.xpose.msra.mxu0 0.0
    %1093 = vmatpush.xpose.msra.mxu0 0.0
    %1094 = vmatpush.xpose.msra.mxu0 0.0
    %1095 = vmatpush.xpose.msra.mxu0 0.0
    %1096 = vmatpush.xpose.msra.mxu0 0.0
    %1097 = vmatpush.xpose.msra.mxu0 0.0
    %1098 = vmatpush.xpose.msra.mxu0 0.0
    %1099 = vmatpush.xpose.msra.mxu0 %v1086
    %1100 = vmatpush.xpose.msra.mxu0 %v1084
    %1101 = vmatpush.xpose.msra.mxu0 %v1082
    %1102 = vmatpush.xpose.msra.mxu0 %v1080
    %1103 = vmatpush.xpose.msra.mxu0 %v1078
    %1104 = vmatmul.f32.gmra.mxu0 %v1068
    %v1105 = vpop.f32.mrf.mxu0
    %v1106 = vadd.f32 0.0, %v1105
    %1107 = vmatmul.f32.gmra.mxu0 %v1070
    %v1108 = vpop.f32.mrf.mxu0
    %v1109 = vadd.f32 0.0, %v1108
    %1110 = vmatmul.f32.gmra.mxu0 %v1072
    %v1111 = vpop.f32.mrf.mxu0
    %v1112 = vadd.f32 0.0, %v1111
    %1113 = vmatmul.f32.gmra.mxu0 %v1074
    %v1114 = vpop.f32.mrf.mxu0
    %v1115 = vadd.f32 0.0, %v1114
    %1116 = vmatmul.f32.gmra.mxu0 %v1076
    %v1117 = vpop.f32.mrf.mxu0
    %v1118 = vadd.f32 0.0, %v1117
    %1119 = vdwg.mxu0
    %v1120 = vmul.f32 %v1106, 0.35355338
    %v1121 = vmul.f32 %v1109, 0.35355338
    %v1122 = vmul.f32 %v1112, 0.35355338
    %v1123 = vmul.f32 %v1115, 0.35355338
    %v1124 = vmul.f32 %v1118, 0.35355338
    %v1125 = vadd.f32 %v1120, %v340
    %v1126 = vadd.f32 %v1121, %v341
    %v1127 = vadd.f32 %v1122, %v342
    %v1128 = vadd.f32 %v1123, %v343
    %v1129 = vadd.f32 %v1124, %v344
    %v1130 = vsel %vm623, %v1125, -inf
    %1131 = vmax.xlane.f32.xlu0 %v1130
    %v1132 = vpop.xlane.xlu0 %1131
    %v1133 = vsel %vm623, %v1126, -inf
    %1134 = vmax.xlane.f32.xlu0 %v1133
    %v1135 = vpop.xlane.xlu0 %1134
    %v1136 = vsel %vm623, %v1127, -inf
    %1137 = vmax.xlane.f32.xlu0 %v1136
    %v1138 = vpop.xlane.xlu0 %1137
    %v1139 = vsel %vm623, %v1128, -inf
    %1140 = vmax.xlane.f32.xlu0 %v1139
    %v1141 = vpop.xlane.xlu0 %1140
    %v1142 = vsel %vm636, %v1129, -inf
    %1143 = vmax.xlane.f32.xlu0 %v1142
    %v1144 = vpop.xlane.xlu0 %1143
    %v1145 = vsub.f32 %v1125, %v1132
    %v1146 = vsub.f32 %v1126, %v1135
    %v1147 = vsub.f32 %v1127, %v1138
    %v1148 = vsub.f32 %v1128, %v1141
    %v1149 = vsub.f32 %v1129, %v1144
    %v1150 = vmul.f32 %v1145, 1.442695
    %v1151 = vpow.pop %v1150
    %v1152 = vmul.f32 %v1146, 1.442695
    %v1153 = vpow.pop %v1152
    %v1154 = vmul.f32 %v1147, 1.442695
    %v1155 = vpow.pop %v1154
    %v1156 = vmul.f32 %v1148, 1.442695
    %v1157 = vpow.pop %v1156
    %v1158 = vmul.f32 %v1149, 1.442695
    %v1159 = vpow.pop %v1158
    %v1160 = vsel %vm623, %v1151, 0.0
    %1161 = vadd.xlane.f32.xlu0 %v1160
    %v1162 = vpop.xlane.xlu0 %1161
    %v1163 = vsel %vm623, %v1153, 0.0
    %1164 = vadd.xlane.f32.xlu0 %v1163
    %v1165 = vpop.xlane.xlu0 %1164
    %v1166 = vsel %vm623, %v1155, 0.0
    %1167 = vadd.xlane.f32.xlu0 %v1166
    %v1168 = vpop.xlane.xlu0 %1167
    %v1169 = vsel %vm623, %v1157, 0.0
    %1170 = vadd.xlane.f32.xlu0 %v1169
    %v1171 = vpop.xlane.xlu0 %1170
    %v1172 = vsel %vm636, %v1159, 0.0
    %1173 = vadd.xlane.f32.xlu0 %v1172
    %v1174 = vpop.xlane.xlu0 %1173
    %v1175 = vrcp.pop %v1162
    %v1176 = vrcp.pop %v1165
    %v1177 = vrcp.pop %v1168
    %v1178 = vrcp.pop %v1171
    %v1179 = vrcp.pop %v1174
    %v1180 = vmul.f32 %v1151, %v1175
    %v1181 = vmul.f32 %v1153, %v1176
    %v1182 = vmul.f32 %v1155, %v1177
    %v1183 = vmul.f32 %v1157, %v1178
    %v1184 = vmul.f32 %v1159, %v1179
    %1185 = vrot.lane.b32.xlu0 %v522, 48
    %v1186 = vpop.permute.xlu0 %1185
    %1187 = vrot.lane.b32.xlu0 %v525, 48
    %v1188 = vpop.permute.xlu0 %1187
    %1189 = vrot.lane.b32.xlu0 %v528, 48
    %v1190 = vpop.permute.xlu0 %1189
    %1191 = vrot.lane.b32.xlu0 %v531, 48
    %v1192 = vpop.permute.xlu0 %1191
    %1193 = vrot.lane.b32.xlu0 %v534, 48
    %v1194 = vpop.permute.xlu0 %1193
    %v1200 = vsel %vm623, %v1180, 0
    %v1203 = vsel %vm623, %v1181, 0
    %v1206 = vsel %vm623, %v1182, 0
    %v1209 = vsel %vm623, %v1183, 0
    %v1212 = vsel %vm623, %v1184, 0
    %v1214 = vsel %vm709, %v1194, 0
    %1216 = vmatpush.msra.mxu0 0.0
    %1217 = vmatpush.msra.mxu0 0.0
    %1218 = vmatpush.msra.mxu0 0.0
    %1219 = vmatpush.msra.mxu0 0.0
    %1220 = vmatpush.msra.mxu0 0.0
    %1221 = vmatpush.msra.mxu0 0.0
    %1222 = vmatpush.msra.mxu0 0.0
    %1223 = vmatpush.msra.mxu0 0.0
    %1224 = vmatpush.msra.mxu0 0.0
    %1225 = vmatpush.msra.mxu0 0.0
    %1226 = vmatpush.msra.mxu0 0.0
    %1227 = vmatpush.msra.mxu0 %v1214
    %1228 = vmatpush.msra.mxu0 %v1192
    %1229 = vmatpush.msra.mxu0 %v1190
    %1230 = vmatpush.msra.mxu0 %v1188
    %1231 = vmatpush.msra.mxu0 %v1186
    %1232 = vmatmul.f32.gmra.mxu0 %v1200
    %v1233 = vpop.f32.mrf.mxu0
    %v1234 = vadd.f32 0.0, %v1233
    %1235 = vmatmul.f32.gmra.mxu0 %v1203
    %v1236 = vpop.f32.mrf.mxu0
    %v1237 = vadd.f32 0.0, %v1236
    %1238 = vmatmul.f32.gmra.mxu0 %v1206
    %v1239 = vpop.f32.mrf.mxu0
    %v1240 = vadd.f32 0.0, %v1239
    %1241 = vmatmul.f32.gmra.mxu0 %v1209
    %v1242 = vpop.f32.mrf.mxu0
    %v1243 = vadd.f32 0.0, %v1242
    %1244 = vmatmul.f32.gmra.mxu0 %v1212
    %v1245 = vpop.f32.mrf.mxu0
    %v1246 = vadd.f32 0.0, %v1245
    %1247 = vdwg.mxu0
    %v1249 = vsel %vm560, %v1234, 0
    %v1252 = vsel %vm560, %v1237, 0
    %v1255 = vsel %vm560, %v1240, 0
    %v1258 = vsel %vm560, %v1243, 0
    %v1261 = vsel %vm560, %v1246, 0
    %1263 = vmatpush.msra.mxu0 0.0
    %1264 = vmatpush.msra.mxu0 0.0
    %1265 = vmatpush.msra.mxu0 0.0
    %1266 = vmatpush.msra.mxu0 0.0
    %1267 = vmatpush.msra.mxu0 0.0
    %1268 = vmatpush.msra.mxu0 0.0
    %1269 = vmatpush.msra.mxu0 0.0
    %1270 = vmatpush.msra.mxu0 0.0
    %1271 = vmatpush.msra.mxu0 0.0
    %1272 = vmatpush.msra.mxu0 0.0
    %1273 = vmatpush.msra.mxu0 0.0
    %1274 = vmatpush.msra.mxu0 0.0
    %1275 = vmatpush.msra.mxu0 0.0
    %1276 = vmatpush.msra.mxu0 0.0
    %1277 = vmatpush.msra.mxu0 0.0
    %1278 = vmatpush.msra.mxu0 %v538
    %1279 = vmatmul.f32.gmra.mxu0 %v1249
    %v1280 = vpop.f32.mrf.mxu0
    %v1281 = vadd.f32 0.0, %v1280
    %1282 = vmatmul.f32.gmra.mxu0 %v1252
    %v1283 = vpop.f32.mrf.mxu0
    %v1284 = vadd.f32 0.0, %v1283
    %1285 = vmatmul.f32.gmra.mxu0 %v1255
    %v1286 = vpop.f32.mrf.mxu0
    %v1287 = vadd.f32 0.0, %v1286
    %1288 = vmatmul.f32.gmra.mxu0 %v1258
    %v1289 = vpop.f32.mrf.mxu0
    %v1290 = vadd.f32 0.0, %v1289
    %1291 = vmatmul.f32.gmra.mxu0 %v1261
    %v1292 = vpop.f32.mrf.mxu0
    %v1293 = vadd.f32 0.0, %v1292
    %1294 = vdwg.mxu0
    %v1295 = vadd.f32 %v1043, %v1281
    %v1296 = vadd.f32 %v1044, %v1284
    %v1297 = vadd.f32 %v1045, %v1287
    %v1298 = vadd.f32 %v1046, %v1290
    %v1299 = vadd.f32 %v1047, %v1293
    %1300 = vrot.lane.b32.xlu0 %v522, 104
    %v1301 = vpop.permute.xlu0 %1300
    %1302 = vrot.lane.b32.xlu0 %v525, 104
    %v1303 = vpop.permute.xlu0 %1302
    %1304 = vrot.lane.b32.xlu0 %v528, 104
    %v1305 = vpop.permute.xlu0 %1304
    %1306 = vrot.lane.b32.xlu0 %v531, 104
    %v1307 = vpop.permute.xlu0 %1306
    %1308 = vrot.lane.b32.xlu0 %v534, 104
    %v1309 = vpop.permute.xlu0 %1308
    %1310 = vrot.lane.b32.xlu0 %v522, 72
    %v1311 = vpop.permute.xlu0 %1310
    %1312 = vrot.lane.b32.xlu0 %v525, 72
    %v1313 = vpop.permute.xlu0 %1312
    %1314 = vrot.lane.b32.xlu0 %v528, 72
    %v1315 = vpop.permute.xlu0 %1314
    %1316 = vrot.lane.b32.xlu0 %v531, 72
    %v1317 = vpop.permute.xlu0 %1316
    %1318 = vrot.lane.b32.xlu0 %v534, 72
    %v1319 = vpop.permute.xlu0 %1318
    %v1320 = vsel %vm560, %v1301, 0
    %v1322 = vsel %vm560, %v1303, 0
    %v1324 = vsel %vm560, %v1305, 0
    %v1326 = vsel %vm560, %v1307, 0
    %v1328 = vsel %vm560, %v1309, 0
    %v1330 = vsel %vm560, %v1311, 0
    %v1332 = vsel %vm560, %v1313, 0
    %v1334 = vsel %vm560, %v1315, 0
    %v1336 = vsel %vm560, %v1317, 0
    %v1338 = vsel %vm560, %v1319, 0
    %1340 = vmatpush.xpose.msra.mxu0 0.0
    %1341 = vmatpush.xpose.msra.mxu0 0.0
    %1342 = vmatpush.xpose.msra.mxu0 0.0
    %1343 = vmatpush.xpose.msra.mxu0 0.0
    %1344 = vmatpush.xpose.msra.mxu0 0.0
    %1345 = vmatpush.xpose.msra.mxu0 0.0
    %1346 = vmatpush.xpose.msra.mxu0 0.0
    %1347 = vmatpush.xpose.msra.mxu0 0.0
    %1348 = vmatpush.xpose.msra.mxu0 0.0
    %1349 = vmatpush.xpose.msra.mxu0 0.0
    %1350 = vmatpush.xpose.msra.mxu0 0.0
    %1351 = vmatpush.xpose.msra.mxu0 %v1338
    %1352 = vmatpush.xpose.msra.mxu0 %v1336
    %1353 = vmatpush.xpose.msra.mxu0 %v1334
    %1354 = vmatpush.xpose.msra.mxu0 %v1332
    %1355 = vmatpush.xpose.msra.mxu0 %v1330
    %1356 = vmatmul.f32.gmra.mxu0 %v1320
    %v1357 = vpop.f32.mrf.mxu0
    %v1358 = vadd.f32 0.0, %v1357
    %1359 = vmatmul.f32.gmra.mxu0 %v1322
    %v1360 = vpop.f32.mrf.mxu0
    %v1361 = vadd.f32 0.0, %v1360
    %1362 = vmatmul.f32.gmra.mxu0 %v1324
    %v1363 = vpop.f32.mrf.mxu0
    %v1364 = vadd.f32 0.0, %v1363
    %1365 = vmatmul.f32.gmra.mxu0 %v1326
    %v1366 = vpop.f32.mrf.mxu0
    %v1367 = vadd.f32 0.0, %v1366
    %1368 = vmatmul.f32.gmra.mxu0 %v1328
    %v1369 = vpop.f32.mrf.mxu0
    %v1370 = vadd.f32 0.0, %v1369
    %1371 = vdwg.mxu0
    %v1372 = vmul.f32 %v1358, 0.35355338
    %v1373 = vmul.f32 %v1361, 0.35355338
    %v1374 = vmul.f32 %v1364, 0.35355338
    %v1375 = vmul.f32 %v1367, 0.35355338
    %v1376 = vmul.f32 %v1370, 0.35355338
    %v1377 = vadd.f32 %v1372, %v340
    %v1378 = vadd.f32 %v1373, %v341
    %v1379 = vadd.f32 %v1374, %v342
    %v1380 = vadd.f32 %v1375, %v343
    %v1381 = vadd.f32 %v1376, %v344
    %v1382 = vsel %vm623, %v1377, -inf
    %1383 = vmax.xlane.f32.xlu0 %v1382
    %v1384 = vpop.xlane.xlu0 %1383
    %v1385 = vsel %vm623, %v1378, -inf
    %1386 = vmax.xlane.f32.xlu0 %v1385
    %v1387 = vpop.xlane.xlu0 %1386
    %v1388 = vsel %vm623, %v1379, -inf
    %1389 = vmax.xlane.f32.xlu0 %v1388
    %v1390 = vpop.xlane.xlu0 %1389
    %v1391 = vsel %vm623, %v1380, -inf
    %1392 = vmax.xlane.f32.xlu0 %v1391
    %v1393 = vpop.xlane.xlu0 %1392
    %v1394 = vsel %vm636, %v1381, -inf
    %1395 = vmax.xlane.f32.xlu0 %v1394
    %v1396 = vpop.xlane.xlu0 %1395
    %v1397 = vsub.f32 %v1377, %v1384
    %v1398 = vsub.f32 %v1378, %v1387
    %v1399 = vsub.f32 %v1379, %v1390
    %v1400 = vsub.f32 %v1380, %v1393
    %v1401 = vsub.f32 %v1381, %v1396
    %v1402 = vmul.f32 %v1397, 1.442695
    %v1403 = vpow.pop %v1402
    %v1404 = vmul.f32 %v1398, 1.442695
    %v1405 = vpow.pop %v1404
    %v1406 = vmul.f32 %v1399, 1.442695
    %v1407 = vpow.pop %v1406
    %v1408 = vmul.f32 %v1400, 1.442695
    %v1409 = vpow.pop %v1408
    %v1410 = vmul.f32 %v1401, 1.442695
    %v1411 = vpow.pop %v1410
    %v1412 = vsel %vm623, %v1403, 0.0
    %1413 = vadd.xlane.f32.xlu0 %v1412
    %v1414 = vpop.xlane.xlu0 %1413
    %v1415 = vsel %vm623, %v1405, 0.0
    %1416 = vadd.xlane.f32.xlu0 %v1415
    %v1417 = vpop.xlane.xlu0 %1416
    %v1418 = vsel %vm623, %v1407, 0.0
    %1419 = vadd.xlane.f32.xlu0 %v1418
    %v1420 = vpop.xlane.xlu0 %1419
    %v1421 = vsel %vm623, %v1409, 0.0
    %1422 = vadd.xlane.f32.xlu0 %v1421
    %v1423 = vpop.xlane.xlu0 %1422
    %v1424 = vsel %vm636, %v1411, 0.0
    %1425 = vadd.xlane.f32.xlu0 %v1424
    %v1426 = vpop.xlane.xlu0 %1425
    %v1427 = vrcp.pop %v1414
    %v1428 = vrcp.pop %v1417
    %v1429 = vrcp.pop %v1420
    %v1430 = vrcp.pop %v1423
    %v1431 = vrcp.pop %v1426
    %v1432 = vmul.f32 %v1403, %v1427
    %v1433 = vmul.f32 %v1405, %v1428
    %v1434 = vmul.f32 %v1407, %v1429
    %v1435 = vmul.f32 %v1409, %v1430
    %v1436 = vmul.f32 %v1411, %v1431
    %1437 = vrot.lane.b32.xlu0 %v522, 40
    %v1438 = vpop.permute.xlu0 %1437
    %1439 = vrot.lane.b32.xlu0 %v525, 40
    %v1440 = vpop.permute.xlu0 %1439
    %1441 = vrot.lane.b32.xlu0 %v528, 40
    %v1442 = vpop.permute.xlu0 %1441
    %1443 = vrot.lane.b32.xlu0 %v531, 40
    %v1444 = vpop.permute.xlu0 %1443
    %1445 = vrot.lane.b32.xlu0 %v534, 40
    %v1446 = vpop.permute.xlu0 %1445
    %v1452 = vsel %vm623, %v1432, 0
    %v1455 = vsel %vm623, %v1433, 0
    %v1458 = vsel %vm623, %v1434, 0
    %v1461 = vsel %vm623, %v1435, 0
    %v1464 = vsel %vm623, %v1436, 0
    %v1466 = vsel %vm709, %v1446, 0
    %1468 = vmatpush.msra.mxu0 0.0
    %1469 = vmatpush.msra.mxu0 0.0
    %1470 = vmatpush.msra.mxu0 0.0
    %1471 = vmatpush.msra.mxu0 0.0
    %1472 = vmatpush.msra.mxu0 0.0
    %1473 = vmatpush.msra.mxu0 0.0
    %1474 = vmatpush.msra.mxu0 0.0
    %1475 = vmatpush.msra.mxu0 0.0
    %1476 = vmatpush.msra.mxu0 0.0
    %1477 = vmatpush.msra.mxu0 0.0
    %1478 = vmatpush.msra.mxu0 0.0
    %1479 = vmatpush.msra.mxu0 %v1466
    %1480 = vmatpush.msra.mxu0 %v1444
    %1481 = vmatpush.msra.mxu0 %v1442
    %1482 = vmatpush.msra.mxu0 %v1440
    %1483 = vmatpush.msra.mxu0 %v1438
    %1484 = vmatmul.f32.gmra.mxu0 %v1452
    %v1485 = vpop.f32.mrf.mxu0
    %v1486 = vadd.f32 0.0, %v1485
    %1487 = vmatmul.f32.gmra.mxu0 %v1455
    %v1488 = vpop.f32.mrf.mxu0
    %v1489 = vadd.f32 0.0, %v1488
    %1490 = vmatmul.f32.gmra.mxu0 %v1458
    %v1491 = vpop.f32.mrf.mxu0
    %v1492 = vadd.f32 0.0, %v1491
    %1493 = vmatmul.f32.gmra.mxu0 %v1461
    %v1494 = vpop.f32.mrf.mxu0
    %v1495 = vadd.f32 0.0, %v1494
    %1496 = vmatmul.f32.gmra.mxu0 %v1464
    %v1497 = vpop.f32.mrf.mxu0
    %v1498 = vadd.f32 0.0, %v1497
    %1499 = vdwg.mxu0
    %v1501 = vsel %vm560, %v1486, 0
    %v1504 = vsel %vm560, %v1489, 0
    %v1507 = vsel %vm560, %v1492, 0
    %v1510 = vsel %vm560, %v1495, 0
    %v1513 = vsel %vm560, %v1498, 0
    %1515 = vmatpush.msra.mxu0 0.0
    %1516 = vmatpush.msra.mxu0 0.0
    %1517 = vmatpush.msra.mxu0 0.0
    %1518 = vmatpush.msra.mxu0 0.0
    %1519 = vmatpush.msra.mxu0 0.0
    %1520 = vmatpush.msra.mxu0 0.0
    %1521 = vmatpush.msra.mxu0 0.0
    %1522 = vmatpush.msra.mxu0 0.0
    %1523 = vmatpush.msra.mxu0 0.0
    %1524 = vmatpush.msra.mxu0 0.0
    %1525 = vmatpush.msra.mxu0 0.0
    %1526 = vmatpush.msra.mxu0 0.0
    %1527 = vmatpush.msra.mxu0 0.0
    %1528 = vmatpush.msra.mxu0 0.0
    %1529 = vmatpush.msra.mxu0 0.0
    %1530 = vmatpush.msra.mxu0 %v539
    %1531 = vmatmul.f32.gmra.mxu0 %v1501
    %v1532 = vpop.f32.mrf.mxu0
    %v1533 = vadd.f32 0.0, %v1532
    %1534 = vmatmul.f32.gmra.mxu0 %v1504
    %v1535 = vpop.f32.mrf.mxu0
    %v1536 = vadd.f32 0.0, %v1535
    %1537 = vmatmul.f32.gmra.mxu0 %v1507
    %v1538 = vpop.f32.mrf.mxu0
    %v1539 = vadd.f32 0.0, %v1538
    %1540 = vmatmul.f32.gmra.mxu0 %v1510
    %v1541 = vpop.f32.mrf.mxu0
    %v1542 = vadd.f32 0.0, %v1541
    %1543 = vmatmul.f32.gmra.mxu0 %v1513
    %v1544 = vpop.f32.mrf.mxu0
    %v1545 = vadd.f32 0.0, %v1544
    %1546 = vdwg.mxu0
    %v1547 = vadd.f32 %v1295, %v1533
    %v1548 = vadd.f32 %v1296, %v1536
    %v1549 = vadd.f32 %v1297, %v1539
    %v1550 = vadd.f32 %v1298, %v1542
    %v1551 = vadd.f32 %v1299, %v1545
    %v1552 = vadd.f32 %v335, %v1547
    %v1553 = vadd.f32 %v336, %v1548
    %v1554 = vadd.f32 %v337, %v1549
    %v1555 = vadd.f32 %v338, %v1550
    %v1556 = vadd.f32 %v339, %v1551
    %v1557 = vld [vmem:[%s33] sm:$0x1]
    %v1558 = vld [vmem:[%s35] sm:$0x1]
    %v1559 = vsel %vm227, %v1552, 0.0
    %1560 = vadd.xlane.f32.xlu0 %v1559
    %v1561 = vpop.xlane.xlu0 %1560
    %v1562 = vsel %vm227, %v1553, 0.0
    %1563 = vadd.xlane.f32.xlu0 %v1562
    %v1564 = vpop.xlane.xlu0 %1563
    %v1565 = vsel %vm227, %v1554, 0.0
    %1566 = vadd.xlane.f32.xlu0 %v1565
    %v1567 = vpop.xlane.xlu0 %1566
    %v1568 = vsel %vm227, %v1555, 0.0
    %1569 = vadd.xlane.f32.xlu0 %v1568
    %v1570 = vpop.xlane.xlu0 %1569
    %v1571 = vsel %vm359, %v1556, 0.0
    %1572 = vadd.xlane.f32.xlu0 %v1571
    %v1573 = vpop.xlane.xlu0 %1572
    %v1574 = vmul.f32 %v1561, %v369
    %v1575 = vmul.f32 %v1564, %v369
    %v1576 = vmul.f32 %v1567, %v369
    %v1577 = vmul.f32 %v1570, %v369
    %v1578 = vmul.f32 %v1573, %v369
    %v1579 = vsub.f32 %v1552, %v1574
    %v1580 = vsub.f32 %v1553, %v1575
    %v1581 = vsub.f32 %v1554, %v1576
    %v1582 = vsub.f32 %v1555, %v1577
    %v1583 = vsub.f32 %v1556, %v1578
    %v1584 = vmul.f32 %v1579, %v1579
    %v1585 = vmul.f32 %v1580, %v1580
    %v1586 = vmul.f32 %v1581, %v1581
    %v1587 = vmul.f32 %v1582, %v1582
    %v1588 = vmul.f32 %v1583, %v1583
    %v1589 = vsel %vm227, %v1584, 0.0
    %1590 = vadd.xlane.f32.xlu0 %v1589
    %v1591 = vpop.xlane.xlu0 %1590
    %v1592 = vsel %vm227, %v1585, 0.0
    %1593 = vadd.xlane.f32.xlu0 %v1592
    %v1594 = vpop.xlane.xlu0 %1593
    %v1595 = vsel %vm227, %v1586, 0.0
    %1596 = vadd.xlane.f32.xlu0 %v1595
    %v1597 = vpop.xlane.xlu0 %1596
    %v1598 = vsel %vm227, %v1587, 0.0
    %1599 = vadd.xlane.f32.xlu0 %v1598
    %v1600 = vpop.xlane.xlu0 %1599
    %v1601 = vsel %vm359, %v1588, 0.0
    %1602 = vadd.xlane.f32.xlu0 %v1601
    %v1603 = vpop.xlane.xlu0 %1602
    %v1604 = vmul.f32 %v1591, %v369
    %v1605 = vmul.f32 %v1594, %v369
    %v1606 = vmul.f32 %v1597, %v369
    %v1607 = vmul.f32 %v1600, %v369
    %v1608 = vmul.f32 %v1603, %v369
    %v1609 = vadd.f32 %v1604, 1e-12
    %v1610 = vadd.f32 %v1605, 1e-12
    %v1611 = vadd.f32 %v1606, 1e-12
    %v1612 = vadd.f32 %v1607, 1e-12
    %v1613 = vadd.f32 %v1608, 1e-12
    %v1614 = vrsqrt.pop %v1609
    %v1615 = vmul.f32 %v1614, %v1609
    %v1616 = vmul.f32 %v1615, %v1614
    %v1617 = vmul.f32 0.5, %v1616
    %v1618 = vsub.f32 1.5, %v1617
    %v1619 = vmul.f32 %v1614, %v1618
    %vm1620 = vweird.f32 %v1609
    %vm1621 = vweird.f32 %v1614
    %vm1622 = vmor %vm1620, %vm1621
    %v1623 = vsel %vm1622, %v1614, %v1619
    %v1624 = vrsqrt.pop %v1610
    %v1625 = vmul.f32 %v1624, %v1610
    %v1626 = vmul.f32 %v1625, %v1624
    %v1627 = vmul.f32 0.5, %v1626
    %v1628 = vsub.f32 1.5, %v1627
    %v1629 = vmul.f32 %v1624, %v1628
    %vm1630 = vweird.f32 %v1610
    %vm1631 = vweird.f32 %v1624
    %vm1632 = vmor %vm1630, %vm1631
    %v1633 = vsel %vm1632, %v1624, %v1629
    %v1634 = vrsqrt.pop %v1611
    %v1635 = vmul.f32 %v1634, %v1611
    %v1636 = vmul.f32 %v1635, %v1634
    %v1637 = vmul.f32 0.5, %v1636
    %v1638 = vsub.f32 1.5, %v1637
    %v1639 = vmul.f32 %v1634, %v1638
    %vm1640 = vweird.f32 %v1611
    %vm1641 = vweird.f32 %v1634
    %vm1642 = vmor %vm1640, %vm1641
    %v1643 = vsel %vm1642, %v1634, %v1639
    %v1644 = vrsqrt.pop %v1612
    %v1645 = vmul.f32 %v1644, %v1612
    %v1646 = vmul.f32 %v1645, %v1644
    %v1647 = vmul.f32 0.5, %v1646
    %v1648 = vsub.f32 1.5, %v1647
    %v1649 = vmul.f32 %v1644, %v1648
    %vm1650 = vweird.f32 %v1612
    %vm1651 = vweird.f32 %v1644
    %vm1652 = vmor %vm1650, %vm1651
    %v1653 = vsel %vm1652, %v1644, %v1649
    %v1654 = vrsqrt.pop %v1613
    %v1655 = vmul.f32 %v1654, %v1613
    %v1656 = vmul.f32 %v1655, %v1654
    %v1657 = vmul.f32 0.5, %v1656
    %v1658 = vsub.f32 1.5, %v1657
    %v1659 = vmul.f32 %v1654, %v1658
    %vm1660 = vweird.f32 %v1613
    %vm1661 = vweird.f32 %v1654
    %vm1662 = vmor %vm1660, %vm1661
    %v1663 = vsel %vm1662, %v1654, %v1659
    %v1664 = vmul.f32 %v1579, %v1623
    %v1665 = vmul.f32 %v1580, %v1633
    %v1666 = vmul.f32 %v1581, %v1643
    %v1667 = vmul.f32 %v1582, %v1653
    %v1668 = vmul.f32 %v1583, %v1663
    %v1670 = vperm.slane %v1557, 0
    %v1672 = vmul.f32 %v1664, %v1670
    %v1673 = vmul.f32 %v1665, %v1670
    %v1674 = vmul.f32 %v1666, %v1670
    %v1675 = vmul.f32 %v1667, %v1670
    %v1676 = vmul.f32 %v1668, %v1670
    %v1678 = vperm.slane %v1558, 0
    %v1680 = vadd.f32 %v1672, %v1678
    %v1681 = vadd.f32 %v1673, %v1678
    %v1682 = vadd.f32 %v1674, %v1678
    %v1683 = vadd.f32 %v1675, %v1678
    %v1684 = vadd.f32 %v1676, %v1678
    %v1685 = vld [vmem:[%s37] sm:$0xff]
    %v1686 = vld [vmem:[%s37 + $0x8] sm:$0xff]
    %v1687 = vld [vmem:[%s37 + $0x10] sm:$0xff]
    %v1688 = vld [vmem:[%s37 + $0x18] sm:$0xff]
    %v1689 = vld [vmem:[%s39] sm:$0x1]
    %v1691 = vperm.slane %v1689, 0
    %v1694 = vsel %vm227, %v1680, 0
    %v1697 = vsel %vm227, %v1681, 0
    %v1700 = vsel %vm227, %v1682, 0
    %v1703 = vsel %vm227, %v1683, 0
    %v1706 = vsel %vm227, %v1684, 0
    %1708 = vmatpush.msra.mxu0 0.0
    %1709 = vmatpush.msra.mxu0 0.0
    %1710 = vmatpush.msra.mxu0 0.0
    %1711 = vmatpush.msra.mxu0 0.0
    %1712 = vmatpush.msra.mxu0 0.0
    %1713 = vmatpush.msra.mxu0 0.0
    %1714 = vmatpush.msra.mxu0 0.0
    %1715 = vmatpush.msra.mxu0 0.0
    %1716 = vmatpush.msra.mxu0 0.0
    %1717 = vmatpush.msra.mxu0 0.0
    %1718 = vmatpush.msra.mxu0 0.0
    %1719 = vmatpush.msra.mxu0 0.0
    %1720 = vmatpush.msra.mxu0 %v1688
    %1721 = vmatpush.msra.mxu0 %v1687
    %1722 = vmatpush.msra.mxu0 %v1686
    %1723 = vmatpush.msra.mxu0 %v1685
    %1724 = vmatmul.f32.gmra.mxu0 %v1694
    %v1725 = vpop.f32.mrf.mxu0
    %v1726 = vadd.f32 %v1691, %v1725
    %1727 = vmatmul.f32.gmra.mxu0 %v1697
    %v1728 = vpop.f32.mrf.mxu0
    %v1729 = vadd.f32 %v1691, %v1728
    %1730 = vmatmul.f32.gmra.mxu0 %v1700
    %v1731 = vpop.f32.mrf.mxu0
    %v1732 = vadd.f32 %v1691, %v1731
    %1733 = vmatmul.f32.gmra.mxu0 %v1703
    %v1734 = vpop.f32.mrf.mxu0
    %v1735 = vadd.f32 %v1691, %v1734
    %1736 = vmatmul.f32.gmra.mxu0 %v1706
    %v1737 = vpop.f32.mrf.mxu0
    %v1738 = vadd.f32 %v1691, %v1737
    %1739 = vdwg.mxu0
    %v1740 = vmul.f32 %v1726, 0.5
    %v1741 = vmul.f32 %v1729, 0.5
    %v1742 = vmul.f32 %v1732, 0.5
    %v1743 = vmul.f32 %v1735, 0.5
    %v1744 = vmul.f32 %v1738, 0.5
    %v1745 = vmul.f32 %v1726, 0.70710677
    %v1746 = vmul.f32 %v1729, 0.70710677
    %v1747 = vmul.f32 %v1732, 0.70710677
    %v1748 = vmul.f32 %v1735, 0.70710677
    %v1749 = vmul.f32 %v1738, 0.70710677
    %v1750 = vmul.f32 %v1745, %v1745
    %v1751 = vmin.f32 16.0, %v1750
    %v1752 = vmul.f32 %v1751, 2.1237322e-06
    %v1753 = vadd.f32 %v1752, 0.00028619796
    %v1754 = vmul.f32 %v1751, %v1753
    %v1755 = vadd.f32 %v1754, 0.0036580483
    %v1756 = vmul.f32 %v1751, %v1755
    %v1757 = vadd.f32 %v1756, 0.05243302
    %v1758 = vmul.f32 %v1751, %v1757
    %v1759 = vadd.f32 %v1758, 0.18741608
    %v1760 = vmul.f32 %v1751, %v1759
    %v1761 = vadd.f32 %v1760, 1.1283791
    %v1762 = vmul.f32 %v1745, %v1761
    %v1763 = vmul.f32 %v1751, 3.8918573e-05
    %v1764 = vadd.f32 %v1763, 0.001143296
    %v1765 = vmul.f32 %v1751, %v1764
    %v1766 = vadd.f32 %v1765, 0.014752088
    %v1767 = vmul.f32 %v1751, %v1766
    %v1768 = vadd.f32 %v1767, 0.112945676
    %v1769 = vmul.f32 %v1751, %v1768
    %v1770 = vadd.f32 %v1769, 0.4994258
    %v1771 = vmul.f32 %v1751, %v1770
    %v1772 = vadd.f32 %v1771, 1.0
    %v1773 = vrcp.pop %v1772
    %v1774 = vmul.f32 %v1772, %v1773
    %v1775 = vsub.f32 1.0, %v1774
    %v1776 = vmul.f32 %v1773, %v1775
    %v1777 = vadd.f32 %v1773, %v1776
    %vm1778 = vweird.f32 %v1772
    %vm1779 = vweird.f32 %v1773
    %vm1780 = vmor %vm1778, %vm1779
    %v1781 = vsel %vm1780, %v1773, %v1777
    %v1782 = vand.u32 2147483647, %v1772
    %vm1783 = vcmp.eq.f32.partialorder %v1782, 8.507059e+37
    %v1784 = vand.u32 %v1772, 2147483648
    %v1785 = vor.u32 1.1754944e-38, %v1784
    %v1786 = vsel %vm1783, %v1785, %v1781
    %v1787 = vmul.f32 %v1762, %v1786
    %v1788 = vmin.f32 %v1787, 1.0
    %v1789 = vmax.f32 %v1788, -1.0
    %v1790 = vmul.f32 %v1746, %v1746
    %v1791 = vmin.f32 16.0, %v1790
    %v1792 = vmul.f32 %v1791, 2.1237322e-06
    %v1793 = vadd.f32 %v1792, 0.00028619796
    %v1794 = vmul.f32 %v1791, %v1793
    %v1795 = vadd.f32 %v1794, 0.0036580483
    %v1796 = vmul.f32 %v1791, %v1795
    %v1797 = vadd.f32 %v1796, 0.05243302
    %v1798 = vmul.f32 %v1791, %v1797
    %v1799 = vadd.f32 %v1798, 0.18741608
    %v1800 = vmul.f32 %v1791, %v1799
    %v1801 = vadd.f32 %v1800, 1.1283791
    %v1802 = vmul.f32 %v1746, %v1801
    %v1803 = vmul.f32 %v1791, 3.8918573e-05
    %v1804 = vadd.f32 %v1803, 0.001143296
    %v1805 = vmul.f32 %v1791, %v1804
    %v1806 = vadd.f32 %v1805, 0.014752088
    %v1807 = vmul.f32 %v1791, %v1806
    %v1808 = vadd.f32 %v1807, 0.112945676
    %v1809 = vmul.f32 %v1791, %v1808
    %v1810 = vadd.f32 %v1809, 0.4994258
    %v1811 = vmul.f32 %v1791, %v1810
    %v1812 = vadd.f32 %v1811, 1.0
    %v1813 = vrcp.pop %v1812
    %v1814 = vmul.f32 %v1812, %v1813
    %v1815 = vsub.f32 1.0, %v1814
    %v1816 = vmul.f32 %v1813, %v1815
    %v1817 = vadd.f32 %v1813, %v1816
    %vm1818 = vweird.f32 %v1812
    %vm1819 = vweird.f32 %v1813
    %vm1820 = vmor %vm1818, %vm1819
    %v1821 = vsel %vm1820, %v1813, %v1817
    %v1822 = vand.u32 2147483647, %v1812
    %vm1823 = vcmp.eq.f32.partialorder %v1822, 8.507059e+37
    %v1824 = vand.u32 %v1812, 2147483648
    %v1825 = vor.u32 1.1754944e-38, %v1824
    %v1826 = vsel %vm1823, %v1825, %v1821
    %v1827 = vmul.f32 %v1802, %v1826
    %v1828 = vmin.f32 %v1827, 1.0
    %v1829 = vmax.f32 %v1828, -1.0
    %v1830 = vmul.f32 %v1747, %v1747
    %v1831 = vmin.f32 16.0, %v1830
    %v1832 = vmul.f32 %v1831, 2.1237322e-06
    %v1833 = vadd.f32 %v1832, 0.00028619796
    %v1834 = vmul.f32 %v1831, %v1833
    %v1835 = vadd.f32 %v1834, 0.0036580483
    %v1836 = vmul.f32 %v1831, %v1835
    %v1837 = vadd.f32 %v1836, 0.05243302
    %v1838 = vmul.f32 %v1831, %v1837
    %v1839 = vadd.f32 %v1838, 0.18741608
    %v1840 = vmul.f32 %v1831, %v1839
    %v1841 = vadd.f32 %v1840, 1.1283791
    %v1842 = vmul.f32 %v1747, %v1841
    %v1843 = vmul.f32 %v1831, 3.8918573e-05
    %v1844 = vadd.f32 %v1843, 0.001143296
    %v1845 = vmul.f32 %v1831, %v1844
    %v1846 = vadd.f32 %v1845, 0.014752088
    %v1847 = vmul.f32 %v1831, %v1846
    %v1848 = vadd.f32 %v1847, 0.112945676
    %v1849 = vmul.f32 %v1831, %v1848
    %v1850 = vadd.f32 %v1849, 0.4994258
    %v1851 = vmul.f32 %v1831, %v1850
    %v1852 = vadd.f32 %v1851, 1.0
    %v1853 = vrcp.pop %v1852
    %v1854 = vmul.f32 %v1852, %v1853
    %v1855 = vsub.f32 1.0, %v1854
    %v1856 = vmul.f32 %v1853, %v1855
    %v1857 = vadd.f32 %v1853, %v1856
    %vm1858 = vweird.f32 %v1852
    %vm1859 = vweird.f32 %v1853
    %vm1860 = vmor %vm1858, %vm1859
    %v1861 = vsel %vm1860, %v1853, %v1857
    %v1862 = vand.u32 2147483647, %v1852
    %vm1863 = vcmp.eq.f32.partialorder %v1862, 8.507059e+37
    %v1864 = vand.u32 %v1852, 2147483648
    %v1865 = vor.u32 1.1754944e-38, %v1864
    %v1866 = vsel %vm1863, %v1865, %v1861
    %v1867 = vmul.f32 %v1842, %v1866
    %v1868 = vmin.f32 %v1867, 1.0
    %v1869 = vmax.f32 %v1868, -1.0
    %v1870 = vmul.f32 %v1748, %v1748
    %v1871 = vmin.f32 16.0, %v1870
    %v1872 = vmul.f32 %v1871, 2.1237322e-06
    %v1873 = vadd.f32 %v1872, 0.00028619796
    %v1874 = vmul.f32 %v1871, %v1873
    %v1875 = vadd.f32 %v1874, 0.0036580483
    %v1876 = vmul.f32 %v1871, %v1875
    %v1877 = vadd.f32 %v1876, 0.05243302
    %v1878 = vmul.f32 %v1871, %v1877
    %v1879 = vadd.f32 %v1878, 0.18741608
    %v1880 = vmul.f32 %v1871, %v1879
    %v1881 = vadd.f32 %v1880, 1.1283791
    %v1882 = vmul.f32 %v1748, %v1881
    %v1883 = vmul.f32 %v1871, 3.8918573e-05
    %v1884 = vadd.f32 %v1883, 0.001143296
    %v1885 = vmul.f32 %v1871, %v1884
    %v1886 = vadd.f32 %v1885, 0.014752088
    %v1887 = vmul.f32 %v1871, %v1886
    %v1888 = vadd.f32 %v1887, 0.112945676
    %v1889 = vmul.f32 %v1871, %v1888
    %v1890 = vadd.f32 %v1889, 0.4994258
    %v1891 = vmul.f32 %v1871, %v1890
    %v1892 = vadd.f32 %v1891, 1.0
    %v1893 = vrcp.pop %v1892
    %v1894 = vmul.f32 %v1892, %v1893
    %v1895 = vsub.f32 1.0, %v1894
    %v1896 = vmul.f32 %v1893, %v1895
    %v1897 = vadd.f32 %v1893, %v1896
    %vm1898 = vweird.f32 %v1892
    %vm1899 = vweird.f32 %v1893
    %vm1900 = vmor %vm1898, %vm1899
    %v1901 = vsel %vm1900, %v1893, %v1897
    %v1902 = vand.u32 2147483647, %v1892
    %vm1903 = vcmp.eq.f32.partialorder %v1902, 8.507059e+37
    %v1904 = vand.u32 %v1892, 2147483648
    %v1905 = vor.u32 1.1754944e-38, %v1904
    %v1906 = vsel %vm1903, %v1905, %v1901
    %v1907 = vmul.f32 %v1882, %v1906
    %v1908 = vmin.f32 %v1907, 1.0
    %v1909 = vmax.f32 %v1908, -1.0
    %v1910 = vmul.f32 %v1749, %v1749
    %v1911 = vmin.f32 16.0, %v1910
    %v1912 = vmul.f32 %v1911, 2.1237322e-06
    %v1913 = vadd.f32 %v1912, 0.00028619796
    %v1914 = vmul.f32 %v1911, %v1913
    %v1915 = vadd.f32 %v1914, 0.0036580483
    %v1916 = vmul.f32 %v1911, %v1915
    %v1917 = vadd.f32 %v1916, 0.05243302
    %v1918 = vmul.f32 %v1911, %v1917
    %v1919 = vadd.f32 %v1918, 0.18741608
    %v1920 = vmul.f32 %v1911, %v1919
    %v1921 = vadd.f32 %v1920, 1.1283791
    %v1922 = vmul.f32 %v1749, %v1921
    %v1923 = vmul.f32 %v1911, 3.8918573e-05
    %v1924 = vadd.f32 %v1923, 0.001143296
    %v1925 = vmul.f32 %v1911, %v1924
    %v1926 = vadd.f32 %v1925, 0.014752088
    %v1927 = vmul.f32 %v1911, %v1926
    %v1928 = vadd.f32 %v1927, 0.112945676
    %v1929 = vmul.f32 %v1911, %v1928
    %v1930 = vadd.f32 %v1929, 0.4994258
    %v1931 = vmul.f32 %v1911, %v1930
    %v1932 = vadd.f32 %v1931, 1.0
    %v1933 = vrcp.pop %v1932
    %v1934 = vmul.f32 %v1932, %v1933
    %v1935 = vsub.f32 1.0, %v1934
    %v1936 = vmul.f32 %v1933, %v1935
    %v1937 = vadd.f32 %v1933, %v1936
    %vm1938 = vweird.f32 %v1932
    %vm1939 = vweird.f32 %v1933
    %vm1940 = vmor %vm1938, %vm1939
    %v1941 = vsel %vm1940, %v1933, %v1937
    %v1942 = vand.u32 2147483647, %v1932
    %vm1943 = vcmp.eq.f32.partialorder %v1942, 8.507059e+37
    %v1944 = vand.u32 %v1932, 2147483648
    %v1945 = vor.u32 1.1754944e-38, %v1944
    %v1946 = vsel %vm1943, %v1945, %v1941
    %v1947 = vmul.f32 %v1922, %v1946
    %v1948 = vmin.f32 %v1947, 1.0
    %v1949 = vmax.f32 %v1948, -1.0
    %v1950 = vadd.f32 %v1789, 1.0
    %v1951 = vadd.f32 %v1829, 1.0
    %v1952 = vadd.f32 %v1869, 1.0
    %v1953 = vadd.f32 %v1909, 1.0
    %v1954 = vadd.f32 %v1949, 1.0
    %v1955 = vmul.f32 %v1740, %v1950
    %v1956 = vmul.f32 %v1741, %v1951
    %v1957 = vmul.f32 %v1742, %v1952
    %v1958 = vmul.f32 %v1743, %v1953
    %v1959 = vmul.f32 %v1744, %v1954
    %v1960 = vld [vmem:[%s41] sm:$0xff]
    %v1961 = vld [vmem:[%s41 + $0x8] sm:$0xff]
    %v1962 = vld [vmem:[%s41 + $0x10] sm:$0xff]
    %v1963 = vld [vmem:[%s41 + $0x18] sm:$0xff]
    %v1964 = vld [vmem:[%s41 + $0x20] sm:$0xff]
    %v1965 = vld [vmem:[%s41 + $0x28] sm:$0xff]
    %v1966 = vld [vmem:[%s41 + $0x30] sm:$0xff]
    %v1967 = vld [vmem:[%s41 + $0x38] sm:$0xff]
    %vm1968 = vcmask 523264
    %v1970 = vsel %vm1968, %v1955, 0
    %v1973 = vsel %vm1968, %v1956, 0
    %v1976 = vsel %vm1968, %v1957, 0
    %v1979 = vsel %vm1968, %v1958, 0
    %v1982 = vsel %vm1968, %v1959, 0
    %1984 = vmatpush.msra.mxu0 0.0
    %1985 = vmatpush.msra.mxu0 0.0
    %1986 = vmatpush.msra.mxu0 0.0
    %1987 = vmatpush.msra.mxu0 0.0
    %1988 = vmatpush.msra.mxu0 0.0
    %1989 = vmatpush.msra.mxu0 0.0
    %1990 = vmatpush.msra.mxu0 0.0
    %1991 = vmatpush.msra.mxu0 0.0
    %1992 = vmatpush.msra.mxu0 %v1967
    %1993 = vmatpush.msra.mxu0 %v1966
    %1994 = vmatpush.msra.mxu0 %v1965
    %1995 = vmatpush.msra.mxu0 %v1964
    %1996 = vmatpush.msra.mxu0 %v1963
    %1997 = vmatpush.msra.mxu0 %v1962
    %1998 = vmatpush.msra.mxu0 %v1961
    %1999 = vmatpush.msra.mxu0 %v1960
    %2000 = vmatmul.f32.gmra.mxu0 %v1970
    %v2001 = vpop.f32.mrf.mxu0
    %v2002 = vadd.f32 0.0, %v2001
    %2003 = vmatmul.f32.gmra.mxu0 %v1973
    %v2004 = vpop.f32.mrf.mxu0
    %v2005 = vadd.f32 0.0, %v2004
    %2006 = vmatmul.f32.gmra.mxu0 %v1976
    %v2007 = vpop.f32.mrf.mxu0
    %v2008 = vadd.f32 0.0, %v2007
    %2009 = vmatmul.f32.gmra.mxu0 %v1979
    %v2010 = vpop.f32.mrf.mxu0
    %v2011 = vadd.f32 0.0, %v2010
    %2012 = vmatmul.f32.gmra.mxu0 %v1982
    %v2013 = vpop.f32.mrf.mxu0
    %v2014 = vadd.f32 0.0, %v2013
    %2015 = vdwg.mxu0
    %v2016 = vadd.f32 %v1552, %v2002
    %v2017 = vadd.f32 %v1553, %v2005
    %v2018 = vadd.f32 %v1554, %v2008
    %v2019 = vadd.f32 %v1555, %v2011
    %v2020 = vadd.f32 %v1556, %v2014
    %v2021 = vld [vmem:[%s43] sm:$0x1]
    %v2023 = vperm.slane %v2021, 0
    %v2025 = vadd.f32 %v2016, %v2023
    %v2026 = vadd.f32 %v2017, %v2023
    %v2027 = vadd.f32 %v2018, %v2023
    %v2028 = vadd.f32 %v2019, %v2023
    %v2029 = vadd.f32 %v2020, %v2023
    %s2030 = scalar_lea.vmem %s21, 1
    %v2031 = vld [vmem:[%s2030] sm:$0x1]
    %s2032 = scalar_lea.vmem %s23, 1
    %v2033 = vld [vmem:[%s2032] sm:$0x1]
    %v2034 = vsel %vm227, %v2025, 0.0
    %2035 = vadd.xlane.f32.xlu0 %v2034
    %v2036 = vpop.xlane.xlu0 %2035
    %v2037 = vsel %vm227, %v2026, 0.0
    %2038 = vadd.xlane.f32.xlu0 %v2037
    %v2039 = vpop.xlane.xlu0 %2038
    %v2040 = vsel %vm227, %v2027, 0.0
    %2041 = vadd.xlane.f32.xlu0 %v2040
    %v2042 = vpop.xlane.xlu0 %2041
    %v2043 = vsel %vm227, %v2028, 0.0
    %2044 = vadd.xlane.f32.xlu0 %v2043
    %v2045 = vpop.xlane.xlu0 %2044
    %v2046 = vsel %vm359, %v2029, 0.0
    %2047 = vadd.xlane.f32.xlu0 %v2046
    %v2048 = vpop.xlane.xlu0 %2047
    %v2049 = vmul.f32 %v2036, %v369
    %v2050 = vmul.f32 %v2039, %v369
    %v2051 = vmul.f32 %v2042, %v369
    %v2052 = vmul.f32 %v2045, %v369
    %v2053 = vmul.f32 %v2048, %v369
    %v2054 = vsub.f32 %v2025, %v2049
    %v2055 = vsub.f32 %v2026, %v2050
    %v2056 = vsub.f32 %v2027, %v2051
    %v2057 = vsub.f32 %v2028, %v2052
    %v2058 = vsub.f32 %v2029, %v2053
    %v2059 = vmul.f32 %v2054, %v2054
    %v2060 = vmul.f32 %v2055, %v2055
    %v2061 = vmul.f32 %v2056, %v2056
    %v2062 = vmul.f32 %v2057, %v2057
    %v2063 = vmul.f32 %v2058, %v2058
    %v2064 = vsel %vm227, %v2059, 0.0
    %2065 = vadd.xlane.f32.xlu0 %v2064
    %v2066 = vpop.xlane.xlu0 %2065
    %v2067 = vsel %vm227, %v2060, 0.0
    %2068 = vadd.xlane.f32.xlu0 %v2067
    %v2069 = vpop.xlane.xlu0 %2068
    %v2070 = vsel %vm227, %v2061, 0.0
    %2071 = vadd.xlane.f32.xlu0 %v2070
    %v2072 = vpop.xlane.xlu0 %2071
    %v2073 = vsel %vm227, %v2062, 0.0
    %2074 = vadd.xlane.f32.xlu0 %v2073
    %v2075 = vpop.xlane.xlu0 %2074
    %v2076 = vsel %vm359, %v2063, 0.0
    %2077 = vadd.xlane.f32.xlu0 %v2076
    %v2078 = vpop.xlane.xlu0 %2077
    %v2079 = vmul.f32 %v2066, %v369
    %v2080 = vmul.f32 %v2069, %v369
    %v2081 = vmul.f32 %v2072, %v369
    %v2082 = vmul.f32 %v2075, %v369
    %v2083 = vmul.f32 %v2078, %v369
    %v2084 = vadd.f32 %v2079, 1e-12
    %v2085 = vadd.f32 %v2080, 1e-12
    %v2086 = vadd.f32 %v2081, 1e-12
    %v2087 = vadd.f32 %v2082, 1e-12
    %v2088 = vadd.f32 %v2083, 1e-12
    %v2089 = vrsqrt.pop %v2084
    %v2090 = vmul.f32 %v2089, %v2084
    %v2091 = vmul.f32 %v2090, %v2089
    %v2092 = vmul.f32 0.5, %v2091
    %v2093 = vsub.f32 1.5, %v2092
    %v2094 = vmul.f32 %v2089, %v2093
    %vm2095 = vweird.f32 %v2084
    %vm2096 = vweird.f32 %v2089
    %vm2097 = vmor %vm2095, %vm2096
    %v2098 = vsel %vm2097, %v2089, %v2094
    %v2099 = vrsqrt.pop %v2085
    %v2100 = vmul.f32 %v2099, %v2085
    %v2101 = vmul.f32 %v2100, %v2099
    %v2102 = vmul.f32 0.5, %v2101
    %v2103 = vsub.f32 1.5, %v2102
    %v2104 = vmul.f32 %v2099, %v2103
    %vm2105 = vweird.f32 %v2085
    %vm2106 = vweird.f32 %v2099
    %vm2107 = vmor %vm2105, %vm2106
    %v2108 = vsel %vm2107, %v2099, %v2104
    %v2109 = vrsqrt.pop %v2086
    %v2110 = vmul.f32 %v2109, %v2086
    %v2111 = vmul.f32 %v2110, %v2109
    %v2112 = vmul.f32 0.5, %v2111
    %v2113 = vsub.f32 1.5, %v2112
    %v2114 = vmul.f32 %v2109, %v2113
    %vm2115 = vweird.f32 %v2086
    %vm2116 = vweird.f32 %v2109
    %vm2117 = vmor %vm2115, %vm2116
    %v2118 = vsel %vm2117, %v2109, %v2114
    %v2119 = vrsqrt.pop %v2087
    %v2120 = vmul.f32 %v2119, %v2087
    %v2121 = vmul.f32 %v2120, %v2119
    %v2122 = vmul.f32 0.5, %v2121
    %v2123 = vsub.f32 1.5, %v2122
    %v2124 = vmul.f32 %v2119, %v2123
    %vm2125 = vweird.f32 %v2087
    %vm2126 = vweird.f32 %v2119
    %vm2127 = vmor %vm2125, %vm2126
    %v2128 = vsel %vm2127, %v2119, %v2124
    %v2129 = vrsqrt.pop %v2088
    %v2130 = vmul.f32 %v2129, %v2088
    %v2131 = vmul.f32 %v2130, %v2129
    %v2132 = vmul.f32 0.5, %v2131
    %v2133 = vsub.f32 1.5, %v2132
    %v2134 = vmul.f32 %v2129, %v2133
    %vm2135 = vweird.f32 %v2088
    %vm2136 = vweird.f32 %v2129
    %vm2137 = vmor %vm2135, %vm2136
    %v2138 = vsel %vm2137, %v2129, %v2134
    %v2139 = vmul.f32 %v2054, %v2098
    %v2140 = vmul.f32 %v2055, %v2108
    %v2141 = vmul.f32 %v2056, %v2118
    %v2142 = vmul.f32 %v2057, %v2128
    %v2143 = vmul.f32 %v2058, %v2138
    %v2145 = vperm.slane %v2031, 0
    %v2147 = vmul.f32 %v2139, %v2145
    %v2148 = vmul.f32 %v2140, %v2145
    %v2149 = vmul.f32 %v2141, %v2145
    %v2150 = vmul.f32 %v2142, %v2145
    %v2151 = vmul.f32 %v2143, %v2145
    %v2153 = vperm.slane %v2033, 0
    %v2155 = vadd.f32 %v2147, %v2153
    %v2156 = vadd.f32 %v2148, %v2153
    %v2157 = vadd.f32 %v2149, %v2153
    %v2158 = vadd.f32 %v2150, %v2153
    %v2159 = vadd.f32 %v2151, %v2153
    %s2160 = scalar_lea.vmem %s25, 32
    %v2161 = vld [vmem:[%s2160] sm:$0xff]
    %v2162 = vld [vmem:[%s2160 + $0x8] sm:$0xff]
    %v2163 = vld [vmem:[%s2160 + $0x10] sm:$0xff]
    %v2164 = vld [vmem:[%s2160 + $0x18] sm:$0xff]
    %s2165 = scalar_lea.vmem %s27, 1
    %v2166 = vld [vmem:[%s2165] sm:$0x1]
    %v2168 = vperm.slane %v2166, 0
    %v2171 = vsel %vm227, %v2155, 0
    %v2174 = vsel %vm227, %v2156, 0
    %v2177 = vsel %vm227, %v2157, 0
    %v2180 = vsel %vm227, %v2158, 0
    %v2183 = vsel %vm227, %v2159, 0
    %2185 = vmatpush.msra.mxu0 0.0
    %2186 = vmatpush.msra.mxu0 0.0
    %2187 = vmatpush.msra.mxu0 0.0
    %2188 = vmatpush.msra.mxu0 0.0
    %2189 = vmatpush.msra.mxu0 0.0
    %2190 = vmatpush.msra.mxu0 0.0
    %2191 = vmatpush.msra.mxu0 0.0
    %2192 = vmatpush.msra.mxu0 0.0
    %2193 = vmatpush.msra.mxu0 0.0
    %2194 = vmatpush.msra.mxu0 0.0
    %2195 = vmatpush.msra.mxu0 0.0
    %2196 = vmatpush.msra.mxu0 0.0
    %2197 = vmatpush.msra.mxu0 %v2164
    %2198 = vmatpush.msra.mxu0 %v2163
    %2199 = vmatpush.msra.mxu0 %v2162
    %2200 = vmatpush.msra.mxu0 %v2161
    %2201 = vmatmul.f32.gmra.mxu0 %v2171
    %v2202 = vpop.f32.mrf.mxu0
    %v2203 = vadd.f32 %v2168, %v2202
    %2204 = vmatmul.f32.gmra.mxu0 %v2174
    %v2205 = vpop.f32.mrf.mxu0
    %v2206 = vadd.f32 %v2168, %v2205
    %2207 = vmatmul.f32.gmra.mxu0 %v2177
    %v2208 = vpop.f32.mrf.mxu0
    %v2209 = vadd.f32 %v2168, %v2208
    %2210 = vmatmul.f32.gmra.mxu0 %v2180
    %v2211 = vpop.f32.mrf.mxu0
    %v2212 = vadd.f32 %v2168, %v2211
    %2213 = vmatmul.f32.gmra.mxu0 %v2183
    %v2214 = vpop.f32.mrf.mxu0
    %v2215 = vadd.f32 %v2168, %v2214
    %2216 = vdwg.mxu0
    %s2217 = scalar_lea.vmem %s29, 32
    %v2218 = vld [vmem:[%s2217] sm:$0xff]
    %v2219 = vld [vmem:[%s2217 + $0x8] sm:$0xff]
    %v2220 = vld [vmem:[%s2217 + $0x10] sm:$0xff]
    %v2221 = vld [vmem:[%s2217 + $0x18] sm:$0xff]
    %s2222 = scalar_lea.vmem %s31, 1
    %v2223 = vld [vmem:[%s2222] sm:$0x1]
    %v2225 = vperm.slane %v2223, 0
    %v2227 = vadd.f32 %v2225, 0.0
    %2233 = vrot.lane.b32.xlu0 %v2203, 96
    %v2234 = vpop.permute.xlu0 %2233
    %2235 = vrot.lane.b32.xlu0 %v2206, 96
    %v2236 = vpop.permute.xlu0 %2235
    %2237 = vrot.lane.b32.xlu0 %v2209, 96
    %v2238 = vpop.permute.xlu0 %2237
    %2239 = vrot.lane.b32.xlu0 %v2212, 96
    %v2240 = vpop.permute.xlu0 %2239
    %2241 = vrot.lane.b32.xlu0 %v2215, 96
    %v2242 = vpop.permute.xlu0 %2241
    %v2243 = vsel %vm560, %v2203, 0
    %v2245 = vsel %vm560, %v2206, 0
    %v2247 = vsel %vm560, %v2209, 0
    %v2249 = vsel %vm560, %v2212, 0
    %v2251 = vsel %vm560, %v2215, 0
    %v2253 = vsel %vm560, %v2234, 0
    %v2255 = vsel %vm560, %v2236, 0
    %v2257 = vsel %vm560, %v2238, 0
    %v2259 = vsel %vm560, %v2240, 0
    %v2261 = vsel %vm560, %v2242, 0
    %2263 = vmatpush.xpose.msra.mxu0 0.0
    %2264 = vmatpush.xpose.msra.mxu0 0.0
    %2265 = vmatpush.xpose.msra.mxu0 0.0
    %2266 = vmatpush.xpose.msra.mxu0 0.0
    %2267 = vmatpush.xpose.msra.mxu0 0.0
    %2268 = vmatpush.xpose.msra.mxu0 0.0
    %2269 = vmatpush.xpose.msra.mxu0 0.0
    %2270 = vmatpush.xpose.msra.mxu0 0.0
    %2271 = vmatpush.xpose.msra.mxu0 0.0
    %2272 = vmatpush.xpose.msra.mxu0 0.0
    %2273 = vmatpush.xpose.msra.mxu0 0.0
    %2274 = vmatpush.xpose.msra.mxu0 %v2261
    %2275 = vmatpush.xpose.msra.mxu0 %v2259
    %2276 = vmatpush.xpose.msra.mxu0 %v2257
    %2277 = vmatpush.xpose.msra.mxu0 %v2255
    %2278 = vmatpush.xpose.msra.mxu0 %v2253
    %2279 = vmatmul.f32.gmra.mxu0 %v2243
    %v2280 = vpop.f32.mrf.mxu0
    %v2281 = vadd.f32 0.0, %v2280
    %2282 = vmatmul.f32.gmra.mxu0 %v2245
    %v2283 = vpop.f32.mrf.mxu0
    %v2284 = vadd.f32 0.0, %v2283
    %2285 = vmatmul.f32.gmra.mxu0 %v2247
    %v2286 = vpop.f32.mrf.mxu0
    %v2287 = vadd.f32 0.0, %v2286
    %2288 = vmatmul.f32.gmra.mxu0 %v2249
    %v2289 = vpop.f32.mrf.mxu0
    %v2290 = vadd.f32 0.0, %v2289
    %2291 = vmatmul.f32.gmra.mxu0 %v2251
    %v2292 = vpop.f32.mrf.mxu0
    %v2293 = vadd.f32 0.0, %v2292
    %2294 = vdwg.mxu0
    %v2295 = vmul.f32 %v2281, 0.35355338
    %v2296 = vmul.f32 %v2284, 0.35355338
    %v2297 = vmul.f32 %v2287, 0.35355338
    %v2298 = vmul.f32 %v2290, 0.35355338
    %v2299 = vmul.f32 %v2293, 0.35355338
    %v2300 = vadd.f32 %v2295, %v340
    %v2301 = vadd.f32 %v2296, %v341
    %v2302 = vadd.f32 %v2297, %v342
    %v2303 = vadd.f32 %v2298, %v343
    %v2304 = vadd.f32 %v2299, %v344
    %v2305 = vsel %vm623, %v2300, -inf
    %2306 = vmax.xlane.f32.xlu0 %v2305
    %v2307 = vpop.xlane.xlu0 %2306
    %v2308 = vsel %vm623, %v2301, -inf
    %2309 = vmax.xlane.f32.xlu0 %v2308
    %v2310 = vpop.xlane.xlu0 %2309
    %v2311 = vsel %vm623, %v2302, -inf
    %2312 = vmax.xlane.f32.xlu0 %v2311
    %v2313 = vpop.xlane.xlu0 %2312
    %v2314 = vsel %vm623, %v2303, -inf
    %2315 = vmax.xlane.f32.xlu0 %v2314
    %v2316 = vpop.xlane.xlu0 %2315
    %v2317 = vsel %vm636, %v2304, -inf
    %2318 = vmax.xlane.f32.xlu0 %v2317
    %v2319 = vpop.xlane.xlu0 %2318
    %v2320 = vsub.f32 %v2300, %v2307
    %v2321 = vsub.f32 %v2301, %v2310
    %v2322 = vsub.f32 %v2302, %v2313
    %v2323 = vsub.f32 %v2303, %v2316
    %v2324 = vsub.f32 %v2304, %v2319
    %v2325 = vmul.f32 %v2320, 1.442695
    %v2326 = vpow.pop %v2325
    %v2327 = vmul.f32 %v2321, 1.442695
    %v2328 = vpow.pop %v2327
    %v2329 = vmul.f32 %v2322, 1.442695
    %v2330 = vpow.pop %v2329
    %v2331 = vmul.f32 %v2323, 1.442695
    %v2332 = vpow.pop %v2331
    %v2333 = vmul.f32 %v2324, 1.442695
    %v2334 = vpow.pop %v2333
    %v2335 = vsel %vm623, %v2326, 0.0
    %2336 = vadd.xlane.f32.xlu0 %v2335
    %v2337 = vpop.xlane.xlu0 %2336
    %v2338 = vsel %vm623, %v2328, 0.0
    %2339 = vadd.xlane.f32.xlu0 %v2338
    %v2340 = vpop.xlane.xlu0 %2339
    %v2341 = vsel %vm623, %v2330, 0.0
    %2342 = vadd.xlane.f32.xlu0 %v2341
    %v2343 = vpop.xlane.xlu0 %2342
    %v2344 = vsel %vm623, %v2332, 0.0
    %2345 = vadd.xlane.f32.xlu0 %v2344
    %v2346 = vpop.xlane.xlu0 %2345
    %v2347 = vsel %vm636, %v2334, 0.0
    %2348 = vadd.xlane.f32.xlu0 %v2347
    %v2349 = vpop.xlane.xlu0 %2348
    %v2350 = vrcp.pop %v2337
    %v2351 = vrcp.pop %v2340
    %v2352 = vrcp.pop %v2343
    %v2353 = vrcp.pop %v2346
    %v2354 = vrcp.pop %v2349
    %v2355 = vmul.f32 %v2326, %v2350
    %v2356 = vmul.f32 %v2328, %v2351
    %v2357 = vmul.f32 %v2330, %v2352
    %v2358 = vmul.f32 %v2332, %v2353
    %v2359 = vmul.f32 %v2334, %v2354
    %2360 = vrot.lane.b32.xlu0 %v2203, 64
    %v2361 = vpop.permute.xlu0 %2360
    %2362 = vrot.lane.b32.xlu0 %v2206, 64
    %v2363 = vpop.permute.xlu0 %2362
    %2364 = vrot.lane.b32.xlu0 %v2209, 64
    %v2365 = vpop.permute.xlu0 %2364
    %2366 = vrot.lane.b32.xlu0 %v2212, 64
    %v2367 = vpop.permute.xlu0 %2366
    %2368 = vrot.lane.b32.xlu0 %v2215, 64
    %v2369 = vpop.permute.xlu0 %2368
    %v2375 = vsel %vm623, %v2355, 0
    %v2378 = vsel %vm623, %v2356, 0
    %v2381 = vsel %vm623, %v2357, 0
    %v2384 = vsel %vm623, %v2358, 0
    %v2387 = vsel %vm623, %v2359, 0
    %v2389 = vsel %vm709, %v2369, 0
    %2391 = vmatpush.msra.mxu0 0.0
    %2392 = vmatpush.msra.mxu0 0.0
    %2393 = vmatpush.msra.mxu0 0.0
    %2394 = vmatpush.msra.mxu0 0.0
    %2395 = vmatpush.msra.mxu0 0.0
    %2396 = vmatpush.msra.mxu0 0.0
    %2397 = vmatpush.msra.mxu0 0.0
    %2398 = vmatpush.msra.mxu0 0.0
    %2399 = vmatpush.msra.mxu0 0.0
    %2400 = vmatpush.msra.mxu0 0.0
    %2401 = vmatpush.msra.mxu0 0.0
    %2402 = vmatpush.msra.mxu0 %v2389
    %2403 = vmatpush.msra.mxu0 %v2367
    %2404 = vmatpush.msra.mxu0 %v2365
    %2405 = vmatpush.msra.mxu0 %v2363
    %2406 = vmatpush.msra.mxu0 %v2361
    %2407 = vmatmul.f32.gmra.mxu0 %v2375
    %v2408 = vpop.f32.mrf.mxu0
    %v2409 = vadd.f32 0.0, %v2408
    %2410 = vmatmul.f32.gmra.mxu0 %v2378
    %v2411 = vpop.f32.mrf.mxu0
    %v2412 = vadd.f32 0.0, %v2411
    %2413 = vmatmul.f32.gmra.mxu0 %v2381
    %v2414 = vpop.f32.mrf.mxu0
    %v2415 = vadd.f32 0.0, %v2414
    %2416 = vmatmul.f32.gmra.mxu0 %v2384
    %v2417 = vpop.f32.mrf.mxu0
    %v2418 = vadd.f32 0.0, %v2417
    %2419 = vmatmul.f32.gmra.mxu0 %v2387
    %v2420 = vpop.f32.mrf.mxu0
    %v2421 = vadd.f32 0.0, %v2420
    %2422 = vdwg.mxu0
    %v2424 = vsel %vm560, %v2409, 0
    %v2427 = vsel %vm560, %v2412, 0
    %v2430 = vsel %vm560, %v2415, 0
    %v2433 = vsel %vm560, %v2418, 0
    %v2436 = vsel %vm560, %v2421, 0
    %2438 = vmatpush.msra.mxu0 0.0
    %2439 = vmatpush.msra.mxu0 0.0
    %2440 = vmatpush.msra.mxu0 0.0
    %2441 = vmatpush.msra.mxu0 0.0
    %2442 = vmatpush.msra.mxu0 0.0
    %2443 = vmatpush.msra.mxu0 0.0
    %2444 = vmatpush.msra.mxu0 0.0
    %2445 = vmatpush.msra.mxu0 0.0
    %2446 = vmatpush.msra.mxu0 0.0
    %2447 = vmatpush.msra.mxu0 0.0
    %2448 = vmatpush.msra.mxu0 0.0
    %2449 = vmatpush.msra.mxu0 0.0
    %2450 = vmatpush.msra.mxu0 0.0
    %2451 = vmatpush.msra.mxu0 0.0
    %2452 = vmatpush.msra.mxu0 0.0
    %2453 = vmatpush.msra.mxu0 %v2218
    %2454 = vmatmul.f32.gmra.mxu0 %v2424
    %v2455 = vpop.f32.mrf.mxu0
    %v2456 = vadd.f32 0.0, %v2455
    %2457 = vmatmul.f32.gmra.mxu0 %v2427
    %v2458 = vpop.f32.mrf.mxu0
    %v2459 = vadd.f32 0.0, %v2458
    %2460 = vmatmul.f32.gmra.mxu0 %v2430
    %v2461 = vpop.f32.mrf.mxu0
    %v2462 = vadd.f32 0.0, %v2461
    %2463 = vmatmul.f32.gmra.mxu0 %v2433
    %v2464 = vpop.f32.mrf.mxu0
    %v2465 = vadd.f32 0.0, %v2464
    %2466 = vmatmul.f32.gmra.mxu0 %v2436
    %v2467 = vpop.f32.mrf.mxu0
    %v2468 = vadd.f32 0.0, %v2467
    %2469 = vdwg.mxu0
    %v2470 = vadd.f32 %v2227, %v2456
    %v2471 = vadd.f32 %v2227, %v2459
    %v2472 = vadd.f32 %v2227, %v2462
    %v2473 = vadd.f32 %v2227, %v2465
    %v2474 = vadd.f32 %v2227, %v2468
    %2475 = vrot.lane.b32.xlu0 %v2203, 120
    %v2476 = vpop.permute.xlu0 %2475
    %2477 = vrot.lane.b32.xlu0 %v2206, 120
    %v2478 = vpop.permute.xlu0 %2477
    %2479 = vrot.lane.b32.xlu0 %v2209, 120
    %v2480 = vpop.permute.xlu0 %2479
    %2481 = vrot.lane.b32.xlu0 %v2212, 120
    %v2482 = vpop.permute.xlu0 %2481
    %2483 = vrot.lane.b32.xlu0 %v2215, 120
    %v2484 = vpop.permute.xlu0 %2483
    %2485 = vrot.lane.b32.xlu0 %v2203, 88
    %v2486 = vpop.permute.xlu0 %2485
    %2487 = vrot.lane.b32.xlu0 %v2206, 88
    %v2488 = vpop.permute.xlu0 %2487
    %2489 = vrot.lane.b32.xlu0 %v2209, 88
    %v2490 = vpop.permute.xlu0 %2489
    %2491 = vrot.lane.b32.xlu0 %v2212, 88
    %v2492 = vpop.permute.xlu0 %2491
    %2493 = vrot.lane.b32.xlu0 %v2215, 88
    %v2494 = vpop.permute.xlu0 %2493
    %v2495 = vsel %vm560, %v2476, 0
    %v2497 = vsel %vm560, %v2478, 0
    %v2499 = vsel %vm560, %v2480, 0
    %v2501 = vsel %vm560, %v2482, 0
    %v2503 = vsel %vm560, %v2484, 0
    %v2505 = vsel %vm560, %v2486, 0
    %v2507 = vsel %vm560, %v2488, 0
    %v2509 = vsel %vm560, %v2490, 0
    %v2511 = vsel %vm560, %v2492, 0
    %v2513 = vsel %vm560, %v2494, 0
    %2515 = vmatpush.xpose.msra.mxu0 0.0
    %2516 = vmatpush.xpose.msra.mxu0 0.0
    %2517 = vmatpush.xpose.msra.mxu0 0.0
    %2518 = vmatpush.xpose.msra.mxu0 0.0
    %2519 = vmatpush.xpose.msra.mxu0 0.0
    %2520 = vmatpush.xpose.msra.mxu0 0.0
    %2521 = vmatpush.xpose.msra.mxu0 0.0
    %2522 = vmatpush.xpose.msra.mxu0 0.0
    %2523 = vmatpush.xpose.msra.mxu0 0.0
    %2524 = vmatpush.xpose.msra.mxu0 0.0
    %2525 = vmatpush.xpose.msra.mxu0 0.0
    %2526 = vmatpush.xpose.msra.mxu0 %v2513
    %2527 = vmatpush.xpose.msra.mxu0 %v2511
    %2528 = vmatpush.xpose.msra.mxu0 %v2509
    %2529 = vmatpush.xpose.msra.mxu0 %v2507
    %2530 = vmatpush.xpose.msra.mxu0 %v2505
    %2531 = vmatmul.f32.gmra.mxu0 %v2495
    %v2532 = vpop.f32.mrf.mxu0
    %v2533 = vadd.f32 0.0, %v2532
    %2534 = vmatmul.f32.gmra.mxu0 %v2497
    %v2535 = vpop.f32.mrf.mxu0
    %v2536 = vadd.f32 0.0, %v2535
    %2537 = vmatmul.f32.gmra.mxu0 %v2499
    %v2538 = vpop.f32.mrf.mxu0
    %v2539 = vadd.f32 0.0, %v2538
    %2540 = vmatmul.f32.gmra.mxu0 %v2501
    %v2541 = vpop.f32.mrf.mxu0
    %v2542 = vadd.f32 0.0, %v2541
    %2543 = vmatmul.f32.gmra.mxu0 %v2503
    %v2544 = vpop.f32.mrf.mxu0
    %v2545 = vadd.f32 0.0, %v2544
    %2546 = vdwg.mxu0
    %v2547 = vmul.f32 %v2533, 0.35355338
    %v2548 = vmul.f32 %v2536, 0.35355338
    %v2549 = vmul.f32 %v2539, 0.35355338
    %v2550 = vmul.f32 %v2542, 0.35355338
    %v2551 = vmul.f32 %v2545, 0.35355338
    %v2552 = vadd.f32 %v2547, %v340
    %v2553 = vadd.f32 %v2548, %v341
    %v2554 = vadd.f32 %v2549, %v342
    %v2555 = vadd.f32 %v2550, %v343
    %v2556 = vadd.f32 %v2551, %v344
    %v2557 = vsel %vm623, %v2552, -inf
    %2558 = vmax.xlane.f32.xlu0 %v2557
    %v2559 = vpop.xlane.xlu0 %2558
    %v2560 = vsel %vm623, %v2553, -inf
    %2561 = vmax.xlane.f32.xlu0 %v2560
    %v2562 = vpop.xlane.xlu0 %2561
    %v2563 = vsel %vm623, %v2554, -inf
    %2564 = vmax.xlane.f32.xlu0 %v2563
    %v2565 = vpop.xlane.xlu0 %2564
    %v2566 = vsel %vm623, %v2555, -inf
    %2567 = vmax.xlane.f32.xlu0 %v2566
    %v2568 = vpop.xlane.xlu0 %2567
    %v2569 = vsel %vm636, %v2556, -inf
    %2570 = vmax.xlane.f32.xlu0 %v2569
    %v2571 = vpop.xlane.xlu0 %2570
    %v2572 = vsub.f32 %v2552, %v2559
    %v2573 = vsub.f32 %v2553, %v2562
    %v2574 = vsub.f32 %v2554, %v2565
    %v2575 = vsub.f32 %v2555, %v2568
    %v2576 = vsub.f32 %v2556, %v2571
    %v2577 = vmul.f32 %v2572, 1.442695
    %v2578 = vpow.pop %v2577
    %v2579 = vmul.f32 %v2573, 1.442695
    %v2580 = vpow.pop %v2579
    %v2581 = vmul.f32 %v2574, 1.442695
    %v2582 = vpow.pop %v2581
    %v2583 = vmul.f32 %v2575, 1.442695
    %v2584 = vpow.pop %v2583
    %v2585 = vmul.f32 %v2576, 1.442695
    %v2586 = vpow.pop %v2585
    %v2587 = vsel %vm623, %v2578, 0.0
    %2588 = vadd.xlane.f32.xlu0 %v2587
    %v2589 = vpop.xlane.xlu0 %2588
    %v2590 = vsel %vm623, %v2580, 0.0
    %2591 = vadd.xlane.f32.xlu0 %v2590
    %v2592 = vpop.xlane.xlu0 %2591
    %v2593 = vsel %vm623, %v2582, 0.0
    %2594 = vadd.xlane.f32.xlu0 %v2593
    %v2595 = vpop.xlane.xlu0 %2594
    %v2596 = vsel %vm623, %v2584, 0.0
    %2597 = vadd.xlane.f32.xlu0 %v2596
    %v2598 = vpop.xlane.xlu0 %2597
    %v2599 = vsel %vm636, %v2586, 0.0
    %2600 = vadd.xlane.f32.xlu0 %v2599
    %v2601 = vpop.xlane.xlu0 %2600
    %v2602 = vrcp.pop %v2589
    %v2603 = vrcp.pop %v2592
    %v2604 = vrcp.pop %v2595
    %v2605 = vrcp.pop %v2598
    %v2606 = vrcp.pop %v2601
    %v2607 = vmul.f32 %v2578, %v2602
    %v2608 = vmul.f32 %v2580, %v2603
    %v2609 = vmul.f32 %v2582, %v2604
    %v2610 = vmul.f32 %v2584, %v2605
    %v2611 = vmul.f32 %v2586, %v2606
    %2612 = vrot.lane.b32.xlu0 %v2203, 56
    %v2613 = vpop.permute.xlu0 %2612
    %2614 = vrot.lane.b32.xlu0 %v2206, 56
    %v2615 = vpop.permute.xlu0 %2614
    %2616 = vrot.lane.b32.xlu0 %v2209, 56
    %v2617 = vpop.permute.xlu0 %2616
    %2618 = vrot.lane.b32.xlu0 %v2212, 56
    %v2619 = vpop.permute.xlu0 %2618
    %2620 = vrot.lane.b32.xlu0 %v2215, 56
    %v2621 = vpop.permute.xlu0 %2620
    %v2627 = vsel %vm623, %v2607, 0
    %v2630 = vsel %vm623, %v2608, 0
    %v2633 = vsel %vm623, %v2609, 0
    %v2636 = vsel %vm623, %v2610, 0
    %v2639 = vsel %vm623, %v2611, 0
    %v2641 = vsel %vm709, %v2621, 0
    %2643 = vmatpush.msra.mxu0 0.0
    %2644 = vmatpush.msra.mxu0 0.0
    %2645 = vmatpush.msra.mxu0 0.0
    %2646 = vmatpush.msra.mxu0 0.0
    %2647 = vmatpush.msra.mxu0 0.0
    %2648 = vmatpush.msra.mxu0 0.0
    %2649 = vmatpush.msra.mxu0 0.0
    %2650 = vmatpush.msra.mxu0 0.0
    %2651 = vmatpush.msra.mxu0 0.0
    %2652 = vmatpush.msra.mxu0 0.0
    %2653 = vmatpush.msra.mxu0 0.0
    %2654 = vmatpush.msra.mxu0 %v2641
    %2655 = vmatpush.msra.mxu0 %v2619
    %2656 = vmatpush.msra.mxu0 %v2617
    %2657 = vmatpush.msra.mxu0 %v2615
    %2658 = vmatpush.msra.mxu0 %v2613
    %2659 = vmatmul.f32.gmra.mxu0 %v2627
    %v2660 = vpop.f32.mrf.mxu0
    %v2661 = vadd.f32 0.0, %v2660
    %2662 = vmatmul.f32.gmra.mxu0 %v2630
    %v2663 = vpop.f32.mrf.mxu0
    %v2664 = vadd.f32 0.0, %v2663
    %2665 = vmatmul.f32.gmra.mxu0 %v2633
    %v2666 = vpop.f32.mrf.mxu0
    %v2667 = vadd.f32 0.0, %v2666
    %2668 = vmatmul.f32.gmra.mxu0 %v2636
    %v2669 = vpop.f32.mrf.mxu0
    %v2670 = vadd.f32 0.0, %v2669
    %2671 = vmatmul.f32.gmra.mxu0 %v2639
    %v2672 = vpop.f32.mrf.mxu0
    %v2673 = vadd.f32 0.0, %v2672
    %2674 = vdwg.mxu0
    %v2676 = vsel %vm560, %v2661, 0
    %v2679 = vsel %vm560, %v2664, 0
    %v2682 = vsel %vm560, %v2667, 0
    %v2685 = vsel %vm560, %v2670, 0
    %v2688 = vsel %vm560, %v2673, 0
    %2690 = vmatpush.msra.mxu0 0.0
    %2691 = vmatpush.msra.mxu0 0.0
    %2692 = vmatpush.msra.mxu0 0.0
    %2693 = vmatpush.msra.mxu0 0.0
    %2694 = vmatpush.msra.mxu0 0.0
    %2695 = vmatpush.msra.mxu0 0.0
    %2696 = vmatpush.msra.mxu0 0.0
    %2697 = vmatpush.msra.mxu0 0.0
    %2698 = vmatpush.msra.mxu0 0.0
    %2699 = vmatpush.msra.mxu0 0.0
    %2700 = vmatpush.msra.mxu0 0.0
    %2701 = vmatpush.msra.mxu0 0.0
    %2702 = vmatpush.msra.mxu0 0.0
    %2703 = vmatpush.msra.mxu0 0.0
    %2704 = vmatpush.msra.mxu0 0.0
    %2705 = vmatpush.msra.mxu0 %v2219
    %2706 = vmatmul.f32.gmra.mxu0 %v2676
    %v2707 = vpop.f32.mrf.mxu0
    %v2708 = vadd.f32 0.0, %v2707
    %2709 = vmatmul.f32.gmra.mxu0 %v2679
    %v2710 = vpop.f32.mrf.mxu0
    %v2711 = vadd.f32 0.0, %v2710
    %2712 = vmatmul.f32.gmra.mxu0 %v2682
    %v2713 = vpop.f32.mrf.mxu0
    %v2714 = vadd.f32 0.0, %v2713
    %2715 = vmatmul.f32.gmra.mxu0 %v2685
    %v2716 = vpop.f32.mrf.mxu0
    %v2717 = vadd.f32 0.0, %v2716
    %2718 = vmatmul.f32.gmra.mxu0 %v2688
    %v2719 = vpop.f32.mrf.mxu0
    %v2720 = vadd.f32 0.0, %v2719
    %2721 = vdwg.mxu0
    %v2722 = vadd.f32 %v2470, %v2708
    %v2723 = vadd.f32 %v2471, %v2711
    %v2724 = vadd.f32 %v2472, %v2714
    %v2725 = vadd.f32 %v2473, %v2717
    %v2726 = vadd.f32 %v2474, %v2720
    %2727 = vrot.lane.b32.xlu0 %v2203, 112
    %v2728 = vpop.permute.xlu0 %2727
    %2729 = vrot.lane.b32.xlu0 %v2206, 112
    %v2730 = vpop.permute.xlu0 %2729
    %2731 = vrot.lane.b32.xlu0 %v2209, 112
    %v2732 = vpop.permute.xlu0 %2731
    %2733 = vrot.lane.b32.xlu0 %v2212, 112
    %v2734 = vpop.permute.xlu0 %2733
    %2735 = vrot.lane.b32.xlu0 %v2215, 112
    %v2736 = vpop.permute.xlu0 %2735
    %2737 = vrot.lane.b32.xlu0 %v2203, 80
    %v2738 = vpop.permute.xlu0 %2737
    %2739 = vrot.lane.b32.xlu0 %v2206, 80
    %v2740 = vpop.permute.xlu0 %2739
    %2741 = vrot.lane.b32.xlu0 %v2209, 80
    %v2742 = vpop.permute.xlu0 %2741
    %2743 = vrot.lane.b32.xlu0 %v2212, 80
    %v2744 = vpop.permute.xlu0 %2743
    %2745 = vrot.lane.b32.xlu0 %v2215, 80
    %v2746 = vpop.permute.xlu0 %2745
    %v2747 = vsel %vm560, %v2728, 0
    %v2749 = vsel %vm560, %v2730, 0
    %v2751 = vsel %vm560, %v2732, 0
    %v2753 = vsel %vm560, %v2734, 0
    %v2755 = vsel %vm560, %v2736, 0
    %v2757 = vsel %vm560, %v2738, 0
    %v2759 = vsel %vm560, %v2740, 0
    %v2761 = vsel %vm560, %v2742, 0
    %v2763 = vsel %vm560, %v2744, 0
    %v2765 = vsel %vm560, %v2746, 0
    %2767 = vmatpush.xpose.msra.mxu0 0.0
    %2768 = vmatpush.xpose.msra.mxu0 0.0
    %2769 = vmatpush.xpose.msra.mxu0 0.0
    %2770 = vmatpush.xpose.msra.mxu0 0.0
    %2771 = vmatpush.xpose.msra.mxu0 0.0
    %2772 = vmatpush.xpose.msra.mxu0 0.0
    %2773 = vmatpush.xpose.msra.mxu0 0.0
    %2774 = vmatpush.xpose.msra.mxu0 0.0
    %2775 = vmatpush.xpose.msra.mxu0 0.0
    %2776 = vmatpush.xpose.msra.mxu0 0.0
    %2777 = vmatpush.xpose.msra.mxu0 0.0
    %2778 = vmatpush.xpose.msra.mxu0 %v2765
    %2779 = vmatpush.xpose.msra.mxu0 %v2763
    %2780 = vmatpush.xpose.msra.mxu0 %v2761
    %2781 = vmatpush.xpose.msra.mxu0 %v2759
    %2782 = vmatpush.xpose.msra.mxu0 %v2757
    %2783 = vmatmul.f32.gmra.mxu0 %v2747
    %v2784 = vpop.f32.mrf.mxu0
    %v2785 = vadd.f32 0.0, %v2784
    %2786 = vmatmul.f32.gmra.mxu0 %v2749
    %v2787 = vpop.f32.mrf.mxu0
    %v2788 = vadd.f32 0.0, %v2787
    %2789 = vmatmul.f32.gmra.mxu0 %v2751
    %v2790 = vpop.f32.mrf.mxu0
    %v2791 = vadd.f32 0.0, %v2790
    %2792 = vmatmul.f32.gmra.mxu0 %v2753
    %v2793 = vpop.f32.mrf.mxu0
    %v2794 = vadd.f32 0.0, %v2793
    %2795 = vmatmul.f32.gmra.mxu0 %v2755
    %v2796 = vpop.f32.mrf.mxu0
    %v2797 = vadd.f32 0.0, %v2796
    %2798 = vdwg.mxu0
    %v2799 = vmul.f32 %v2785, 0.35355338
    %v2800 = vmul.f32 %v2788, 0.35355338
    %v2801 = vmul.f32 %v2791, 0.35355338
    %v2802 = vmul.f32 %v2794, 0.35355338
    %v2803 = vmul.f32 %v2797, 0.35355338
    %v2804 = vadd.f32 %v2799, %v340
    %v2805 = vadd.f32 %v2800, %v341
    %v2806 = vadd.f32 %v2801, %v342
    %v2807 = vadd.f32 %v2802, %v343
    %v2808 = vadd.f32 %v2803, %v344
    %v2809 = vsel %vm623, %v2804, -inf
    %2810 = vmax.xlane.f32.xlu0 %v2809
    %v2811 = vpop.xlane.xlu0 %2810
    %v2812 = vsel %vm623, %v2805, -inf
    %2813 = vmax.xlane.f32.xlu0 %v2812
    %v2814 = vpop.xlane.xlu0 %2813
    %v2815 = vsel %vm623, %v2806, -inf
    %2816 = vmax.xlane.f32.xlu0 %v2815
    %v2817 = vpop.xlane.xlu0 %2816
    %v2818 = vsel %vm623, %v2807, -inf
    %2819 = vmax.xlane.f32.xlu0 %v2818
    %v2820 = vpop.xlane.xlu0 %2819
    %v2821 = vsel %vm636, %v2808, -inf
    %2822 = vmax.xlane.f32.xlu0 %v2821
    %v2823 = vpop.xlane.xlu0 %2822
    %v2824 = vsub.f32 %v2804, %v2811
    %v2825 = vsub.f32 %v2805, %v2814
    %v2826 = vsub.f32 %v2806, %v2817
    %v2827 = vsub.f32 %v2807, %v2820
    %v2828 = vsub.f32 %v2808, %v2823
    %v2829 = vmul.f32 %v2824, 1.442695
    %v2830 = vpow.pop %v2829
    %v2831 = vmul.f32 %v2825, 1.442695
    %v2832 = vpow.pop %v2831
    %v2833 = vmul.f32 %v2826, 1.442695
    %v2834 = vpow.pop %v2833
    %v2835 = vmul.f32 %v2827, 1.442695
    %v2836 = vpow.pop %v2835
    %v2837 = vmul.f32 %v2828, 1.442695
    %v2838 = vpow.pop %v2837
    %v2839 = vsel %vm623, %v2830, 0.0
    %2840 = vadd.xlane.f32.xlu0 %v2839
    %v2841 = vpop.xlane.xlu0 %2840
    %v2842 = vsel %vm623, %v2832, 0.0
    %2843 = vadd.xlane.f32.xlu0 %v2842
    %v2844 = vpop.xlane.xlu0 %2843
    %v2845 = vsel %vm623, %v2834, 0.0
    %2846 = vadd.xlane.f32.xlu0 %v2845
    %v2847 = vpop.xlane.xlu0 %2846
    %v2848 = vsel %vm623, %v2836, 0.0
    %2849 = vadd.xlane.f32.xlu0 %v2848
    %v2850 = vpop.xlane.xlu0 %2849
    %v2851 = vsel %vm636, %v2838, 0.0
    %2852 = vadd.xlane.f32.xlu0 %v2851
    %v2853 = vpop.xlane.xlu0 %2852
    %v2854 = vrcp.pop %v2841
    %v2855 = vrcp.pop %v2844
    %v2856 = vrcp.pop %v2847
    %v2857 = vrcp.pop %v2850
    %v2858 = vrcp.pop %v2853
    %v2859 = vmul.f32 %v2830, %v2854
    %v2860 = vmul.f32 %v2832, %v2855
    %v2861 = vmul.f32 %v2834, %v2856
    %v2862 = vmul.f32 %v2836, %v2857
    %v2863 = vmul.f32 %v2838, %v2858
    %2864 = vrot.lane.b32.xlu0 %v2203, 48
    %v2865 = vpop.permute.xlu0 %2864
    %2866 = vrot.lane.b32.xlu0 %v2206, 48
    %v2867 = vpop.permute.xlu0 %2866
    %2868 = vrot.lane.b32.xlu0 %v2209, 48
    %v2869 = vpop.permute.xlu0 %2868
    %2870 = vrot.lane.b32.xlu0 %v2212, 48
    %v2871 = vpop.permute.xlu0 %2870
    %2872 = vrot.lane.b32.xlu0 %v2215, 48
    %v2873 = vpop.permute.xlu0 %2872
    %v2879 = vsel %vm623, %v2859, 0
    %v2882 = vsel %vm623, %v2860, 0
    %v2885 = vsel %vm623, %v2861, 0
    %v2888 = vsel %vm623, %v2862, 0
    %v2891 = vsel %vm623, %v2863, 0
    %v2893 = vsel %vm709, %v2873, 0
    %2895 = vmatpush.msra.mxu0 0.0
    %2896 = vmatpush.msra.mxu0 0.0
    %2897 = vmatpush.msra.mxu0 0.0
    %2898 = vmatpush.msra.mxu0 0.0
    %2899 = vmatpush.msra.mxu0 0.0
    %2900 = vmatpush.msra.mxu0 0.0
    %2901 = vmatpush.msra.mxu0 0.0
    %2902 = vmatpush.msra.mxu0 0.0
    %2903 = vmatpush.msra.mxu0 0.0
    %2904 = vmatpush.msra.mxu0 0.0
    %2905 = vmatpush.msra.mxu0 0.0
    %2906 = vmatpush.msra.mxu0 %v2893
    %2907 = vmatpush.msra.mxu0 %v2871
    %2908 = vmatpush.msra.mxu0 %v2869
    %2909 = vmatpush.msra.mxu0 %v2867
    %2910 = vmatpush.msra.mxu0 %v2865
    %2911 = vmatmul.f32.gmra.mxu0 %v2879
    %v2912 = vpop.f32.mrf.mxu0
    %v2913 = vadd.f32 0.0, %v2912
    %2914 = vmatmul.f32.gmra.mxu0 %v2882
    %v2915 = vpop.f32.mrf.mxu0
    %v2916 = vadd.f32 0.0, %v2915
    %2917 = vmatmul.f32.gmra.mxu0 %v2885
    %v2918 = vpop.f32.mrf.mxu0
    %v2919 = vadd.f32 0.0, %v2918
    %2920 = vmatmul.f32.gmra.mxu0 %v2888
    %v2921 = vpop.f32.mrf.mxu0
    %v2922 = vadd.f32 0.0, %v2921
    %2923 = vmatmul.f32.gmra.mxu0 %v2891
    %v2924 = vpop.f32.mrf.mxu0
    %v2925 = vadd.f32 0.0, %v2924
    %2926 = vdwg.mxu0
    %v2928 = vsel %vm560, %v2913, 0
    %v2931 = vsel %vm560, %v2916, 0
    %v2934 = vsel %vm560, %v2919, 0
    %v2937 = vsel %vm560, %v2922, 0
    %v2940 = vsel %vm560, %v2925, 0
    %2942 = vmatpush.msra.mxu0 0.0
    %2943 = vmatpush.msra.mxu0 0.0
    %2944 = vmatpush.msra.mxu0 0.0
    %2945 = vmatpush.msra.mxu0 0.0
    %2946 = vmatpush.msra.mxu0 0.0
    %2947 = vmatpush.msra.mxu0 0.0
    %2948 = vmatpush.msra.mxu0 0.0
    %2949 = vmatpush.msra.mxu0 0.0
    %2950 = vmatpush.msra.mxu0 0.0
    %2951 = vmatpush.msra.mxu0 0.0
    %2952 = vmatpush.msra.mxu0 0.0
    %2953 = vmatpush.msra.mxu0 0.0
    %2954 = vmatpush.msra.mxu0 0.0
    %2955 = vmatpush.msra.mxu0 0.0
    %2956 = vmatpush.msra.mxu0 0.0
    %2957 = vmatpush.msra.mxu0 %v2220
    %2958 = vmatmul.f32.gmra.mxu0 %v2928
    %v2959 = vpop.f32.mrf.mxu0
    %v2960 = vadd.f32 0.0, %v2959
    %2961 = vmatmul.f32.gmra.mxu0 %v2931
    %v2962 = vpop.f32.mrf.mxu0
    %v2963 = vadd.f32 0.0, %v2962
    %2964 = vmatmul.f32.gmra.mxu0 %v2934
    %v2965 = vpop.f32.mrf.mxu0
    %v2966 = vadd.f32 0.0, %v2965
    %2967 = vmatmul.f32.gmra.mxu0 %v2937
    %v2968 = vpop.f32.mrf.mxu0
    %v2969 = vadd.f32 0.0, %v2968
    %2970 = vmatmul.f32.gmra.mxu0 %v2940
    %v2971 = vpop.f32.mrf.mxu0
    %v2972 = vadd.f32 0.0, %v2971
    %2973 = vdwg.mxu0
    %v2974 = vadd.f32 %v2722, %v2960
    %v2975 = vadd.f32 %v2723, %v2963
    %v2976 = vadd.f32 %v2724, %v2966
    %v2977 = vadd.f32 %v2725, %v2969
    %v2978 = vadd.f32 %v2726, %v2972
    %2979 = vrot.lane.b32.xlu0 %v2203, 104
    %v2980 = vpop.permute.xlu0 %2979
    %2981 = vrot.lane.b32.xlu0 %v2206, 104
    %v2982 = vpop.permute.xlu0 %2981
    %2983 = vrot.lane.b32.xlu0 %v2209, 104
    %v2984 = vpop.permute.xlu0 %2983
    %2985 = vrot.lane.b32.xlu0 %v2212, 104
    %v2986 = vpop.permute.xlu0 %2985
    %2987 = vrot.lane.b32.xlu0 %v2215, 104
    %v2988 = vpop.permute.xlu0 %2987
    %2989 = vrot.lane.b32.xlu0 %v2203, 72
    %v2990 = vpop.permute.xlu0 %2989
    %2991 = vrot.lane.b32.xlu0 %v2206, 72
    %v2992 = vpop.permute.xlu0 %2991
    %2993 = vrot.lane.b32.xlu0 %v2209, 72
    %v2994 = vpop.permute.xlu0 %2993
    %2995 = vrot.lane.b32.xlu0 %v2212, 72
    %v2996 = vpop.permute.xlu0 %2995
    %2997 = vrot.lane.b32.xlu0 %v2215, 72
    %v2998 = vpop.permute.xlu0 %2997
    %v2999 = vsel %vm560, %v2980, 0
    %v3001 = vsel %vm560, %v2982, 0
    %v3003 = vsel %vm560, %v2984, 0
    %v3005 = vsel %vm560, %v2986, 0
    %v3007 = vsel %vm560, %v2988, 0
    %v3009 = vsel %vm560, %v2990, 0
    %v3011 = vsel %vm560, %v2992, 0
    %v3013 = vsel %vm560, %v2994, 0
    %v3015 = vsel %vm560, %v2996, 0
    %v3017 = vsel %vm560, %v2998, 0
    %3019 = vmatpush.xpose.msra.mxu0 0.0
    %3020 = vmatpush.xpose.msra.mxu0 0.0
    %3021 = vmatpush.xpose.msra.mxu0 0.0
    %3022 = vmatpush.xpose.msra.mxu0 0.0
    %3023 = vmatpush.xpose.msra.mxu0 0.0
    %3024 = vmatpush.xpose.msra.mxu0 0.0
    %3025 = vmatpush.xpose.msra.mxu0 0.0
    %3026 = vmatpush.xpose.msra.mxu0 0.0
    %3027 = vmatpush.xpose.msra.mxu0 0.0
    %3028 = vmatpush.xpose.msra.mxu0 0.0
    %3029 = vmatpush.xpose.msra.mxu0 0.0
    %3030 = vmatpush.xpose.msra.mxu0 %v3017
    %3031 = vmatpush.xpose.msra.mxu0 %v3015
    %3032 = vmatpush.xpose.msra.mxu0 %v3013
    %3033 = vmatpush.xpose.msra.mxu0 %v3011
    %3034 = vmatpush.xpose.msra.mxu0 %v3009
    %3035 = vmatmul.f32.gmra.mxu0 %v2999
    %v3036 = vpop.f32.mrf.mxu0
    %v3037 = vadd.f32 0.0, %v3036
    %3038 = vmatmul.f32.gmra.mxu0 %v3001
    %v3039 = vpop.f32.mrf.mxu0
    %v3040 = vadd.f32 0.0, %v3039
    %3041 = vmatmul.f32.gmra.mxu0 %v3003
    %v3042 = vpop.f32.mrf.mxu0
    %v3043 = vadd.f32 0.0, %v3042
    %3044 = vmatmul.f32.gmra.mxu0 %v3005
    %v3045 = vpop.f32.mrf.mxu0
    %v3046 = vadd.f32 0.0, %v3045
    %3047 = vmatmul.f32.gmra.mxu0 %v3007
    %v3048 = vpop.f32.mrf.mxu0
    %v3049 = vadd.f32 0.0, %v3048
    %3050 = vdwg.mxu0
    %v3051 = vmul.f32 %v3037, 0.35355338
    %v3052 = vmul.f32 %v3040, 0.35355338
    %v3053 = vmul.f32 %v3043, 0.35355338
    %v3054 = vmul.f32 %v3046, 0.35355338
    %v3055 = vmul.f32 %v3049, 0.35355338
    %v3056 = vadd.f32 %v3051, %v340
    %v3057 = vadd.f32 %v3052, %v341
    %v3058 = vadd.f32 %v3053, %v342
    %v3059 = vadd.f32 %v3054, %v343
    %v3060 = vadd.f32 %v3055, %v344
    %v3061 = vsel %vm623, %v3056, -inf
    %3062 = vmax.xlane.f32.xlu0 %v3061
    %v3063 = vpop.xlane.xlu0 %3062
    %v3064 = vsel %vm623, %v3057, -inf
    %3065 = vmax.xlane.f32.xlu0 %v3064
    %v3066 = vpop.xlane.xlu0 %3065
    %v3067 = vsel %vm623, %v3058, -inf
    %3068 = vmax.xlane.f32.xlu0 %v3067
    %v3069 = vpop.xlane.xlu0 %3068
    %v3070 = vsel %vm623, %v3059, -inf
    %3071 = vmax.xlane.f32.xlu0 %v3070
    %v3072 = vpop.xlane.xlu0 %3071
    %v3073 = vsel %vm636, %v3060, -inf
    %3074 = vmax.xlane.f32.xlu0 %v3073
    %v3075 = vpop.xlane.xlu0 %3074
    %v3076 = vsub.f32 %v3056, %v3063
    %v3077 = vsub.f32 %v3057, %v3066
    %v3078 = vsub.f32 %v3058, %v3069
    %v3079 = vsub.f32 %v3059, %v3072
    %v3080 = vsub.f32 %v3060, %v3075
    %v3081 = vmul.f32 %v3076, 1.442695
    %v3082 = vpow.pop %v3081
    %v3083 = vmul.f32 %v3077, 1.442695
    %v3084 = vpow.pop %v3083
    %v3085 = vmul.f32 %v3078, 1.442695
    %v3086 = vpow.pop %v3085
    %v3087 = vmul.f32 %v3079, 1.442695
    %v3088 = vpow.pop %v3087
    %v3089 = vmul.f32 %v3080, 1.442695
    %v3090 = vpow.pop %v3089
    %v3091 = vsel %vm623, %v3082, 0.0
    %3092 = vadd.xlane.f32.xlu0 %v3091
    %v3093 = vpop.xlane.xlu0 %3092
    %v3094 = vsel %vm623, %v3084, 0.0
    %3095 = vadd.xlane.f32.xlu0 %v3094
    %v3096 = vpop.xlane.xlu0 %3095
    %v3097 = vsel %vm623, %v3086, 0.0
    %3098 = vadd.xlane.f32.xlu0 %v3097
    %v3099 = vpop.xlane.xlu0 %3098
    %v3100 = vsel %vm623, %v3088, 0.0
    %3101 = vadd.xlane.f32.xlu0 %v3100
    %v3102 = vpop.xlane.xlu0 %3101
    %v3103 = vsel %vm636, %v3090, 0.0
    %3104 = vadd.xlane.f32.xlu0 %v3103
    %v3105 = vpop.xlane.xlu0 %3104
    %v3106 = vrcp.pop %v3093
    %v3107 = vrcp.pop %v3096
    %v3108 = vrcp.pop %v3099
    %v3109 = vrcp.pop %v3102
    %v3110 = vrcp.pop %v3105
    %v3111 = vmul.f32 %v3082, %v3106
    %v3112 = vmul.f32 %v3084, %v3107
    %v3113 = vmul.f32 %v3086, %v3108
    %v3114 = vmul.f32 %v3088, %v3109
    %v3115 = vmul.f32 %v3090, %v3110
    %3116 = vrot.lane.b32.xlu0 %v2203, 40
    %v3117 = vpop.permute.xlu0 %3116
    %3118 = vrot.lane.b32.xlu0 %v2206, 40
    %v3119 = vpop.permute.xlu0 %3118
    %3120 = vrot.lane.b32.xlu0 %v2209, 40
    %v3121 = vpop.permute.xlu0 %3120
    %3122 = vrot.lane.b32.xlu0 %v2212, 40
    %v3123 = vpop.permute.xlu0 %3122
    %3124 = vrot.lane.b32.xlu0 %v2215, 40
    %v3125 = vpop.permute.xlu0 %3124
    %v3131 = vsel %vm623, %v3111, 0
    %v3134 = vsel %vm623, %v3112, 0
    %v3137 = vsel %vm623, %v3113, 0
    %v3140 = vsel %vm623, %v3114, 0
    %v3143 = vsel %vm623, %v3115, 0
    %v3145 = vsel %vm709, %v3125, 0
    %3147 = vmatpush.msra.mxu0 0.0
    %3148 = vmatpush.msra.mxu0 0.0
    %3149 = vmatpush.msra.mxu0 0.0
    %3150 = vmatpush.msra.mxu0 0.0
    %3151 = vmatpush.msra.mxu0 0.0
    %3152 = vmatpush.msra.mxu0 0.0
    %3153 = vmatpush.msra.mxu0 0.0
    %3154 = vmatpush.msra.mxu0 0.0
    %3155 = vmatpush.msra.mxu0 0.0
    %3156 = vmatpush.msra.mxu0 0.0
    %3157 = vmatpush.msra.mxu0 0.0
    %3158 = vmatpush.msra.mxu0 %v3145
    %3159 = vmatpush.msra.mxu0 %v3123
    %3160 = vmatpush.msra.mxu0 %v3121
    %3161 = vmatpush.msra.mxu0 %v3119
    %3162 = vmatpush.msra.mxu0 %v3117
    %3163 = vmatmul.f32.gmra.mxu0 %v3131
    %v3164 = vpop.f32.mrf.mxu0
    %v3165 = vadd.f32 0.0, %v3164
    %3166 = vmatmul.f32.gmra.mxu0 %v3134
    %v3167 = vpop.f32.mrf.mxu0
    %v3168 = vadd.f32 0.0, %v3167
    %3169 = vmatmul.f32.gmra.mxu0 %v3137
    %v3170 = vpop.f32.mrf.mxu0
    %v3171 = vadd.f32 0.0, %v3170
    %3172 = vmatmul.f32.gmra.mxu0 %v3140
    %v3173 = vpop.f32.mrf.mxu0
    %v3174 = vadd.f32 0.0, %v3173
    %3175 = vmatmul.f32.gmra.mxu0 %v3143
    %v3176 = vpop.f32.mrf.mxu0
    %v3177 = vadd.f32 0.0, %v3176
    %3178 = vdwg.mxu0
    %v3180 = vsel %vm560, %v3165, 0
    %v3183 = vsel %vm560, %v3168, 0
    %v3186 = vsel %vm560, %v3171, 0
    %v3189 = vsel %vm560, %v3174, 0
    %v3192 = vsel %vm560, %v3177, 0
    %3194 = vmatpush.msra.mxu0 0.0
    %3195 = vmatpush.msra.mxu0 0.0
    %3196 = vmatpush.msra.mxu0 0.0
    %3197 = vmatpush.msra.mxu0 0.0
    %3198 = vmatpush.msra.mxu0 0.0
    %3199 = vmatpush.msra.mxu0 0.0
    %3200 = vmatpush.msra.mxu0 0.0
    %3201 = vmatpush.msra.mxu0 0.0
    %3202 = vmatpush.msra.mxu0 0.0
    %3203 = vmatpush.msra.mxu0 0.0
    %3204 = vmatpush.msra.mxu0 0.0
    %3205 = vmatpush.msra.mxu0 0.0
    %3206 = vmatpush.msra.mxu0 0.0
    %3207 = vmatpush.msra.mxu0 0.0
    %3208 = vmatpush.msra.mxu0 0.0
    %3209 = vmatpush.msra.mxu0 %v2221
    %3210 = vmatmul.f32.gmra.mxu0 %v3180
    %v3211 = vpop.f32.mrf.mxu0
    %v3212 = vadd.f32 0.0, %v3211
    %3213 = vmatmul.f32.gmra.mxu0 %v3183
    %v3214 = vpop.f32.mrf.mxu0
    %v3215 = vadd.f32 0.0, %v3214
    %3216 = vmatmul.f32.gmra.mxu0 %v3186
    %v3217 = vpop.f32.mrf.mxu0
    %v3218 = vadd.f32 0.0, %v3217
    %3219 = vmatmul.f32.gmra.mxu0 %v3189
    %v3220 = vpop.f32.mrf.mxu0
    %v3221 = vadd.f32 0.0, %v3220
    %3222 = vmatmul.f32.gmra.mxu0 %v3192
    %v3223 = vpop.f32.mrf.mxu0
    %v3224 = vadd.f32 0.0, %v3223
    %3225 = vdwg.mxu0
    %v3226 = vadd.f32 %v2974, %v3212
    %v3227 = vadd.f32 %v2975, %v3215
    %v3228 = vadd.f32 %v2976, %v3218
    %v3229 = vadd.f32 %v2977, %v3221
    %v3230 = vadd.f32 %v2978, %v3224
    %v3231 = vadd.f32 %v2025, %v3226
    %v3232 = vadd.f32 %v2026, %v3227
    %v3233 = vadd.f32 %v2027, %v3228
    %v3234 = vadd.f32 %v2028, %v3229
    %v3235 = vadd.f32 %v2029, %v3230
    %s3236 = scalar_lea.vmem %s33, 1
    %v3237 = vld [vmem:[%s3236] sm:$0x1]
    %s3238 = scalar_lea.vmem %s35, 1
    %v3239 = vld [vmem:[%s3238] sm:$0x1]
    %v3240 = vsel %vm227, %v3231, 0.0
    %3241 = vadd.xlane.f32.xlu0 %v3240
    %v3242 = vpop.xlane.xlu0 %3241
    %v3243 = vsel %vm227, %v3232, 0.0
    %3244 = vadd.xlane.f32.xlu0 %v3243
    %v3245 = vpop.xlane.xlu0 %3244
    %v3246 = vsel %vm227, %v3233, 0.0
    %3247 = vadd.xlane.f32.xlu0 %v3246
    %v3248 = vpop.xlane.xlu0 %3247
    %v3249 = vsel %vm227, %v3234, 0.0
    %3250 = vadd.xlane.f32.xlu0 %v3249
    %v3251 = vpop.xlane.xlu0 %3250
    %v3252 = vsel %vm359, %v3235, 0.0
    %3253 = vadd.xlane.f32.xlu0 %v3252
    %v3254 = vpop.xlane.xlu0 %3253
    %v3255 = vmul.f32 %v3242, %v369
    %v3256 = vmul.f32 %v3245, %v369
    %v3257 = vmul.f32 %v3248, %v369
    %v3258 = vmul.f32 %v3251, %v369
    %v3259 = vmul.f32 %v3254, %v369
    %v3260 = vsub.f32 %v3231, %v3255
    %v3261 = vsub.f32 %v3232, %v3256
    %v3262 = vsub.f32 %v3233, %v3257
    %v3263 = vsub.f32 %v3234, %v3258
    %v3264 = vsub.f32 %v3235, %v3259
    %v3265 = vmul.f32 %v3260, %v3260
    %v3266 = vmul.f32 %v3261, %v3261
    %v3267 = vmul.f32 %v3262, %v3262
    %v3268 = vmul.f32 %v3263, %v3263
    %v3269 = vmul.f32 %v3264, %v3264
    %v3270 = vsel %vm227, %v3265, 0.0
    %3271 = vadd.xlane.f32.xlu0 %v3270
    %v3272 = vpop.xlane.xlu0 %3271
    %v3273 = vsel %vm227, %v3266, 0.0
    %3274 = vadd.xlane.f32.xlu0 %v3273
    %v3275 = vpop.xlane.xlu0 %3274
    %v3276 = vsel %vm227, %v3267, 0.0
    %3277 = vadd.xlane.f32.xlu0 %v3276
    %v3278 = vpop.xlane.xlu0 %3277
    %v3279 = vsel %vm227, %v3268, 0.0
    %3280 = vadd.xlane.f32.xlu0 %v3279
    %v3281 = vpop.xlane.xlu0 %3280
    %v3282 = vsel %vm359, %v3269, 0.0
    %3283 = vadd.xlane.f32.xlu0 %v3282
    %v3284 = vpop.xlane.xlu0 %3283
    %v3285 = vmul.f32 %v3272, %v369
    %v3286 = vmul.f32 %v3275, %v369
    %v3287 = vmul.f32 %v3278, %v369
    %v3288 = vmul.f32 %v3281, %v369
    %v3289 = vmul.f32 %v3284, %v369
    %v3290 = vadd.f32 %v3285, 1e-12
    %v3291 = vadd.f32 %v3286, 1e-12
    %v3292 = vadd.f32 %v3287, 1e-12
    %v3293 = vadd.f32 %v3288, 1e-12
    %v3294 = vadd.f32 %v3289, 1e-12
    %v3295 = vrsqrt.pop %v3290
    %v3296 = vmul.f32 %v3295, %v3290
    %v3297 = vmul.f32 %v3296, %v3295
    %v3298 = vmul.f32 0.5, %v3297
    %v3299 = vsub.f32 1.5, %v3298
    %v3300 = vmul.f32 %v3295, %v3299
    %vm3301 = vweird.f32 %v3290
    %vm3302 = vweird.f32 %v3295
    %vm3303 = vmor %vm3301, %vm3302
    %v3304 = vsel %vm3303, %v3295, %v3300
    %v3305 = vrsqrt.pop %v3291
    %v3306 = vmul.f32 %v3305, %v3291
    %v3307 = vmul.f32 %v3306, %v3305
    %v3308 = vmul.f32 0.5, %v3307
    %v3309 = vsub.f32 1.5, %v3308
    %v3310 = vmul.f32 %v3305, %v3309
    %vm3311 = vweird.f32 %v3291
    %vm3312 = vweird.f32 %v3305
    %vm3313 = vmor %vm3311, %vm3312
    %v3314 = vsel %vm3313, %v3305, %v3310
    %v3315 = vrsqrt.pop %v3292
    %v3316 = vmul.f32 %v3315, %v3292
    %v3317 = vmul.f32 %v3316, %v3315
    %v3318 = vmul.f32 0.5, %v3317
    %v3319 = vsub.f32 1.5, %v3318
    %v3320 = vmul.f32 %v3315, %v3319
    %vm3321 = vweird.f32 %v3292
    %vm3322 = vweird.f32 %v3315
    %vm3323 = vmor %vm3321, %vm3322
    %v3324 = vsel %vm3323, %v3315, %v3320
    %v3325 = vrsqrt.pop %v3293
    %v3326 = vmul.f32 %v3325, %v3293
    %v3327 = vmul.f32 %v3326, %v3325
    %v3328 = vmul.f32 0.5, %v3327
    %v3329 = vsub.f32 1.5, %v3328
    %v3330 = vmul.f32 %v3325, %v3329
    %vm3331 = vweird.f32 %v3293
    %vm3332 = vweird.f32 %v3325
    %vm3333 = vmor %vm3331, %vm3332
    %v3334 = vsel %vm3333, %v3325, %v3330
    %v3335 = vrsqrt.pop %v3294
    %v3336 = vmul.f32 %v3335, %v3294
    %v3337 = vmul.f32 %v3336, %v3335
    %v3338 = vmul.f32 0.5, %v3337
    %v3339 = vsub.f32 1.5, %v3338
    %v3340 = vmul.f32 %v3335, %v3339
    %vm3341 = vweird.f32 %v3294
    %vm3342 = vweird.f32 %v3335
    %vm3343 = vmor %vm3341, %vm3342
    %v3344 = vsel %vm3343, %v3335, %v3340
    %v3345 = vmul.f32 %v3260, %v3304
    %v3346 = vmul.f32 %v3261, %v3314
    %v3347 = vmul.f32 %v3262, %v3324
    %v3348 = vmul.f32 %v3263, %v3334
    %v3349 = vmul.f32 %v3264, %v3344
    %v3351 = vperm.slane %v3237, 0
    %v3353 = vmul.f32 %v3345, %v3351
    %v3354 = vmul.f32 %v3346, %v3351
    %v3355 = vmul.f32 %v3347, %v3351
    %v3356 = vmul.f32 %v3348, %v3351
    %v3357 = vmul.f32 %v3349, %v3351
    %v3359 = vperm.slane %v3239, 0
    %v3361 = vadd.f32 %v3353, %v3359
    %v3362 = vadd.f32 %v3354, %v3359
    %v3363 = vadd.f32 %v3355, %v3359
    %v3364 = vadd.f32 %v3356, %v3359
    %v3365 = vadd.f32 %v3357, %v3359
    %s3366 = scalar_lea.vmem %s37, 32
    %v3367 = vld [vmem:[%s3366] sm:$0xff]
    %v3368 = vld [vmem:[%s3366 + $0x8] sm:$0xff]
    %v3369 = vld [vmem:[%s3366 + $0x10] sm:$0xff]
    %v3370 = vld [vmem:[%s3366 + $0x18] sm:$0xff]
    %s3371 = scalar_lea.vmem %s39, 1
    %v3372 = vld [vmem:[%s3371] sm:$0x1]
    %v3374 = vperm.slane %v3372, 0
    %v3377 = vsel %vm227, %v3361, 0
    %v3380 = vsel %vm227, %v3362, 0
    %v3383 = vsel %vm227, %v3363, 0
    %v3386 = vsel %vm227, %v3364, 0
    %v3389 = vsel %vm227, %v3365, 0
    %3391 = vmatpush.msra.mxu0 0.0
    %3392 = vmatpush.msra.mxu0 0.0
    %3393 = vmatpush.msra.mxu0 0.0
    %3394 = vmatpush.msra.mxu0 0.0
    %3395 = vmatpush.msra.mxu0 0.0
    %3396 = vmatpush.msra.mxu0 0.0
    %3397 = vmatpush.msra.mxu0 0.0
    %3398 = vmatpush.msra.mxu0 0.0
    %3399 = vmatpush.msra.mxu0 0.0
    %3400 = vmatpush.msra.mxu0 0.0
    %3401 = vmatpush.msra.mxu0 0.0
    %3402 = vmatpush.msra.mxu0 0.0
    %3403 = vmatpush.msra.mxu0 %v3370
    %3404 = vmatpush.msra.mxu0 %v3369
    %3405 = vmatpush.msra.mxu0 %v3368
    %3406 = vmatpush.msra.mxu0 %v3367
    %3407 = vmatmul.f32.gmra.mxu0 %v3377
    %v3408 = vpop.f32.mrf.mxu0
    %v3409 = vadd.f32 %v3374, %v3408
    %3410 = vmatmul.f32.gmra.mxu0 %v3380
    %v3411 = vpop.f32.mrf.mxu0
    %v3412 = vadd.f32 %v3374, %v3411
    %3413 = vmatmul.f32.gmra.mxu0 %v3383
    %v3414 = vpop.f32.mrf.mxu0
    %v3415 = vadd.f32 %v3374, %v3414
    %3416 = vmatmul.f32.gmra.mxu0 %v3386
    %v3417 = vpop.f32.mrf.mxu0
    %v3418 = vadd.f32 %v3374, %v3417
    %3419 = vmatmul.f32.gmra.mxu0 %v3389
    %v3420 = vpop.f32.mrf.mxu0
    %v3421 = vadd.f32 %v3374, %v3420
    %3422 = vdwg.mxu0
    %v3423 = vmul.f32 %v3409, 0.5
    %v3424 = vmul.f32 %v3412, 0.5
    %v3425 = vmul.f32 %v3415, 0.5
    %v3426 = vmul.f32 %v3418, 0.5
    %v3427 = vmul.f32 %v3421, 0.5
    %v3428 = vmul.f32 %v3409, 0.70710677
    %v3429 = vmul.f32 %v3412, 0.70710677
    %v3430 = vmul.f32 %v3415, 0.70710677
    %v3431 = vmul.f32 %v3418, 0.70710677
    %v3432 = vmul.f32 %v3421, 0.70710677
    %v3433 = vmul.f32 %v3428, %v3428
    %v3434 = vmin.f32 16.0, %v3433
    %v3435 = vmul.f32 %v3434, 2.1237322e-06
    %v3436 = vadd.f32 %v3435, 0.00028619796
    %v3437 = vmul.f32 %v3434, %v3436
    %v3438 = vadd.f32 %v3437, 0.0036580483
    %v3439 = vmul.f32 %v3434, %v3438
    %v3440 = vadd.f32 %v3439, 0.05243302
    %v3441 = vmul.f32 %v3434, %v3440
    %v3442 = vadd.f32 %v3441, 0.18741608
    %v3443 = vmul.f32 %v3434, %v3442
    %v3444 = vadd.f32 %v3443, 1.1283791
    %v3445 = vmul.f32 %v3428, %v3444
    %v3446 = vmul.f32 %v3434, 3.8918573e-05
    %v3447 = vadd.f32 %v3446, 0.001143296
    %v3448 = vmul.f32 %v3434, %v3447
    %v3449 = vadd.f32 %v3448, 0.014752088
    %v3450 = vmul.f32 %v3434, %v3449
    %v3451 = vadd.f32 %v3450, 0.112945676
    %v3452 = vmul.f32 %v3434, %v3451
    %v3453 = vadd.f32 %v3452, 0.4994258
    %v3454 = vmul.f32 %v3434, %v3453
    %v3455 = vadd.f32 %v3454, 1.0
    %v3456 = vrcp.pop %v3455
    %v3457 = vmul.f32 %v3455, %v3456
    %v3458 = vsub.f32 1.0, %v3457
    %v3459 = vmul.f32 %v3456, %v3458
    %v3460 = vadd.f32 %v3456, %v3459
    %vm3461 = vweird.f32 %v3455
    %vm3462 = vweird.f32 %v3456
    %vm3463 = vmor %vm3461, %vm3462
    %v3464 = vsel %vm3463, %v3456, %v3460
    %v3465 = vand.u32 2147483647, %v3455
    %vm3466 = vcmp.eq.f32.partialorder %v3465, 8.507059e+37
    %v3467 = vand.u32 %v3455, 2147483648
    %v3468 = vor.u32 1.1754944e-38, %v3467
    %v3469 = vsel %vm3466, %v3468, %v3464
    %v3470 = vmul.f32 %v3445, %v3469
    %v3471 = vmin.f32 %v3470, 1.0
    %v3472 = vmax.f32 %v3471, -1.0
    %v3473 = vmul.f32 %v3429, %v3429
    %v3474 = vmin.f32 16.0, %v3473
    %v3475 = vmul.f32 %v3474, 2.1237322e-06
    %v3476 = vadd.f32 %v3475, 0.00028619796
    %v3477 = vmul.f32 %v3474, %v3476
    %v3478 = vadd.f32 %v3477, 0.0036580483
    %v3479 = vmul.f32 %v3474, %v3478
    %v3480 = vadd.f32 %v3479, 0.05243302
    %v3481 = vmul.f32 %v3474, %v3480
    %v3482 = vadd.f32 %v3481, 0.18741608
    %v3483 = vmul.f32 %v3474, %v3482
    %v3484 = vadd.f32 %v3483, 1.1283791
    %v3485 = vmul.f32 %v3429, %v3484
    %v3486 = vmul.f32 %v3474, 3.8918573e-05
    %v3487 = vadd.f32 %v3486, 0.001143296
    %v3488 = vmul.f32 %v3474, %v3487
    %v3489 = vadd.f32 %v3488, 0.014752088
    %v3490 = vmul.f32 %v3474, %v3489
    %v3491 = vadd.f32 %v3490, 0.112945676
    %v3492 = vmul.f32 %v3474, %v3491
    %v3493 = vadd.f32 %v3492, 0.4994258
    %v3494 = vmul.f32 %v3474, %v3493
    %v3495 = vadd.f32 %v3494, 1.0
    %v3496 = vrcp.pop %v3495
    %v3497 = vmul.f32 %v3495, %v3496
    %v3498 = vsub.f32 1.0, %v3497
    %v3499 = vmul.f32 %v3496, %v3498
    %v3500 = vadd.f32 %v3496, %v3499
    %vm3501 = vweird.f32 %v3495
    %vm3502 = vweird.f32 %v3496
    %vm3503 = vmor %vm3501, %vm3502
    %v3504 = vsel %vm3503, %v3496, %v3500
    %v3505 = vand.u32 2147483647, %v3495
    %vm3506 = vcmp.eq.f32.partialorder %v3505, 8.507059e+37
    %v3507 = vand.u32 %v3495, 2147483648
    %v3508 = vor.u32 1.1754944e-38, %v3507
    %v3509 = vsel %vm3506, %v3508, %v3504
    %v3510 = vmul.f32 %v3485, %v3509
    %v3511 = vmin.f32 %v3510, 1.0
    %v3512 = vmax.f32 %v3511, -1.0
    %v3513 = vmul.f32 %v3430, %v3430
    %v3514 = vmin.f32 16.0, %v3513
    %v3515 = vmul.f32 %v3514, 2.1237322e-06
    %v3516 = vadd.f32 %v3515, 0.00028619796
    %v3517 = vmul.f32 %v3514, %v3516
    %v3518 = vadd.f32 %v3517, 0.0036580483
    %v3519 = vmul.f32 %v3514, %v3518
    %v3520 = vadd.f32 %v3519, 0.05243302
    %v3521 = vmul.f32 %v3514, %v3520
    %v3522 = vadd.f32 %v3521, 0.18741608
    %v3523 = vmul.f32 %v3514, %v3522
    %v3524 = vadd.f32 %v3523, 1.1283791
    %v3525 = vmul.f32 %v3430, %v3524
    %v3526 = vmul.f32 %v3514, 3.8918573e-05
    %v3527 = vadd.f32 %v3526, 0.001143296
    %v3528 = vmul.f32 %v3514, %v3527
    %v3529 = vadd.f32 %v3528, 0.014752088
    %v3530 = vmul.f32 %v3514, %v3529
    %v3531 = vadd.f32 %v3530, 0.112945676
    %v3532 = vmul.f32 %v3514, %v3531
    %v3533 = vadd.f32 %v3532, 0.4994258
    %v3534 = vmul.f32 %v3514, %v3533
    %v3535 = vadd.f32 %v3534, 1.0
    %v3536 = vrcp.pop %v3535
    %v3537 = vmul.f32 %v3535, %v3536
    %v3538 = vsub.f32 1.0, %v3537
    %v3539 = vmul.f32 %v3536, %v3538
    %v3540 = vadd.f32 %v3536, %v3539
    %vm3541 = vweird.f32 %v3535
    %vm3542 = vweird.f32 %v3536
    %vm3543 = vmor %vm3541, %vm3542
    %v3544 = vsel %vm3543, %v3536, %v3540
    %v3545 = vand.u32 2147483647, %v3535
    %vm3546 = vcmp.eq.f32.partialorder %v3545, 8.507059e+37
    %v3547 = vand.u32 %v3535, 2147483648
    %v3548 = vor.u32 1.1754944e-38, %v3547
    %v3549 = vsel %vm3546, %v3548, %v3544
    %v3550 = vmul.f32 %v3525, %v3549
    %v3551 = vmin.f32 %v3550, 1.0
    %v3552 = vmax.f32 %v3551, -1.0
    %v3553 = vmul.f32 %v3431, %v3431
    %v3554 = vmin.f32 16.0, %v3553
    %v3555 = vmul.f32 %v3554, 2.1237322e-06
    %v3556 = vadd.f32 %v3555, 0.00028619796
    %v3557 = vmul.f32 %v3554, %v3556
    %v3558 = vadd.f32 %v3557, 0.0036580483
    %v3559 = vmul.f32 %v3554, %v3558
    %v3560 = vadd.f32 %v3559, 0.05243302
    %v3561 = vmul.f32 %v3554, %v3560
    %v3562 = vadd.f32 %v3561, 0.18741608
    %v3563 = vmul.f32 %v3554, %v3562
    %v3564 = vadd.f32 %v3563, 1.1283791
    %v3565 = vmul.f32 %v3431, %v3564
    %v3566 = vmul.f32 %v3554, 3.8918573e-05
    %v3567 = vadd.f32 %v3566, 0.001143296
    %v3568 = vmul.f32 %v3554, %v3567
    %v3569 = vadd.f32 %v3568, 0.014752088
    %v3570 = vmul.f32 %v3554, %v3569
    %v3571 = vadd.f32 %v3570, 0.112945676
    %v3572 = vmul.f32 %v3554, %v3571
    %v3573 = vadd.f32 %v3572, 0.4994258
    %v3574 = vmul.f32 %v3554, %v3573
    %v3575 = vadd.f32 %v3574, 1.0
    %v3576 = vrcp.pop %v3575
    %v3577 = vmul.f32 %v3575, %v3576
    %v3578 = vsub.f32 1.0, %v3577
    %v3579 = vmul.f32 %v3576, %v3578
    %v3580 = vadd.f32 %v3576, %v3579
    %vm3581 = vweird.f32 %v3575
    %vm3582 = vweird.f32 %v3576
    %vm3583 = vmor %vm3581, %vm3582
    %v3584 = vsel %vm3583, %v3576, %v3580
    %v3585 = vand.u32 2147483647, %v3575
    %vm3586 = vcmp.eq.f32.partialorder %v3585, 8.507059e+37
    %v3587 = vand.u32 %v3575, 2147483648
    %v3588 = vor.u32 1.1754944e-38, %v3587
    %v3589 = vsel %vm3586, %v3588, %v3584
    %v3590 = vmul.f32 %v3565, %v3589
    %v3591 = vmin.f32 %v3590, 1.0
    %v3592 = vmax.f32 %v3591, -1.0
    %v3593 = vmul.f32 %v3432, %v3432
    %v3594 = vmin.f32 16.0, %v3593
    %v3595 = vmul.f32 %v3594, 2.1237322e-06
    %v3596 = vadd.f32 %v3595, 0.00028619796
    %v3597 = vmul.f32 %v3594, %v3596
    %v3598 = vadd.f32 %v3597, 0.0036580483
    %v3599 = vmul.f32 %v3594, %v3598
    %v3600 = vadd.f32 %v3599, 0.05243302
    %v3601 = vmul.f32 %v3594, %v3600
    %v3602 = vadd.f32 %v3601, 0.18741608
    %v3603 = vmul.f32 %v3594, %v3602
    %v3604 = vadd.f32 %v3603, 1.1283791
    %v3605 = vmul.f32 %v3432, %v3604
    %v3606 = vmul.f32 %v3594, 3.8918573e-05
    %v3607 = vadd.f32 %v3606, 0.001143296
    %v3608 = vmul.f32 %v3594, %v3607
    %v3609 = vadd.f32 %v3608, 0.014752088
    %v3610 = vmul.f32 %v3594, %v3609
    %v3611 = vadd.f32 %v3610, 0.112945676
    %v3612 = vmul.f32 %v3594, %v3611
    %v3613 = vadd.f32 %v3612, 0.4994258
    %v3614 = vmul.f32 %v3594, %v3613
    %v3615 = vadd.f32 %v3614, 1.0
    %v3616 = vrcp.pop %v3615
    %v3617 = vmul.f32 %v3615, %v3616
    %v3618 = vsub.f32 1.0, %v3617
    %v3619 = vmul.f32 %v3616, %v3618
    %v3620 = vadd.f32 %v3616, %v3619
    %vm3621 = vweird.f32 %v3615
    %vm3622 = vweird.f32 %v3616
    %vm3623 = vmor %vm3621, %vm3622
    %v3624 = vsel %vm3623, %v3616, %v3620
    %v3625 = vand.u32 2147483647, %v3615
    %vm3626 = vcmp.eq.f32.partialorder %v3625, 8.507059e+37
    %v3627 = vand.u32 %v3615, 2147483648
    %v3628 = vor.u32 1.1754944e-38, %v3627
    %v3629 = vsel %vm3626, %v3628, %v3624
    %v3630 = vmul.f32 %v3605, %v3629
    %v3631 = vmin.f32 %v3630, 1.0
    %v3632 = vmax.f32 %v3631, -1.0
    %v3633 = vadd.f32 %v3472, 1.0
    %v3634 = vadd.f32 %v3512, 1.0
    %v3635 = vadd.f32 %v3552, 1.0
    %v3636 = vadd.f32 %v3592, 1.0
    %v3637 = vadd.f32 %v3632, 1.0
    %v3638 = vmul.f32 %v3423, %v3633
    %v3639 = vmul.f32 %v3424, %v3634
    %v3640 = vmul.f32 %v3425, %v3635
    %v3641 = vmul.f32 %v3426, %v3636
    %v3642 = vmul.f32 %v3427, %v3637
    %s3643 = scalar_lea.vmem %s41, 64
    %v3644 = vld [vmem:[%s3643] sm:$0xff]
    %v3645 = vld [vmem:[%s3643 + $0x8] sm:$0xff]
    %v3646 = vld [vmem:[%s3643 + $0x10] sm:$0xff]
    %v3647 = vld [vmem:[%s3643 + $0x18] sm:$0xff]
    %v3648 = vld [vmem:[%s3643 + $0x20] sm:$0xff]
    %v3649 = vld [vmem:[%s3643 + $0x28] sm:$0xff]
    %v3650 = vld [vmem:[%s3643 + $0x30] sm:$0xff]
    %v3651 = vld [vmem:[%s3643 + $0x38] sm:$0xff]
    %v3653 = vsel %vm1968, %v3638, 0
    %v3656 = vsel %vm1968, %v3639, 0
    %v3659 = vsel %vm1968, %v3640, 0
    %v3662 = vsel %vm1968, %v3641, 0
    %v3665 = vsel %vm1968, %v3642, 0
    %3667 = vmatpush.msra.mxu0 0.0
    %3668 = vmatpush.msra.mxu0 0.0
    %3669 = vmatpush.msra.mxu0 0.0
    %3670 = vmatpush.msra.mxu0 0.0
    %3671 = vmatpush.msra.mxu0 0.0
    %3672 = vmatpush.msra.mxu0 0.0
    %3673 = vmatpush.msra.mxu0 0.0
    %3674 = vmatpush.msra.mxu0 0.0
    %3675 = vmatpush.msra.mxu0 %v3651
    %3676 = vmatpush.msra.mxu0 %v3650
    %3677 = vmatpush.msra.mxu0 %v3649
    %3678 = vmatpush.msra.mxu0 %v3648
    %3679 = vmatpush.msra.mxu0 %v3647
    %3680 = vmatpush.msra.mxu0 %v3646
    %3681 = vmatpush.msra.mxu0 %v3645
    %3682 = vmatpush.msra.mxu0 %v3644
    %3683 = vmatmul.f32.gmra.mxu0 %v3653
    %v3684 = vpop.f32.mrf.mxu0
    %v3685 = vadd.f32 0.0, %v3684
    %3686 = vmatmul.f32.gmra.mxu0 %v3656
    %v3687 = vpop.f32.mrf.mxu0
    %v3688 = vadd.f32 0.0, %v3687
    %3689 = vmatmul.f32.gmra.mxu0 %v3659
    %v3690 = vpop.f32.mrf.mxu0
    %v3691 = vadd.f32 0.0, %v3690
    %3692 = vmatmul.f32.gmra.mxu0 %v3662
    %v3693 = vpop.f32.mrf.mxu0
    %v3694 = vadd.f32 0.0, %v3693
    %3695 = vmatmul.f32.gmra.mxu0 %v3665
    %v3696 = vpop.f32.mrf.mxu0
    %v3697 = vadd.f32 0.0, %v3696
    %3698 = vdwg.mxu0
    %v3699 = vadd.f32 %v3231, %v3685
    %v3700 = vadd.f32 %v3232, %v3688
    %v3701 = vadd.f32 %v3233, %v3691
    %v3702 = vadd.f32 %v3234, %v3694
    %v3703 = vadd.f32 %v3235, %v3697
    %s3704 = scalar_lea.vmem %s43, 1
    %v3705 = vld [vmem:[%s3704] sm:$0x1]
    %v3707 = vperm.slane %v3705, 0
    %v3709 = vadd.f32 %v3699, %v3707
    %v3710 = vadd.f32 %v3700, %v3707
    %v3711 = vadd.f32 %v3701, %v3707
    %v3712 = vadd.f32 %v3702, %v3707
    %v3713 = vadd.f32 %v3703, %v3707
    %v3714 = vld [vmem:[%s11] sm:$0x3]
    %v3716 = vsel %vm623, %v3714, 0
    %v3719 = vsel %vm709, %v3713, 0
    %3721 = vmatpush.msra.mxu0 0.0
    %3722 = vmatpush.msra.mxu0 0.0
    %3723 = vmatpush.msra.mxu0 0.0
    %3724 = vmatpush.msra.mxu0 0.0
    %3725 = vmatpush.msra.mxu0 0.0
    %3726 = vmatpush.msra.mxu0 0.0
    %3727 = vmatpush.msra.mxu0 0.0
    %3728 = vmatpush.msra.mxu0 0.0
    %3729 = vmatpush.msra.mxu0 0.0
    %3730 = vmatpush.msra.mxu0 0.0
    %3731 = vmatpush.msra.mxu0 0.0
    %3732 = vmatpush.msra.mxu0 %v3719
    %3733 = vmatpush.msra.mxu0 %v3712
    %3734 = vmatpush.msra.mxu0 %v3711
    %3735 = vmatpush.msra.mxu0 %v3710
    %3736 = vmatpush.msra.mxu0 %v3709
    %3737 = vmatmul.f32.gmra.mxu0 %v3716
    %v3738 = vpop.f32.mrf.mxu0
    %v3739 = vadd.f32 0.0, %v3738
    %3740 = vdwg.mxu0
    %v3741 = vld [vmem:[%s45] sm:$0x1]
    %v3742 = vld [vmem:[%s47] sm:$0x1]
    %v3743 = vsel %vm359, %v3739, 0.0
    %3744 = vadd.xlane.f32.xlu0 %v3743
    %v3745 = vpop.xlane.xlu0 %3744
    %v3746 = vmul.f32 %v3745, %v369
    %v3747 = vsub.f32 %v3739, %v3746
    %v3748 = vmul.f32 %v3747, %v3747
    %v3749 = vsel %vm359, %v3748, 0.0
    %3750 = vadd.xlane.f32.xlu0 %v3749
    %v3751 = vpop.xlane.xlu0 %3750
    %v3752 = vmul.f32 %v3751, %v369
    %v3753 = vadd.f32 %v3752, 1e-12
    %v3754 = vrsqrt.pop %v3753
    %v3755 = vmul.f32 %v3754, %v3753
    %v3756 = vmul.f32 %v3755, %v3754
    %v3757 = vmul.f32 0.5, %v3756
    %v3758 = vsub.f32 1.5, %v3757
    %v3759 = vmul.f32 %v3754, %v3758
    %vm3760 = vweird.f32 %v3753
    %vm3761 = vweird.f32 %v3754
    %vm3762 = vmor %vm3760, %vm3761
    %v3763 = vsel %vm3762, %v3754, %v3759
    %v3764 = vmul.f32 %v3747, %v3763
    %v3766 = vperm.slane %v3741, 0
    %v3768 = vmul.f32 %v3764, %v3766
    %v3770 = vperm.slane %v3742, 0
    %v3772 = vadd.f32 %v3768, %v3770
    %v3773 = vld [vmem:[%s49] sm:$0xff]
    %v3774 = vld [vmem:[%s49 + $0x8] sm:$0xff]
    %v3775 = vld [vmem:[%s49 + $0x10] sm:$0xff]
    %v3776 = vld [vmem:[%s49 + $0x18] sm:$0xff]
    %v3777 = vld [vmem:[%s51] sm:$0x1]
    %v3779 = vperm.slane %v3777, 0
    %v3782 = vsel %vm227, %v3772, 0
    %3784 = vmatpush.msra.mxu0 0.0
    %3785 = vmatpush.msra.mxu0 0.0
    %3786 = vmatpush.msra.mxu0 0.0
    %3787 = vmatpush.msra.mxu0 0.0
    %3788 = vmatpush.msra.mxu0 0.0
    %3789 = vmatpush.msra.mxu0 0.0
    %3790 = vmatpush.msra.mxu0 0.0
    %3791 = vmatpush.msra.mxu0 0.0
    %3792 = vmatpush.msra.mxu0 0.0
    %3793 = vmatpush.msra.mxu0 0.0
    %3794 = vmatpush.msra.mxu0 0.0
    %3795 = vmatpush.msra.mxu0 0.0
    %3796 = vmatpush.msra.mxu0 %v3776
    %3797 = vmatpush.msra.mxu0 %v3775
    %3798 = vmatpush.msra.mxu0 %v3774
    %3799 = vmatpush.msra.mxu0 %v3773
    %3800 = vmatmul.f32.gmra.mxu0 %v3782
    %v3801 = vpop.f32.mrf.mxu0
    %v3802 = vadd.f32 %v3779, %v3801
    %3803 = vdwg.mxu0
    %v3804 = vtanh.pop %v3802
    %v3805 = vld [vmem:[%s53] sm:$0xff]
    %v3806 = vld [vmem:[%s53 + $0x8] sm:$0xff]
    %v3807 = vld [vmem:[%s53 + $0x10] sm:$0xff]
    %v3808 = vld [vmem:[%s53 + $0x18] sm:$0xff]
    %v3809 = vld [vmem:[%s53 + $0x20] sm:$0xff]
    %v3810 = vld [vmem:[%s53 + $0x28] sm:$0xff]
    %v3811 = vld [vmem:[%s53 + $0x30] sm:$0xff]
    %v3812 = vld [vmem:[%s53 + $0x38] sm:$0xff]
    %v3813 = vld [vmem:[%s53 + $0x40] sm:$0xff]
    %v3814 = vld [vmem:[%s53 + $0x48] sm:$0xff]
    %v3815 = vld [vmem:[%s53 + $0x50] sm:$0xff]
    %v3816 = vld [vmem:[%s53 + $0x58] sm:$0xff]
    %v3817 = vld [vmem:[%s53 + $0x60] sm:$0xff]
    %v3818 = vld [vmem:[%s53 + $0x68] sm:$0xff]
    %v3819 = vld [vmem:[%s53 + $0x70] sm:$0xff]
    %v3820 = vld [vmem:[%s53 + $0x78] sm:$0xff]
    %v3821 = vld [vmem:[%s55] sm:$0xf]
    %v3823 = vperm.slane %v3821, 0
    %v3824 = vperm.slane %v3821, 1
    %v3825 = vperm.slane %v3821, 2
    %v3826 = vperm.slane %v3821, 3
    %v3832 = vsel %vm227, %v3804, 0
    %3834 = vmatpush.msra.mxu0 0.0
    %3835 = vmatpush.msra.mxu0 0.0
    %3836 = vmatpush.msra.mxu0 0.0
    %3837 = vmatpush.msra.mxu0 0.0
    %3838 = vmatpush.msra.mxu0 0.0
    %3839 = vmatpush.msra.mxu0 0.0
    %3840 = vmatpush.msra.mxu0 0.0
    %3841 = vmatpush.msra.mxu0 0.0
    %3842 = vmatpush.msra.mxu0 0.0
    %3843 = vmatpush.msra.mxu0 0.0
    %3844 = vmatpush.msra.mxu0 0.0
    %3845 = vmatpush.msra.mxu0 0.0
    %3846 = vmatpush.msra.mxu0 %v3817
    %3847 = vmatpush.msra.mxu0 %v3813
    %3848 = vmatpush.msra.mxu0 %v3809
    %3849 = vmatpush.msra.mxu0 %v3805
    %3850 = vmatmul.f32.gmra.mxu0 %v3832
    %v3851 = vpop.f32.mrf.mxu0
    %v3852 = vadd.f32 %v3823, %v3851
    %3853 = vdwg.mxu0
    %3854 = vmatpush.msra.mxu0 0.0
    %3855 = vmatpush.msra.mxu0 0.0
    %3856 = vmatpush.msra.mxu0 0.0
    %3857 = vmatpush.msra.mxu0 0.0
    %3858 = vmatpush.msra.mxu0 0.0
    %3859 = vmatpush.msra.mxu0 0.0
    %3860 = vmatpush.msra.mxu0 0.0
    %3861 = vmatpush.msra.mxu0 0.0
    %3862 = vmatpush.msra.mxu0 0.0
    %3863 = vmatpush.msra.mxu0 0.0
    %3864 = vmatpush.msra.mxu0 0.0
    %3865 = vmatpush.msra.mxu0 0.0
    %3866 = vmatpush.msra.mxu0 %v3818
    %3867 = vmatpush.msra.mxu0 %v3814
    %3868 = vmatpush.msra.mxu0 %v3810
    %3869 = vmatpush.msra.mxu0 %v3806
    %3870 = vmatmul.f32.gmra.mxu0 %v3832
    %v3871 = vpop.f32.mrf.mxu0
    %v3872 = vadd.f32 %v3824, %v3871
    %3873 = vdwg.mxu0
    %3874 = vmatpush.msra.mxu0 0.0
    %3875 = vmatpush.msra.mxu0 0.0
    %3876 = vmatpush.msra.mxu0 0.0
    %3877 = vmatpush.msra.mxu0 0.0
    %3878 = vmatpush.msra.mxu0 0.0
    %3879 = vmatpush.msra.mxu0 0.0
    %3880 = vmatpush.msra.mxu0 0.0
    %3881 = vmatpush.msra.mxu0 0.0
    %3882 = vmatpush.msra.mxu0 0.0
    %3883 = vmatpush.msra.mxu0 0.0
    %3884 = vmatpush.msra.mxu0 0.0
    %3885 = vmatpush.msra.mxu0 0.0
    %3886 = vmatpush.msra.mxu0 %v3819
    %3887 = vmatpush.msra.mxu0 %v3815
    %3888 = vmatpush.msra.mxu0 %v3811
    %3889 = vmatpush.msra.mxu0 %v3807
    %3890 = vmatmul.f32.gmra.mxu0 %v3832
    %v3891 = vpop.f32.mrf.mxu0
    %v3892 = vadd.f32 %v3825, %v3891
    %3893 = vdwg.mxu0
    %3894 = vmatpush.msra.mxu0 0.0
    %3895 = vmatpush.msra.mxu0 0.0
    %3896 = vmatpush.msra.mxu0 0.0
    %3897 = vmatpush.msra.mxu0 0.0
    %3898 = vmatpush.msra.mxu0 0.0
    %3899 = vmatpush.msra.mxu0 0.0
    %3900 = vmatpush.msra.mxu0 0.0
    %3901 = vmatpush.msra.mxu0 0.0
    %3902 = vmatpush.msra.mxu0 0.0
    %3903 = vmatpush.msra.mxu0 0.0
    %3904 = vmatpush.msra.mxu0 0.0
    %3905 = vmatpush.msra.mxu0 0.0
    %3906 = vmatpush.msra.mxu0 %v3820
    %3907 = vmatpush.msra.mxu0 %v3816
    %3908 = vmatpush.msra.mxu0 %v3812
    %3909 = vmatpush.msra.mxu0 %v3808
    %3910 = vmatmul.f32.gmra.mxu0 %v3832
    %v3911 = vpop.f32.mrf.mxu0
    %v3912 = vadd.f32 %v3826, %v3911
    %3913 = vdwg.mxu0
    %v3914 = vmax.f32 %v3852, 0.0
    %v3915 = vmax.f32 %v3872, 0.0
    %v3916 = vmax.f32 %v3892, 0.0
    %v3917 = vmax.f32 %v3912, 0.0
    %v3918 = vld [vmem:[%s57] sm:$0xff]
    %v3919 = vld [vmem:[%s57 + $0x8] sm:$0xff]
    %v3920 = vld [vmem:[%s57 + $0x10] sm:$0xff]
    %v3921 = vld [vmem:[%s57 + $0x18] sm:$0xff]
    %v3922 = vld [vmem:[%s57 + $0x20] sm:$0xff]
    %v3923 = vld [vmem:[%s57 + $0x28] sm:$0xff]
    %v3924 = vld [vmem:[%s57 + $0x30] sm:$0xff]
    %v3925 = vld [vmem:[%s57 + $0x38] sm:$0xff]
    %v3926 = vld [vmem:[%s57 + $0x40] sm:$0xff]
    %v3927 = vld [vmem:[%s57 + $0x48] sm:$0xff]
    %v3928 = vld [vmem:[%s57 + $0x50] sm:$0xff]
    %v3929 = vld [vmem:[%s57 + $0x58] sm:$0xff]
    %v3930 = vld [vmem:[%s57 + $0x60] sm:$0xff]
    %v3931 = vld [vmem:[%s57 + $0x68] sm:$0xff]
    %v3932 = vld [vmem:[%s57 + $0x70] sm:$0xff]
    %v3933 = vld [vmem:[%s57 + $0x78] sm:$0xff]
    %v3934 = vld [vmem:[%s57 + $0x80] sm:$0xff]
    %v3935 = vld [vmem:[%s57 + $0x88] sm:$0xff]
    %v3936 = vld [vmem:[%s57 + $0x90] sm:$0xff]
    %v3937 = vld [vmem:[%s57 + $0x98] sm:$0xff]
    %v3938 = vld [vmem:[%s57 + $0xa0] sm:$0xff]
    %v3939 = vld [vmem:[%s57 + $0xa8] sm:$0xff]
    %v3940 = vld [vmem:[%s57 + $0xb0] sm:$0xff]
    %v3941 = vld [vmem:[%s57 + $0xb8] sm:$0xff]
    %v3942 = vld [vmem:[%s57 + $0xc0] sm:$0xff]
    %v3943 = vld [vmem:[%s57 + $0xc8] sm:$0xff]
    %v3944 = vld [vmem:[%s57 + $0xd0] sm:$0xff]
    %v3945 = vld [vmem:[%s57 + $0xd8] sm:$0xff]
    %v3946 = vld [vmem:[%s57 + $0xe0] sm:$0xff]
    %v3947 = vld [vmem:[%s57 + $0xe8] sm:$0xff]
    %v3948 = vld [vmem:[%s57 + $0xf0] sm:$0xff]
    %v3949 = vld [vmem:[%s57 + $0xf8] sm:$0xff]
    %v3950 = vld [vmem:[%s57 + $0x100] sm:$0xff]
    %v3951 = vld [vmem:[%s57 + $0x108] sm:$0xff]
    %v3952 = vld [vmem:[%s57 + $0x110] sm:$0xff]
    %v3953 = vld [vmem:[%s57 + $0x118] sm:$0xff]
    %v3954 = vld [vmem:[%s57 + $0x120] sm:$0xff]
    %v3955 = vld [vmem:[%s57 + $0x128] sm:$0xff]
    %v3956 = vld [vmem:[%s57 + $0x130] sm:$0xff]
    %v3957 = vld [vmem:[%s57 + $0x138] sm:$0xff]
    %v3958 = vld [vmem:[%s57 + $0x140] sm:$0xff]
    %v3959 = vld [vmem:[%s57 + $0x148] sm:$0xff]
    %v3960 = vld [vmem:[%s57 + $0x150] sm:$0xff]
    %v3961 = vld [vmem:[%s57 + $0x158] sm:$0xff]
    %v3962 = vld [vmem:[%s57 + $0x160] sm:$0xff]
    %v3963 = vld [vmem:[%s57 + $0x168] sm:$0xff]
    %v3964 = vld [vmem:[%s57 + $0x170] sm:$0xff]
    %v3965 = vld [vmem:[%s57 + $0x178] sm:$0xff]
    %v3966 = vld [vmem:[%s57 + $0x180] sm:$0xff]
    %v3967 = vld [vmem:[%s57 + $0x188] sm:$0xff]
    %v3968 = vld [vmem:[%s57 + $0x190] sm:$0xff]
    %v3969 = vld [vmem:[%s57 + $0x198] sm:$0xff]
    %v3970 = vld [vmem:[%s57 + $0x1a0] sm:$0xff]
    %v3971 = vld [vmem:[%s57 + $0x1a8] sm:$0xff]
    %v3972 = vld [vmem:[%s57 + $0x1b0] sm:$0xff]
    %v3973 = vld [vmem:[%s57 + $0x1b8] sm:$0xff]
    %v3974 = vld [vmem:[%s57 + $0x1c0] sm:$0xff]
    %v3975 = vld [vmem:[%s57 + $0x1c8] sm:$0xff]
    %v3976 = vld [vmem:[%s57 + $0x1d0] sm:$0xff]
    %v3977 = vld [vmem:[%s57 + $0x1d8] sm:$0xff]
    %v3978 = vld [vmem:[%s57 + $0x1e0] sm:$0xff]
    %v3979 = vld [vmem:[%s57 + $0x1e8] sm:$0xff]
    %v3980 = vld [vmem:[%s57 + $0x1f0] sm:$0xff]
    %v3981 = vld [vmem:[%s57 + $0x1f8] sm:$0xff]
    %v3982 = vld [vmem:[%s59] sm:$0x1]
    %v3984 = vperm.slane %v3982, 0
    %3986 = vmatpush.msra.mxu0 %v3933
    %3987 = vmatpush.msra.mxu0 %v3932
    %3988 = vmatpush.msra.mxu0 %v3931
    %3989 = vmatpush.msra.mxu0 %v3930
    %3990 = vmatpush.msra.mxu0 %v3929
    %3991 = vmatpush.msra.mxu0 %v3928
    %3992 = vmatpush.msra.mxu0 %v3927
    %3993 = vmatpush.msra.mxu0 %v3926
    %3994 = vmatpush.msra.mxu0 %v3925
    %3995 = vmatpush.msra.mxu0 %v3924
    %3996 = vmatpush.msra.mxu0 %v3923
    %3997 = vmatpush.msra.mxu0 %v3922
    %3998 = vmatpush.msra.mxu0 %v3921
    %3999 = vmatpush.msra.mxu0 %v3920
    %4000 = vmatpush.msra.mxu0 %v3919
    %4001 = vmatpush.msra.mxu0 %v3918
    %4002 = vmatmul.f32.gmra.mxu0 %v3914
    %v4003 = vpop.f32.mrf.mxu0
    %v4004 = vadd.f32 %v3984, %v4003
    %4005 = vdwg.mxu0
    %4006 = vmatpush.msra.mxu0 %v3949
    %4007 = vmatpush.msra.mxu0 %v3948
    %4008 = vmatpush.msra.mxu0 %v3947
    %4009 = vmatpush.msra.mxu0 %v3946
    %4010 = vmatpush.msra.mxu0 %v3945
    %4011 = vmatpush.msra.mxu0 %v3944
    %4012 = vmatpush.msra.mxu0 %v3943
    %4013 = vmatpush.msra.mxu0 %v3942
    %4014 = vmatpush.msra.mxu0 %v3941
    %4015 = vmatpush.msra.mxu0 %v3940
    %4016 = vmatpush.msra.mxu0 %v3939
    %4017 = vmatpush.msra.mxu0 %v3938
    %4018 = vmatpush.msra.mxu0 %v3937
    %4019 = vmatpush.msra.mxu0 %v3936
    %4020 = vmatpush.msra.mxu0 %v3935
    %4021 = vmatpush.msra.mxu0 %v3934
    %4022 = vmatmul.f32.gmra.mxu0 %v3915
    %v4023 = vpop.f32.mrf.mxu0
    %v4024 = vadd.f32 %v4004, %v4023
    %4025 = vdwg.mxu0
    %4026 = vmatpush.msra.mxu0 %v3965
    %4027 = vmatpush.msra.mxu0 %v3964
    %4028 = vmatpush.msra.mxu0 %v3963
    %4029 = vmatpush.msra.mxu0 %v3962
    %4030 = vmatpush.msra.mxu0 %v3961
    %4031 = vmatpush.msra.mxu0 %v3960
    %4032 = vmatpush.msra.mxu0 %v3959
    %4033 = vmatpush.msra.mxu0 %v3958
    %4034 = vmatpush.msra.mxu0 %v3957
    %4035 = vmatpush.msra.mxu0 %v3956
    %4036 = vmatpush.msra.mxu0 %v3955
    %4037 = vmatpush.msra.mxu0 %v3954
    %4038 = vmatpush.msra.mxu0 %v3953
    %4039 = vmatpush.msra.mxu0 %v3952
    %4040 = vmatpush.msra.mxu0 %v3951
    %4041 = vmatpush.msra.mxu0 %v3950
    %4042 = vmatmul.f32.gmra.mxu0 %v3916
    %v4043 = vpop.f32.mrf.mxu0
    %v4044 = vadd.f32 %v4024, %v4043
    %4045 = vdwg.mxu0
    %4046 = vmatpush.msra.mxu0 %v3981
    %4047 = vmatpush.msra.mxu0 %v3980
    %4048 = vmatpush.msra.mxu0 %v3979
    %4049 = vmatpush.msra.mxu0 %v3978
    %4050 = vmatpush.msra.mxu0 %v3977
    %4051 = vmatpush.msra.mxu0 %v3976
    %4052 = vmatpush.msra.mxu0 %v3975
    %4053 = vmatpush.msra.mxu0 %v3974
    %4054 = vmatpush.msra.mxu0 %v3973
    %4055 = vmatpush.msra.mxu0 %v3972
    %4056 = vmatpush.msra.mxu0 %v3971
    %4057 = vmatpush.msra.mxu0 %v3970
    %4058 = vmatpush.msra.mxu0 %v3969
    %4059 = vmatpush.msra.mxu0 %v3968
    %4060 = vmatpush.msra.mxu0 %v3967
    %4061 = vmatpush.msra.mxu0 %v3966
    %4062 = vmatmul.f32.gmra.mxu0 %v3917
    %v4063 = vpop.f32.mrf.mxu0
    %v4064 = vadd.f32 %v4044, %v4063
    %4065 = vdwg.mxu0
    %vm4066 = vcmask 74752
    %4067 = vst.msk [vmem:[#allocation2] sm:$0x3] %vm4066, %v4064
    // Predicated region
    $region122: #{vit_mae_classification_forward.1} parent=1 // pred_check
      _
    $region123: #{vit_mae_classification_forward.1} parent=1 // pred_check_branch
      %4069 = sbr.rel (0) target = $region125
    $region124: #{vit_mae_classification_forward.1} parent=1 // pred_region
      %4071 = vsyncadd [#allocation3], 0
      %s4073 = sshll.u32 [#allocation2], 4
      %s4074 = int_to_ptr.vmem [resolvable:$true] %s4073
      %s4075 = sshll.u32 %s61, 4
      %s4076 = int_to_ptr.hbm [resolvable:$true] %s4075
      %4078 = dma.vmem_to_hbm [thread:$0]  %s4074, 32, %s4076, [#allocation3]
    $region125: #{vit_mae_classification_forward.1} parent=1 // pred_fallthru
      _
    // Predicated region
    $region126: #{vit_mae_classification_forward.1} parent=1 // pred_check
      _
    $region127: #{vit_mae_classification_forward.1} parent=1 // pred_check_branch
      %4080 = sbr.rel (0) target = $region129
    $region128: #{vit_mae_classification_forward.1} parent=1 // pred_region
      %4082 = dma.done [#allocation3], 32
    $region129: #{vit_mae_classification_forward.1} parent=1 // pred_fallthru
      _
    %4083 = vsyncpa [#allocation3], 1

</llo_original>
